<compile_context>
chip_gen: v7x
topology: tpu7x:2x2x1
jax: 0.10.0
libtpu: 0.0.40
codegen_flags: <defaults>
</compile_context>

<pallas_src>
import functools

import jax
import jax.numpy as jnp
from jax.experimental import pallas as pl
from jax.experimental.pallas import tpu as pltpu

_NEG_INF = -1e9


def _layer_norm(x, gamma, beta, eps=1e-6):
    mean = jnp.mean(x, axis=-1, keepdims=True)
    xc = x - mean
    var = jnp.mean(xc * xc, axis=-1, keepdims=True)
    return xc * jax.lax.rsqrt(var + eps) * gamma + beta


# ----------------------------- fused kernel -------------------------------- #
def _encoder_layer_kernel(*refs, n_head, d_k, q_tile, mask_mode, return_attn,
                          compute_dtype):
    """Self-attention + residual + LN + position-wise FFN + residual + LN
    for one (batch, query-tile) grid cell. K/V are cached in scratch per batch row."""
    n_weights = 12
    idx = 0
    x_ref = refs[idx]; idx += 1
    mask_ref = None
    if mask_mode in ("full", "key"):
        mask_ref = refs[idx]; idx += 1
    (wq_ref, wk_ref, wv_ref, wo_ref, g1_ref, be1_ref,
     w1_ref, fb1_ref, w2_ref, fb2_ref, g2_ref, be2_ref) = refs[idx:idx + n_weights]
    idx += n_weights
    out_ref = refs[idx]; idx += 1
    attn_ref = None
    if return_attn:
        attn_ref = refs[idx]; idx += 1
    k_scr, v_scr = refs[idx], refs[idx + 1]

    f32 = jnp.float32
    cdt = compute_dtype
    H, tq = n_head, q_tile
    L = x_ref.shape[1]
    i = pl.program_id(1)

    # ---- K/V projections for the whole row: computed once per batch element ----
    @pl.when(i == 0)
    def _fill_kv():
        xf = x_ref[0].astype(cdt)                               # (L, D)
        for h in range(H):
            k_scr[h] = jnp.dot(xf, wk_ref[h],
                               preferred_element_type=f32).astype(k_scr.dtype)
            v_scr[h] = jnp.dot(xf, wv_ref[h],
                               preferred_element_type=f32).astype(v_scr.dtype)

    # ---- query tile, sliced from the resident (1, L, D) block (no duplicate input) ----
    q_start = pl.multiple_of(i * tq, tq)
    xq = x_ref[0, pl.ds(q_start, tq), :]                        # (tq, D) f32
    xq_c = xq.astype(cdt)

    # ---- additive mask bias for this query tile (shared by all heads) ----
    if mask_mode == "causal":
        q_pos = jax.lax.broadcasted_iota(jnp.int32, (tq, L), 0) + i * tq
        k_pos = jax.lax.broadcasted_iota(jnp.int32, (tq, L), 1)
        bias = jnp.where(k_pos <= q_pos, 0.0, _NEG_INF).astype(f32)       # (tq, L)
    elif mask_mode in ("full", "key"):
        bias = jnp.where(mask_ref[0] != 0.0, 0.0, _NEG_INF).astype(f32)   # (tq,L)/(1,L)
    else:
        bias = None

    scale = 1.0 / (d_k ** 0.5)
    head_outs = []
    for h in range(H):
        # per-head weights indexed on their MAJOR dim -> plain 2-D dots, no relayouts
        q_h = jnp.dot(xq_c, wq_ref[h], preferred_element_type=f32) * scale   # (tq, dk)
        s = jax.lax.dot_general(q_h.astype(cdt), k_scr[h],
                                dimension_numbers=(((1,), (1,)), ((), ())),
                                preferred_element_type=f32)                  # (tq, L)
        if bias is not None:
            s = s + bias
        m = jnp.max(s, axis=-1, keepdims=True)
        e = jnp.exp(s - m)
        den = jnp.sum(e, axis=-1, keepdims=True)
        # deferred normalization: scale the (tq, dv) PV result, not the (tq, L) probs
        pv = jnp.dot(e.astype(cdt), v_scr[h], preferred_element_type=f32)    # (tq, dv)
        o_h = pv * pl.reciprocal(den, approx=True)
        head_outs.append(o_h.astype(cdt))
        if return_attn:
            # exact normalization for the returned probabilities (rows sum to 1)
            attn_ref[0, h] = (e * (1.0 / den)).astype(attn_ref.dtype)

    # ---- output projection: ONE depth-(H*d_v) MXU contraction ----
    o_cat = jnp.concatenate(head_outs, axis=-1)                              # (tq, H*dv)
    proj = jnp.dot(o_cat, wo_ref[...], preferred_element_type=f32)           # (tq, D)

    y = proj + xq.astype(f32)                                                # residual (f32)
    y = _layer_norm(y, g1_ref[...], be1_ref[...])

    # ---- position-wise FFN ----
    h1 = jnp.dot(y.astype(cdt), w1_ref[...], preferred_element_type=f32) + fb1_ref[...]
    h1 = jnp.maximum(h1, 0.0)                                                # ReLU
    z = jnp.dot(h1.astype(cdt), w2_ref[...], preferred_element_type=f32) + fb2_ref[...]
    z = z + y                                                                # residual
    out_ref[0] = _layer_norm(z, g2_ref[...], be2_ref[...]).astype(out_ref.dtype)


# ----------------------------- wrapper ------------------------------------- #
def _pick_q_tile(L, q_tile):
    cand = min(q_tile, L)
    cand -= cand % 8
    while cand >= 8:
        if L % cand == 0:
            return cand
        cand -= 8
    return L


def _vmem_limit_bytes():
    """Per-generation VMEM budget (v5e/v6e: 128 MiB, v7x: 64 MiB) with headroom."""
    try:
        cap = int(getattr(pltpu.get_tpu_info(), "vmem_capacity_bytes", 64 * 1024 * 1024))
    except Exception:  # best-effort hardware query
        cap = 64 * 1024 * 1024
    return max(32 * 1024 * 1024, min(int(cap * 0.85), 100 * 1024 * 1024))


def encoder_layer(x, params, mask=None, *, causal=False, return_attn=True,
                  q_tile=128, compute_dtype=jnp.float32, attn_dtype=jnp.bfloat16):
    """Fused EncoderLayer forward. Returns (enc_output, enc_slf_attn | None)."""
    B, L, D = x.shape
    H, dk, dv = params["n_head"], params["d_k"], params["d_v"]
    tq = _pick_q_tile(L, q_tile)
    n_q = L // tq
    cdt = compute_dtype
    f32 = jnp.float32

    # per-head projection weights, indexed on their MAJOR dim inside the kernel
    wq_h = params["wq"].reshape(D, H, dk).transpose(1, 0, 2).astype(cdt)
    wk_h = params["wk"].reshape(D, H, dk).transpose(1, 0, 2).astype(cdt)
    wv_h = params["wv"].reshape(D, H, dv).transpose(1, 0, 2).astype(cdt)
    weight_args = [
        wq_h, wk_h, wv_h,
        params["wo"].astype(cdt),                        # (H*dv, D) merged output proj
        params["ln1_g"].astype(f32), params["ln1_b"].astype(f32),
        params["w1"].astype(cdt), params["b1"].astype(f32),
        params["w2"].astype(cdt), params["b2"].astype(f32),
        params["ln2_g"].astype(f32), params["ln2_b"].astype(f32),
    ]

    # mask handling: no (B,L,L) f32 additive-bias materialization in HBM
    if causal:
        mask_mode, mask_arr, mask_spec = "causal", None, None
    elif mask is None:
        mask_mode, mask_arr, mask_spec = "none", None, None
    elif mask.ndim == 2:                                  # (B, L) key-padding mask
        mask_mode = "key"
        mask_arr = mask.reshape(B, 1, L).astype(f32)
        mask_spec = pl.BlockSpec((1, 1, L), lambda b, i: (b, 0, 0))
    elif mask.ndim == 3 and mask.shape[1] == 1:           # (B, 1, L) key-padding mask
        mask_mode = "key"
        mask_arr = mask.astype(f32)
        mask_spec = pl.BlockSpec((1, 1, L), lambda b, i: (b, 0, 0))
    else:                                                 # general (B, L, L) mask
        mask_mode = "full"
        mask_arr = mask.astype(f32)
        mask_spec = pl.BlockSpec((1, tq, L), lambda b, i: (b, i, 0))

    vmem_resident = pl.BlockSpec(memory_space=pltpu.MemorySpace.VMEM)
    in_specs = [pl.BlockSpec((1, L, D), lambda b, i: (b, 0, 0))]   # one x stream, f32
    args = [x.astype(f32)]
    if mask_arr is not None:
        in_specs.append(mask_spec)
        args.append(mask_arr)
    in_specs += [vmem_resident] * len(weight_args)
    args += weight_args

    out_specs = [pl.BlockSpec((1, tq, D), lambda b, i: (b, i, 0))]
    out_shape = [jax.ShapeDtypeStruct((B, L, D), f32)]
    if return_attn:
        out_specs.append(pl.BlockSpec((1, H, tq, L), lambda b, i: (b, 0, i, 0)))
        out_shape.append(jax.ShapeDtypeStruct((B, H, L, L), attn_dtype))

    kernel = functools.partial(
        _encoder_layer_kernel, n_head=H, d_k=dk, q_tile=tq,
        mask_mode=mask_mode, return_attn=return_attn, compute_dtype=cdt)

    res = pl.pallas_call(
        kernel,
        grid=(B, n_q),
        in_specs=in_specs,
        out_specs=out_specs,
        out_shape=out_shape,
        scratch_shapes=[pltpu.VMEM((H, L, dk), cdt),      # K cache, per batch row
                        pltpu.VMEM((H, L, dv), cdt)],     # V cache, per batch row
        compiler_params=pltpu.CompilerParams(
            dimension_semantics=("parallel", "arbitrary"),
            vmem_limit_bytes=_vmem_limit_bytes(),
        ),
    )(*args)

    if return_attn:
        out, attn = res
    else:
        (out,) = res
        attn = None
    return out, attn


# ----------------------------- reference ----------------------------------- #
def reference_encoder_layer(x, params, mask=None):
    B, L, D = x.shape
    H, dk, dv = params["n_head"], params["d_k"], params["d_v"]

    def ln(y, g, b):
        m = y.mean(-1, keepdims=True)
        var = ((y - m) ** 2).mean(-1, keepdims=True)
        return (y - m) / jnp.sqrt(var + 1e-6) * g + b

    q = (x @ params["wq"]).reshape(B, L, H, dk).transpose(0, 2, 1, 3)
    k = (x @ params["wk"]).reshape(B, L, H, dk).transpose(0, 2, 1, 3)
    v = (x @ params["wv"]).reshape(B, L, H, dv).transpose(0, 2, 1, 3)
    scores = jnp.einsum("bhld,bhmd->bhlm", q, k) / (dk ** 0.5)
    if mask is not None:
        scores = jnp.where(mask[:, None] == 0, -1e9, scores)
    attn = jax.nn.softmax(scores, axis=-1)
    o = jnp.einsum("bhlm,bhmd->bhld", attn, v).transpose(0, 2, 1, 3).reshape(B, L, H * dv)
    o = o @ params["wo"] + x
    o = ln(o, params["ln1_g"], params["ln1_b"])
    h = jax.nn.relu(o @ params["w1"] + params["b1"])
    y = h @ params["w2"] + params["b2"] + o
    y = ln(y, params["ln2_g"], params["ln2_b"])
    return y, attn


# ------------------------------- main --------------------------------------- #
if __name__ == "__main__":
    B, L = 2, 16
    d_model, d_inner, n_head, d_k, d_v = 32, 64, 4, 8, 8

    key = jax.random.PRNGKey(0)
    ks = jax.random.split(key, 10)

    def init(k, shape, scale=0.1):
        return (scale * jax.random.normal(k, shape)).astype(jnp.float32)

    params = dict(
        n_head=n_head, d_k=d_k, d_v=d_v,
        wq=init(ks[0], (d_model, n_head * d_k)),
        wk=init(ks[1], (d_model, n_head * d_k)),
        wv=init(ks[2], (d_model, n_head * d_v)),
        wo=init(ks[3], (n_head * d_v, d_model)),
        ln1_g=jnp.ones((1, d_model), jnp.float32),
        ln1_b=jnp.zeros((1, d_model), jnp.float32),
        w1=init(ks[4], (d_model, d_inner)),
        b1=init(ks[5], (1, d_inner)),
        w2=init(ks[6], (d_inner, d_model)),
        b2=init(ks[7], (1, d_model)),
        ln2_g=jnp.ones((1, d_model), jnp.float32),
        ln2_b=jnp.zeros((1, d_model), jnp.float32),
    )
    x = init(ks[8], (B, L, d_model), scale=1.0)

    # 1) no mask, f32 compute; probs returned (bf16 storage). grid (2,2) exercises K/V reuse.
    out, attn = encoder_layer(x, params, q_tile=8)
    out, attn = jax.block_until_ready((out, attn))
    ref_out, ref_attn = reference_encoder_layer(x, params, mask=None)
    assert out.shape == (B, L, d_model) and attn.shape == (B, n_head, L, L)
    assert jnp.allclose(out, ref_out, atol=3e-3), float(jnp.max(jnp.abs(out - ref_out)))
    assert jnp.allclose(attn.astype(jnp.float32), ref_attn, atol=5e-3), \
        float(jnp.max(jnp.abs(attn.astype(jnp.float32) - ref_attn)))

    # 2) causal mask generated IN-KERNEL (no (B,L,L) mask array in HBM)
    tril = jnp.broadcast_to(jnp.tril(jnp.ones((L, L), jnp.float32)), (B, L, L))
    ref_out_c, ref_attn_c = reference_encoder_layer(x, params, mask=tril)
    out_c, attn_c = encoder_layer(x, params, causal=True, q_tile=8)
    out_c, attn_c = jax.block_until_ready((out_c, attn_c))
    assert jnp.allclose(out_c, ref_out_c, atol=3e-3)
    assert jnp.allclose(attn_c.astype(jnp.float32), ref_attn_c, atol=5e-3)

    # 3) general (B, L, L) mask fallback path (same pattern passed explicitly)
    out_m, attn_m = encoder_layer(x, params, mask=tril, q_tile=8)
    out_m, attn_m = jax.block_until_ready((out_m, attn_m))
    assert jnp.allclose(out_m, ref_out_c, atol=3e-3)
    assert jnp.allclose(attn_m.astype(jnp.float32), ref_attn_c, atol=5e-3)

    # 4) compact (B, L) key-padding mask path (no O(L^2) mask array)
    key_mask = jnp.concatenate(
        [jnp.ones((B, L - 4), jnp.float32), jnp.zeros((B, 4), jnp.float32)], axis=1)
    ref_out_k, ref_attn_k = reference_encoder_layer(
        x, params, mask=jnp.broadcast_to(key_mask[:, None, :], (B, L, L)))
    out_k, attn_k = encoder_layer(x, params, mask=key_mask, q_tile=8)
    out_k, attn_k = jax.block_until_ready((out_k, attn_k))
    assert jnp.allclose(out_k, ref_out_k, atol=3e-3)
    assert jnp.allclose(attn_k.astype(jnp.float32), ref_attn_k, atol=5e-3)

    # 5) attention-probability output dropped entirely (no O(L^2) HBM writeback)
    out_only, none_attn = encoder_layer(x, params, causal=True, return_attn=False, q_tile=8)
    out_only = jax.block_until_ready(out_only)
    assert none_attn is None
    assert jnp.allclose(out_only, ref_out_c, atol=3e-3)

    # 6) bf16 MXU operands; residuals / softmax / LayerNorm statistics stay f32
    out_bf, attn_bf = encoder_layer(x, params, causal=True, q_tile=8,
                                    compute_dtype=jnp.bfloat16)
    out_bf = jax.block_until_ready(out_bf)
    assert bool(jnp.all(jnp.isfinite(out_bf)))
    assert jnp.allclose(out_bf, ref_out_c, atol=0.25)

    print("KERNEL_OK")
</pallas_src>

<mosaic_0001>
module attributes {stable_mosaic.version = 11 : i64} {
  func.func @_encoder_layer_kernel(%arg0: i32, %arg1: i32, %arg2: memref<1x16x32xf32, #tpu.memory_space<vmem>>, %arg3: memref<4x32x8xf32, #tpu.memory_space<vmem>>, %arg4: memref<4x32x8xf32, #tpu.memory_space<vmem>>, %arg5: memref<4x32x8xf32, #tpu.memory_space<vmem>>, %arg6: memref<32x32xf32, #tpu.memory_space<vmem>>, %arg7: memref<1x32xf32, #tpu.memory_space<vmem>>, %arg8: memref<1x32xf32, #tpu.memory_space<vmem>>, %arg9: memref<32x64xf32, #tpu.memory_space<vmem>>, %arg10: memref<1x64xf32, #tpu.memory_space<vmem>>, %arg11: memref<64x32xf32, #tpu.memory_space<vmem>>, %arg12: memref<1x32xf32, #tpu.memory_space<vmem>>, %arg13: memref<1x32xf32, #tpu.memory_space<vmem>>, %arg14: memref<1x32xf32, #tpu.memory_space<vmem>>, %arg15: memref<1x8x32xf32, #tpu.memory_space<vmem>>, %arg16: memref<1x4x8x16xbf16, #tpu.memory_space<vmem>>, %arg17: memref<4x16x8xf32, #tpu.memory_space<vmem>>, %arg18: memref<4x16x8xf32, #tpu.memory_space<vmem>>) attributes {dimension_semantics = [#tpu.dimension_semantics<parallel>, #tpu.dimension_semantics<arbitrary>], iteration_bounds = array<i64: 2, 2>, scalar_prefetch = 0 : i64, scratch_operands = 2 : i64, tpu.core_type = #tpu.core_type<tc>, window_params = [{transform_indices = @transform_0, window_bounds = array<i64: 1, 16, 32>}, {pipeline_mode = #tpu.pipeline_mode<synchronous>, transform_indices = @transform_1, window_bounds = array<i64: 4, 32, 8>}, {pipeline_mode = #tpu.pipeline_mode<synchronous>, transform_indices = @transform_2, window_bounds = array<i64: 4, 32, 8>}, {pipeline_mode = #tpu.pipeline_mode<synchronous>, transform_indices = @transform_3, window_bounds = array<i64: 4, 32, 8>}, {pipeline_mode = #tpu.pipeline_mode<synchronous>, transform_indices = @transform_4, window_bounds = array<i64: 32, 32>}, {pipeline_mode = #tpu.pipeline_mode<synchronous>, transform_indices = @transform_5, window_bounds = array<i64: 1, 32>}, {pipeline_mode = #tpu.pipeline_mode<synchronous>, transform_indices = @transform_6, window_bounds = array<i64: 1, 32>}, {pipeline_mode = #tpu.pipeline_mode<synchronous>, transform_indices = @transform_7, window_bounds = array<i64: 32, 64>}, {pipeline_mode = #tpu.pipeline_mode<synchronous>, transform_indices = @transform_8, window_bounds = array<i64: 1, 64>}, {pipeline_mode = #tpu.pipeline_mode<synchronous>, transform_indices = @transform_9, window_bounds = array<i64: 64, 32>}, {pipeline_mode = #tpu.pipeline_mode<synchronous>, transform_indices = @transform_10, window_bounds = array<i64: 1, 32>}, {pipeline_mode = #tpu.pipeline_mode<synchronous>, transform_indices = @transform_11, window_bounds = array<i64: 1, 32>}, {pipeline_mode = #tpu.pipeline_mode<synchronous>, transform_indices = @transform_12, window_bounds = array<i64: 1, 32>}, {transform_indices = @transform_13, window_bounds = array<i64: 1, 8, 32>}, {transform_indices = @transform_14, window_bounds = array<i64: 1, 4, 8, 16>}]} {
    %c0_i32 = arith.constant 0 : i32
    %0 = arith.cmpi eq, %arg1, %c0_i32 : i32
    %1 = arith.extui %0 : i1 to i32
    %c0_i32_0 = arith.constant 0 : i32
    %2 = arith.cmpi ne, %1, %c0_i32_0 : i32
    scf.if %2 {
      %c0_113 = arith.constant 0 : index
      %c0_114 = arith.constant 0 : index
      %c0_115 = arith.constant 0 : index
      %188 = vector.load %arg2[%c0_113, %c0_114, %c0_115] : memref<1x16x32xf32, #tpu.memory_space<vmem>>, vector<1x16x32xf32>
      %189 = vector.shape_cast %188 : vector<1x16x32xf32> to vector<16x32xf32>
      %c0_116 = arith.constant 0 : index
      %c0_117 = arith.constant 0 : index
      %c0_118 = arith.constant 0 : index
      %190 = vector.load %arg4[%c0_116, %c0_117, %c0_118] : memref<4x32x8xf32, #tpu.memory_space<vmem>>, vector<1x32x8xf32>
      %191 = vector.shape_cast %190 : vector<1x32x8xf32> to vector<32x8xf32>
      %cst_119 = arith.constant dense<0.000000e+00> : vector<16x8xf32>
      %192 = tpu.matmul %189, %191, %cst_119 {dimension_numbers = #tpu.dot_dimension_numbers<[1], [0], [0], [1], [0, 0, 1, 1], [], []>} : vector<16x32xf32>, vector<32x8xf32>, vector<16x8xf32> -> vector<16x8xf32>
      %c0_120 = arith.constant 0 : index
      %c0_121 = arith.constant 0 : index
      %c0_122 = arith.constant 0 : index
      %193 = vector.load %arg17[%c0_120, %c0_121, %c0_122] : memref<4x16x8xf32, #tpu.memory_space<vmem>>, vector<1x16x8xf32>
      %194 = vector.shape_cast %193 : vector<1x16x8xf32> to vector<16x8xf32>
      %195 = vector.shape_cast %192 : vector<16x8xf32> to vector<1x16x8xf32>
      tpu.vector_store %arg17[%c0_120, %c0_121, %c0_122], %195 {strides = array<i32>} : memref<4x16x8xf32, #tpu.memory_space<vmem>>, vector<1x16x8xf32>,
      %c0_123 = arith.constant 0 : index
      %c0_124 = arith.constant 0 : index
      %c0_125 = arith.constant 0 : index
      %196 = vector.load %arg5[%c0_123, %c0_124, %c0_125] : memref<4x32x8xf32, #tpu.memory_space<vmem>>, vector<1x32x8xf32>
      %197 = vector.shape_cast %196 : vector<1x32x8xf32> to vector<32x8xf32>
      %cst_126 = arith.constant dense<0.000000e+00> : vector<16x8xf32>
      %198 = tpu.matmul %189, %197, %cst_126 {dimension_numbers = #tpu.dot_dimension_numbers<[1], [0], [0], [1], [0, 0, 1, 1], [], []>} : vector<16x32xf32>, vector<32x8xf32>, vector<16x8xf32> -> vector<16x8xf32>
      %c0_127 = arith.constant 0 : index
      %c0_128 = arith.constant 0 : index
      %c0_129 = arith.constant 0 : index
      %199 = vector.load %arg18[%c0_127, %c0_128, %c0_129] : memref<4x16x8xf32, #tpu.memory_space<vmem>>, vector<1x16x8xf32>
      %200 = vector.shape_cast %199 : vector<1x16x8xf32> to vector<16x8xf32>
      %201 = vector.shape_cast %198 : vector<16x8xf32> to vector<1x16x8xf32>
      tpu.vector_store %arg18[%c0_127, %c0_128, %c0_129], %201 {strides = array<i32>} : memref<4x16x8xf32, #tpu.memory_space<vmem>>, vector<1x16x8xf32>,
      %c1_130 = arith.constant 1 : index
      %c0_131 = arith.constant 0 : index
      %c0_132 = arith.constant 0 : index
      %202 = vector.load %arg4[%c1_130, %c0_131, %c0_132] : memref<4x32x8xf32, #tpu.memory_space<vmem>>, vector<1x32x8xf32>
      %203 = vector.shape_cast %202 : vector<1x32x8xf32> to vector<32x8xf32>
      %cst_133 = arith.constant dense<0.000000e+00> : vector<16x8xf32>
      %204 = tpu.matmul %189, %203, %cst_133 {dimension_numbers = #tpu.dot_dimension_numbers<[1], [0], [0], [1], [0, 0, 1, 1], [], []>} : vector<16x32xf32>, vector<32x8xf32>, vector<16x8xf32> -> vector<16x8xf32>
      %c1_134 = arith.constant 1 : index
      %c0_135 = arith.constant 0 : index
      %c0_136 = arith.constant 0 : index
      %205 = vector.load %arg17[%c1_134, %c0_135, %c0_136] : memref<4x16x8xf32, #tpu.memory_space<vmem>>, vector<1x16x8xf32>
      %206 = vector.shape_cast %205 : vector<1x16x8xf32> to vector<16x8xf32>
      %207 = vector.shape_cast %204 : vector<16x8xf32> to vector<1x16x8xf32>
      tpu.vector_store %arg17[%c1_134, %c0_135, %c0_136], %207 {strides = array<i32>} : memref<4x16x8xf32, #tpu.memory_space<vmem>>, vector<1x16x8xf32>,
      %c1_137 = arith.constant 1 : index
      %c0_138 = arith.constant 0 : index
      %c0_139 = arith.constant 0 : index
      %208 = vector.load %arg5[%c1_137, %c0_138, %c0_139] : memref<4x32x8xf32, #tpu.memory_space<vmem>>, vector<1x32x8xf32>
      %209 = vector.shape_cast %208 : vector<1x32x8xf32> to vector<32x8xf32>
      %cst_140 = arith.constant dense<0.000000e+00> : vector<16x8xf32>
      %210 = tpu.matmul %189, %209, %cst_140 {dimension_numbers = #tpu.dot_dimension_numbers<[1], [0], [0], [1], [0, 0, 1, 1], [], []>} : vector<16x32xf32>, vector<32x8xf32>, vector<16x8xf32> -> vector<16x8xf32>
      %c1_141 = arith.constant 1 : index
      %c0_142 = arith.constant 0 : index
      %c0_143 = arith.constant 0 : index
      %211 = vector.load %arg18[%c1_141, %c0_142, %c0_143] : memref<4x16x8xf32, #tpu.memory_space<vmem>>, vector<1x16x8xf32>
      %212 = vector.shape_cast %211 : vector<1x16x8xf32> to vector<16x8xf32>
      %213 = vector.shape_cast %210 : vector<16x8xf32> to vector<1x16x8xf32>
      tpu.vector_store %arg18[%c1_141, %c0_142, %c0_143], %213 {strides = array<i32>} : memref<4x16x8xf32, #tpu.memory_space<vmem>>, vector<1x16x8xf32>,
      %c2_144 = arith.constant 2 : index
      %c0_145 = arith.constant 0 : index
      %c0_146 = arith.constant 0 : index
      %214 = vector.load %arg4[%c2_144, %c0_145, %c0_146] : memref<4x32x8xf32, #tpu.memory_space<vmem>>, vector<1x32x8xf32>
      %215 = vector.shape_cast %214 : vector<1x32x8xf32> to vector<32x8xf32>
      %cst_147 = arith.constant dense<0.000000e+00> : vector<16x8xf32>
      %216 = tpu.matmul %189, %215, %cst_147 {dimension_numbers = #tpu.dot_dimension_numbers<[1], [0], [0], [1], [0, 0, 1, 1], [], []>} : vector<16x32xf32>, vector<32x8xf32>, vector<16x8xf32> -> vector<16x8xf32>
      %c2_148 = arith.constant 2 : index
      %c0_149 = arith.constant 0 : index
      %c0_150 = arith.constant 0 : index
      %217 = vector.load %arg17[%c2_148, %c0_149, %c0_150] : memref<4x16x8xf32, #tpu.memory_space<vmem>>, vector<1x16x8xf32>
      %218 = vector.shape_cast %217 : vector<1x16x8xf32> to vector<16x8xf32>
      %219 = vector.shape_cast %216 : vector<16x8xf32> to vector<1x16x8xf32>
      tpu.vector_store %arg17[%c2_148, %c0_149, %c0_150], %219 {strides = array<i32>} : memref<4x16x8xf32, #tpu.memory_space<vmem>>, vector<1x16x8xf32>,
      %c2_151 = arith.constant 2 : index
      %c0_152 = arith.constant 0 : index
      %c0_153 = arith.constant 0 : index
      %220 = vector.load %arg5[%c2_151, %c0_152, %c0_153] : memref<4x32x8xf32, #tpu.memory_space<vmem>>, vector<1x32x8xf32>
      %221 = vector.shape_cast %220 : vector<1x32x8xf32> to vector<32x8xf32>
      %cst_154 = arith.constant dense<0.000000e+00> : vector<16x8xf32>
      %222 = tpu.matmul %189, %221, %cst_154 {dimension_numbers = #tpu.dot_dimension_numbers<[1], [0], [0], [1], [0, 0, 1, 1], [], []>} : vector<16x32xf32>, vector<32x8xf32>, vector<16x8xf32> -> vector<16x8xf32>
      %c2_155 = arith.constant 2 : index
      %c0_156 = arith.constant 0 : index
      %c0_157 = arith.constant 0 : index
      %223 = vector.load %arg18[%c2_155, %c0_156, %c0_157] : memref<4x16x8xf32, #tpu.memory_space<vmem>>, vector<1x16x8xf32>
      %224 = vector.shape_cast %223 : vector<1x16x8xf32> to vector<16x8xf32>
      %225 = vector.shape_cast %222 : vector<16x8xf32> to vector<1x16x8xf32>
      tpu.vector_store %arg18[%c2_155, %c0_156, %c0_157], %225 {strides = array<i32>} : memref<4x16x8xf32, #tpu.memory_space<vmem>>, vector<1x16x8xf32>,
      %c3_158 = arith.constant 3 : index
      %c0_159 = arith.constant 0 : index
      %c0_160 = arith.constant 0 : index
      %226 = vector.load %arg4[%c3_158, %c0_159, %c0_160] : memref<4x32x8xf32, #tpu.memory_space<vmem>>, vector<1x32x8xf32>
      %227 = vector.shape_cast %226 : vector<1x32x8xf32> to vector<32x8xf32>
      %cst_161 = arith.constant dense<0.000000e+00> : vector<16x8xf32>
      %228 = tpu.matmul %189, %227, %cst_161 {dimension_numbers = #tpu.dot_dimension_numbers<[1], [0], [0], [1], [0, 0, 1, 1], [], []>} : vector<16x32xf32>, vector<32x8xf32>, vector<16x8xf32> -> vector<16x8xf32>
      %c3_162 = arith.constant 3 : index
      %c0_163 = arith.constant 0 : index
      %c0_164 = arith.constant 0 : index
      %229 = vector.load %arg17[%c3_162, %c0_163, %c0_164] : memref<4x16x8xf32, #tpu.memory_space<vmem>>, vector<1x16x8xf32>
      %230 = vector.shape_cast %229 : vector<1x16x8xf32> to vector<16x8xf32>
      %231 = vector.shape_cast %228 : vector<16x8xf32> to vector<1x16x8xf32>
      tpu.vector_store %arg17[%c3_162, %c0_163, %c0_164], %231 {strides = array<i32>} : memref<4x16x8xf32, #tpu.memory_space<vmem>>, vector<1x16x8xf32>,
      %c3_165 = arith.constant 3 : index
      %c0_166 = arith.constant 0 : index
      %c0_167 = arith.constant 0 : index
      %232 = vector.load %arg5[%c3_165, %c0_166, %c0_167] : memref<4x32x8xf32, #tpu.memory_space<vmem>>, vector<1x32x8xf32>
      %233 = vector.shape_cast %232 : vector<1x32x8xf32> to vector<32x8xf32>
      %cst_168 = arith.constant dense<0.000000e+00> : vector<16x8xf32>
      %234 = tpu.matmul %189, %233, %cst_168 {dimension_numbers = #tpu.dot_dimension_numbers<[1], [0], [0], [1], [0, 0, 1, 1], [], []>} : vector<16x32xf32>, vector<32x8xf32>, vector<16x8xf32> -> vector<16x8xf32>
      %c3_169 = arith.constant 3 : index
      %c0_170 = arith.constant 0 : index
      %c0_171 = arith.constant 0 : index
      %235 = vector.load %arg18[%c3_169, %c0_170, %c0_171] : memref<4x16x8xf32, #tpu.memory_space<vmem>>, vector<1x16x8xf32>
      %236 = vector.shape_cast %235 : vector<1x16x8xf32> to vector<16x8xf32>
      %237 = vector.shape_cast %234 : vector<16x8xf32> to vector<1x16x8xf32>
      tpu.vector_store %arg18[%c3_169, %c0_170, %c0_171], %237 {strides = array<i32>} : memref<4x16x8xf32, #tpu.memory_space<vmem>>, vector<1x16x8xf32>,
    } else {
    }
    %c8_i32 = arith.constant 8 : i32
    %3 = arith.muli %arg1, %c8_i32 : i32
    %4 = tpu.assume_multiple %3, 8 : i32
    %c0 = arith.constant 0 : index
    %5 = arith.index_cast %4 : i32 to index
    %c0_1 = arith.constant 0 : index
    %6 = vector.load %arg2[%c0, %5, %c0_1] : memref<1x16x32xf32, #tpu.memory_space<vmem>>, vector<1x8x32xf32>
    %7 = vector.shape_cast %6 : vector<1x8x32xf32> to vector<8x32xf32>
    %c0_2 = arith.constant 0 : index
    %c0_3 = arith.constant 0 : index
    %c0_4 = arith.constant 0 : index
    %8 = vector.load %arg3[%c0_2, %c0_3, %c0_4] : memref<4x32x8xf32, #tpu.memory_space<vmem>>, vector<1x32x8xf32>
    %9 = vector.shape_cast %8 : vector<1x32x8xf32> to vector<32x8xf32>
    %cst = arith.constant dense<0.000000e+00> : vector<8x8xf32>
    %10 = tpu.matmul %7, %9, %cst {dimension_numbers = #tpu.dot_dimension_numbers<[1], [0], [0], [1], [0, 0, 1, 1], [], []>} : vector<8x32xf32>, vector<32x8xf32>, vector<8x8xf32> -> vector<8x8xf32>
    %cst_5 = arith.constant 0.353553385 : f32
    %11 = vector.broadcast %cst_5 : f32 to vector<8x8xf32>
    %12 = arith.mulf %10, %11 : vector<8x8xf32>
    %c0_6 = arith.constant 0 : index
    %c0_7 = arith.constant 0 : index
    %c0_8 = arith.constant 0 : index
    %13 = vector.load %arg17[%c0_6, %c0_7, %c0_8] : memref<4x16x8xf32, #tpu.memory_space<vmem>>, vector<1x16x8xf32>
    %14 = vector.shape_cast %13 : vector<1x16x8xf32> to vector<16x8xf32>
    %cst_9 = arith.constant dense<0.000000e+00> : vector<8x16xf32>
    %15 = tpu.matmul %12, %14, %cst_9 {dimension_numbers = #tpu.dot_dimension_numbers<[1], [1], [0], [0], [0, 0, 1, 0], [], []>} : vector<8x8xf32>, vector<16x8xf32>, vector<8x16xf32> -> vector<8x16xf32>
    %cst_10 = arith.constant dense<0xFF800000> : vector<8xf32>
    %16 = vector.multi_reduction <maximumf>, %15, %cst_10 [1] : vector<8x16xf32> to vector<8xf32>
    %17 = vector.shape_cast %16 : vector<8xf32> to vector<8x1xf32>
    %18 = vector.broadcast %17 : vector<8x1xf32> to vector<8x16xf32>
    %19 = arith.subf %15, %18 : vector<8x16xf32>
    %20 = math.exp %19 : vector<8x16xf32>
    %cst_11 = arith.constant dense<0.000000e+00> : vector<8xf32>
    %21 = vector.multi_reduction <add>, %20, %cst_11 [1] : vector<8x16xf32> to vector<8xf32>
    %22 = vector.shape_cast %21 : vector<8xf32> to vector<8x1xf32>
    %c0_12 = arith.constant 0 : index
    %c0_13 = arith.constant 0 : index
    %c0_14 = arith.constant 0 : index
    %23 = vector.load %arg18[%c0_12, %c0_13, %c0_14] : memref<4x16x8xf32, #tpu.memory_space<vmem>>, vector<1x16x8xf32>
    %24 = vector.shape_cast %23 : vector<1x16x8xf32> to vector<16x8xf32>
    %cst_15 = arith.constant dense<0.000000e+00> : vector<8x8xf32>
    %25 = tpu.matmul %20, %24, %cst_15 {dimension_numbers = #tpu.dot_dimension_numbers<[1], [0], [0], [1], [0, 0, 1, 1], [], []>} : vector<8x16xf32>, vector<16x8xf32>, vector<8x8xf32> -> vector<8x8xf32>
    %26 = tpu.reciprocal %22 {approx = true} : vector<8x1xf32> -> vector<8x1xf32>
    %27 = vector.broadcast %26 : vector<8x1xf32> to vector<8x8xf32>
    %28 = arith.mulf %25, %27 : vector<8x8xf32>
    %cst_16 = arith.constant 1.000000e+00 : f32
    %29 = vector.broadcast %cst_16 : f32 to vector<8x1xf32>
    %30 = arith.divf %29, %22 : vector<8x1xf32>
    %31 = vector.broadcast %30 : vector<8x1xf32> to vector<8x16xf32>
    %32 = arith.mulf %20, %31 : vector<8x16xf32>
    %33 = arith.truncf %32 : vector<8x16xf32> to vector<8x16xbf16>
    %c0_17 = arith.constant 0 : index
    %c0_18 = arith.constant 0 : index
    %c0_19 = arith.constant 0 : index
    %c0_20 = arith.constant 0 : index
    %34 = vector.load %arg16[%c0_17, %c0_18, %c0_19, %c0_20] : memref<1x4x8x16xbf16, #tpu.memory_space<vmem>>, vector<1x1x8x16xbf16>
    %35 = vector.shape_cast %34 : vector<1x1x8x16xbf16> to vector<8x16xbf16>
    %36 = vector.shape_cast %33 : vector<8x16xbf16> to vector<1x1x8x16xbf16>
    tpu.vector_store %arg16[%c0_17, %c0_18, %c0_19, %c0_20], %36 {strides = array<i32>} : memref<1x4x8x16xbf16, #tpu.memory_space<vmem>>, vector<1x1x8x16xbf16>,
    %c1 = arith.constant 1 : index
    %c0_21 = arith.constant 0 : index
    %c0_22 = arith.constant 0 : index
    %37 = vector.load %arg3[%c1, %c0_21, %c0_22] : memref<4x32x8xf32, #tpu.memory_space<vmem>>, vector<1x32x8xf32>
    %38 = vector.shape_cast %37 : vector<1x32x8xf32> to vector<32x8xf32>
    %cst_23 = arith.constant dense<0.000000e+00> : vector<8x8xf32>
    %39 = tpu.matmul %7, %38, %cst_23 {dimension_numbers = #tpu.dot_dimension_numbers<[1], [0], [0], [1], [0, 0, 1, 1], [], []>} : vector<8x32xf32>, vector<32x8xf32>, vector<8x8xf32> -> vector<8x8xf32>
    %cst_24 = arith.constant 0.353553385 : f32
    %40 = vector.broadcast %cst_24 : f32 to vector<8x8xf32>
    %41 = arith.mulf %39, %40 : vector<8x8xf32>
    %c1_25 = arith.constant 1 : index
    %c0_26 = arith.constant 0 : index
    %c0_27 = arith.constant 0 : index
    %42 = vector.load %arg17[%c1_25, %c0_26, %c0_27] : memref<4x16x8xf32, #tpu.memory_space<vmem>>, vector<1x16x8xf32>
    %43 = vector.shape_cast %42 : vector<1x16x8xf32> to vector<16x8xf32>
    %cst_28 = arith.constant dense<0.000000e+00> : vector<8x16xf32>
    %44 = tpu.matmul %41, %43, %cst_28 {dimension_numbers = #tpu.dot_dimension_numbers<[1], [1], [0], [0], [0, 0, 1, 0], [], []>} : vector<8x8xf32>, vector<16x8xf32>, vector<8x16xf32> -> vector<8x16xf32>
    %cst_29 = arith.constant dense<0xFF800000> : vector<8xf32>
    %45 = vector.multi_reduction <maximumf>, %44, %cst_29 [1] : vector<8x16xf32> to vector<8xf32>
    %46 = vector.shape_cast %45 : vector<8xf32> to vector<8x1xf32>
    %47 = vector.broadcast %46 : vector<8x1xf32> to vector<8x16xf32>
    %48 = arith.subf %44, %47 : vector<8x16xf32>
    %49 = math.exp %48 : vector<8x16xf32>
    %cst_30 = arith.constant dense<0.000000e+00> : vector<8xf32>
    %50 = vector.multi_reduction <add>, %49, %cst_30 [1] : vector<8x16xf32> to vector<8xf32>
    %51 = vector.shape_cast %50 : vector<8xf32> to vector<8x1xf32>
    %c1_31 = arith.constant 1 : index
    %c0_32 = arith.constant 0 : index
    %c0_33 = arith.constant 0 : index
    %52 = vector.load %arg18[%c1_31, %c0_32, %c0_33] : memref<4x16x8xf32, #tpu.memory_space<vmem>>, vector<1x16x8xf32>
    %53 = vector.shape_cast %52 : vector<1x16x8xf32> to vector<16x8xf32>
    %cst_34 = arith.constant dense<0.000000e+00> : vector<8x8xf32>
    %54 = tpu.matmul %49, %53, %cst_34 {dimension_numbers = #tpu.dot_dimension_numbers<[1], [0], [0], [1], [0, 0, 1, 1], [], []>} : vector<8x16xf32>, vector<16x8xf32>, vector<8x8xf32> -> vector<8x8xf32>
    %55 = tpu.reciprocal %51 {approx = true} : vector<8x1xf32> -> vector<8x1xf32>
    %56 = vector.broadcast %55 : vector<8x1xf32> to vector<8x8xf32>
    %57 = arith.mulf %54, %56 : vector<8x8xf32>
    %cst_35 = arith.constant 1.000000e+00 : f32
    %58 = vector.broadcast %cst_35 : f32 to vector<8x1xf32>
    %59 = arith.divf %58, %51 : vector<8x1xf32>
    %60 = vector.broadcast %59 : vector<8x1xf32> to vector<8x16xf32>
    %61 = arith.mulf %49, %60 : vector<8x16xf32>
    %62 = arith.truncf %61 : vector<8x16xf32> to vector<8x16xbf16>
    %c0_36 = arith.constant 0 : index
    %c1_37 = arith.constant 1 : index
    %c0_38 = arith.constant 0 : index
    %c0_39 = arith.constant 0 : index
    %63 = vector.load %arg16[%c0_36, %c1_37, %c0_38, %c0_39] : memref<1x4x8x16xbf16, #tpu.memory_space<vmem>>, vector<1x1x8x16xbf16>
    %64 = vector.shape_cast %63 : vector<1x1x8x16xbf16> to vector<8x16xbf16>
    %65 = vector.shape_cast %62 : vector<8x16xbf16> to vector<1x1x8x16xbf16>
    tpu.vector_store %arg16[%c0_36, %c1_37, %c0_38, %c0_39], %65 {strides = array<i32>} : memref<1x4x8x16xbf16, #tpu.memory_space<vmem>>, vector<1x1x8x16xbf16>,
    %c2 = arith.constant 2 : index
    %c0_40 = arith.constant 0 : index
    %c0_41 = arith.constant 0 : index
    %66 = vector.load %arg3[%c2, %c0_40, %c0_41] : memref<4x32x8xf32, #tpu.memory_space<vmem>>, vector<1x32x8xf32>
    %67 = vector.shape_cast %66 : vector<1x32x8xf32> to vector<32x8xf32>
    %cst_42 = arith.constant dense<0.000000e+00> : vector<8x8xf32>
    %68 = tpu.matmul %7, %67, %cst_42 {dimension_numbers = #tpu.dot_dimension_numbers<[1], [0], [0], [1], [0, 0, 1, 1], [], []>} : vector<8x32xf32>, vector<32x8xf32>, vector<8x8xf32> -> vector<8x8xf32>
    %cst_43 = arith.constant 0.353553385 : f32
    %69 = vector.broadcast %cst_43 : f32 to vector<8x8xf32>
    %70 = arith.mulf %68, %69 : vector<8x8xf32>
    %c2_44 = arith.constant 2 : index
    %c0_45 = arith.constant 0 : index
    %c0_46 = arith.constant 0 : index
    %71 = vector.load %arg17[%c2_44, %c0_45, %c0_46] : memref<4x16x8xf32, #tpu.memory_space<vmem>>, vector<1x16x8xf32>
    %72 = vector.shape_cast %71 : vector<1x16x8xf32> to vector<16x8xf32>
    %cst_47 = arith.constant dense<0.000000e+00> : vector<8x16xf32>
    %73 = tpu.matmul %70, %72, %cst_47 {dimension_numbers = #tpu.dot_dimension_numbers<[1], [1], [0], [0], [0, 0, 1, 0], [], []>} : vector<8x8xf32>, vector<16x8xf32>, vector<8x16xf32> -> vector<8x16xf32>
    %cst_48 = arith.constant dense<0xFF800000> : vector<8xf32>
    %74 = vector.multi_reduction <maximumf>, %73, %cst_48 [1] : vector<8x16xf32> to vector<8xf32>
    %75 = vector.shape_cast %74 : vector<8xf32> to vector<8x1xf32>
    %76 = vector.broadcast %75 : vector<8x1xf32> to vector<8x16xf32>
    %77 = arith.subf %73, %76 : vector<8x16xf32>
    %78 = math.exp %77 : vector<8x16xf32>
    %cst_49 = arith.constant dense<0.000000e+00> : vector<8xf32>
    %79 = vector.multi_reduction <add>, %78, %cst_49 [1] : vector<8x16xf32> to vector<8xf32>
    %80 = vector.shape_cast %79 : vector<8xf32> to vector<8x1xf32>
    %c2_50 = arith.constant 2 : index
    %c0_51 = arith.constant 0 : index
    %c0_52 = arith.constant 0 : index
    %81 = vector.load %arg18[%c2_50, %c0_51, %c0_52] : memref<4x16x8xf32, #tpu.memory_space<vmem>>, vector<1x16x8xf32>
    %82 = vector.shape_cast %81 : vector<1x16x8xf32> to vector<16x8xf32>
    %cst_53 = arith.constant dense<0.000000e+00> : vector<8x8xf32>
    %83 = tpu.matmul %78, %82, %cst_53 {dimension_numbers = #tpu.dot_dimension_numbers<[1], [0], [0], [1], [0, 0, 1, 1], [], []>} : vector<8x16xf32>, vector<16x8xf32>, vector<8x8xf32> -> vector<8x8xf32>
    %84 = tpu.reciprocal %80 {approx = true} : vector<8x1xf32> -> vector<8x1xf32>
    %85 = vector.broadcast %84 : vector<8x1xf32> to vector<8x8xf32>
    %86 = arith.mulf %83, %85 : vector<8x8xf32>
    %cst_54 = arith.constant 1.000000e+00 : f32
    %87 = vector.broadcast %cst_54 : f32 to vector<8x1xf32>
    %88 = arith.divf %87, %80 : vector<8x1xf32>
    %89 = vector.broadcast %88 : vector<8x1xf32> to vector<8x16xf32>
    %90 = arith.mulf %78, %89 : vector<8x16xf32>
    %91 = arith.truncf %90 : vector<8x16xf32> to vector<8x16xbf16>
    %c0_55 = arith.constant 0 : index
    %c2_56 = arith.constant 2 : index
    %c0_57 = arith.constant 0 : index
    %c0_58 = arith.constant 0 : index
    %92 = vector.load %arg16[%c0_55, %c2_56, %c0_57, %c0_58] : memref<1x4x8x16xbf16, #tpu.memory_space<vmem>>, vector<1x1x8x16xbf16>
    %93 = vector.shape_cast %92 : vector<1x1x8x16xbf16> to vector<8x16xbf16>
    %94 = vector.shape_cast %91 : vector<8x16xbf16> to vector<1x1x8x16xbf16>
    tpu.vector_store %arg16[%c0_55, %c2_56, %c0_57, %c0_58], %94 {strides = array<i32>} : memref<1x4x8x16xbf16, #tpu.memory_space<vmem>>, vector<1x1x8x16xbf16>,
    %c3 = arith.constant 3 : index
    %c0_59 = arith.constant 0 : index
    %c0_60 = arith.constant 0 : index
    %95 = vector.load %arg3[%c3, %c0_59, %c0_60] : memref<4x32x8xf32, #tpu.memory_space<vmem>>, vector<1x32x8xf32>
    %96 = vector.shape_cast %95 : vector<1x32x8xf32> to vector<32x8xf32>
    %cst_61 = arith.constant dense<0.000000e+00> : vector<8x8xf32>
    %97 = tpu.matmul %7, %96, %cst_61 {dimension_numbers = #tpu.dot_dimension_numbers<[1], [0], [0], [1], [0, 0, 1, 1], [], []>} : vector<8x32xf32>, vector<32x8xf32>, vector<8x8xf32> -> vector<8x8xf32>
    %cst_62 = arith.constant 0.353553385 : f32
    %98 = vector.broadcast %cst_62 : f32 to vector<8x8xf32>
    %99 = arith.mulf %97, %98 : vector<8x8xf32>
    %c3_63 = arith.constant 3 : index
    %c0_64 = arith.constant 0 : index
    %c0_65 = arith.constant 0 : index
    %100 = vector.load %arg17[%c3_63, %c0_64, %c0_65] : memref<4x16x8xf32, #tpu.memory_space<vmem>>, vector<1x16x8xf32>
    %101 = vector.shape_cast %100 : vector<1x16x8xf32> to vector<16x8xf32>
    %cst_66 = arith.constant dense<0.000000e+00> : vector<8x16xf32>
    %102 = tpu.matmul %99, %101, %cst_66 {dimension_numbers = #tpu.dot_dimension_numbers<[1], [1], [0], [0], [0, 0, 1, 0], [], []>} : vector<8x8xf32>, vector<16x8xf32>, vector<8x16xf32> -> vector<8x16xf32>
    %cst_67 = arith.constant dense<0xFF800000> : vector<8xf32>
    %103 = vector.multi_reduction <maximumf>, %102, %cst_67 [1] : vector<8x16xf32> to vector<8xf32>
    %104 = vector.shape_cast %103 : vector<8xf32> to vector<8x1xf32>
    %105 = vector.broadcast %104 : vector<8x1xf32> to vector<8x16xf32>
    %106 = arith.subf %102, %105 : vector<8x16xf32>
    %107 = math.exp %106 : vector<8x16xf32>
    %cst_68 = arith.constant dense<0.000000e+00> : vector<8xf32>
    %108 = vector.multi_reduction <add>, %107, %cst_68 [1] : vector<8x16xf32> to vector<8xf32>
    %109 = vector.shape_cast %108 : vector<8xf32> to vector<8x1xf32>
    %c3_69 = arith.constant 3 : index
    %c0_70 = arith.constant 0 : index
    %c0_71 = arith.constant 0 : index
    %110 = vector.load %arg18[%c3_69, %c0_70, %c0_71] : memref<4x16x8xf32, #tpu.memory_space<vmem>>, vector<1x16x8xf32>
    %111 = vector.shape_cast %110 : vector<1x16x8xf32> to vector<16x8xf32>
    %cst_72 = arith.constant dense<0.000000e+00> : vector<8x8xf32>
    %112 = tpu.matmul %107, %111, %cst_72 {dimension_numbers = #tpu.dot_dimension_numbers<[1], [0], [0], [1], [0, 0, 1, 1], [], []>} : vector<8x16xf32>, vector<16x8xf32>, vector<8x8xf32> -> vector<8x8xf32>
    %113 = tpu.reciprocal %109 {approx = true} : vector<8x1xf32> -> vector<8x1xf32>
    %114 = vector.broadcast %113 : vector<8x1xf32> to vector<8x8xf32>
    %115 = arith.mulf %112, %114 : vector<8x8xf32>
    %cst_73 = arith.constant 1.000000e+00 : f32
    %116 = vector.broadcast %cst_73 : f32 to vector<8x1xf32>
    %117 = arith.divf %116, %109 : vector<8x1xf32>
    %118 = vector.broadcast %117 : vector<8x1xf32> to vector<8x16xf32>
    %119 = arith.mulf %107, %118 : vector<8x16xf32>
    %120 = arith.truncf %119 : vector<8x16xf32> to vector<8x16xbf16>
    %c0_74 = arith.constant 0 : index
    %c3_75 = arith.constant 3 : index
    %c0_76 = arith.constant 0 : index
    %c0_77 = arith.constant 0 : index
    %121 = vector.load %arg16[%c0_74, %c3_75, %c0_76, %c0_77] : memref<1x4x8x16xbf16, #tpu.memory_space<vmem>>, vector<1x1x8x16xbf16>
    %122 = vector.shape_cast %121 : vector<1x1x8x16xbf16> to vector<8x16xbf16>
    %123 = vector.shape_cast %120 : vector<8x16xbf16> to vector<1x1x8x16xbf16>
    tpu.vector_store %arg16[%c0_74, %c3_75, %c0_76, %c0_77], %123 {strides = array<i32>} : memref<1x4x8x16xbf16, #tpu.memory_space<vmem>>, vector<1x1x8x16xbf16>,
    %124 = tpu.concatenate %28, %57, %86, %115 in 1 : vector<8x8xf32>, vector<8x8xf32>, vector<8x8xf32>, vector<8x8xf32> -> vector<8x32xf32>
    %c0_78 = arith.constant 0 : index
    %c0_79 = arith.constant 0 : index
    %125 = vector.load %arg6[%c0_78, %c0_79] : memref<32x32xf32, #tpu.memory_space<vmem>>, vector<32x32xf32>
    %cst_80 = arith.constant dense<0.000000e+00> : vector<8x32xf32>
    %126 = tpu.matmul %124, %125, %cst_80 {dimension_numbers = #tpu.dot_dimension_numbers<[1], [0], [0], [1], [0, 0, 1, 1], [], []>} : vector<8x32xf32>, vector<32x32xf32>, vector<8x32xf32> -> vector<8x32xf32>
    %127 = arith.addf %126, %7 : vector<8x32xf32>
    %c0_81 = arith.constant 0 : index
    %c0_82 = arith.constant 0 : index
    %128 = vector.load %arg7[%c0_81, %c0_82] : memref<1x32xf32, #tpu.memory_space<vmem>>, vector<1x32xf32>
    %c0_83 = arith.constant 0 : index
    %c0_84 = arith.constant 0 : index
    %129 = vector.load %arg8[%c0_83, %c0_84] : memref<1x32xf32, #tpu.memory_space<vmem>>, vector<1x32xf32>
    %cst_85 = arith.constant dense<0.000000e+00> : vector<8xf32>
    %130 = vector.multi_reduction <add>, %127, %cst_85 [1] : vector<8x32xf32> to vector<8xf32>
    %131 = vector.shape_cast %130 : vector<8xf32> to vector<8x1xf32>
    %cst_86 = arith.constant 3.200000e+01 : f32
    %132 = vector.broadcast %cst_86 : f32 to vector<8x1xf32>
    %133 = arith.divf %131, %132 : vector<8x1xf32>
    %134 = vector.broadcast %133 : vector<8x1xf32> to vector<8x32xf32>
    %135 = arith.subf %127, %134 : vector<8x32xf32>
    %136 = arith.mulf %135, %135 : vector<8x32xf32>
    %cst_87 = arith.constant dense<0.000000e+00> : vector<8xf32>
    %137 = vector.multi_reduction <add>, %136, %cst_87 [1] : vector<8x32xf32> to vector<8xf32>
    %138 = vector.shape_cast %137 : vector<8xf32> to vector<8x1xf32>
    %cst_88 = arith.constant 3.200000e+01 : f32
    %139 = vector.broadcast %cst_88 : f32 to vector<8x1xf32>
    %140 = arith.divf %138, %139 : vector<8x1xf32>
    %cst_89 = arith.constant 9.99999997E-7 : f32
    %141 = vector.broadcast %cst_89 : f32 to vector<8x1xf32>
    %142 = arith.addf %140, %141 : vector<8x1xf32>
    %143 = math.rsqrt %142 : vector<8x1xf32>
    %144 = vector.broadcast %143 : vector<8x1xf32> to vector<8x32xf32>
    %145 = arith.mulf %135, %144 : vector<8x32xf32>
    %146 = vector.broadcast %128 : vector<1x32xf32> to vector<8x32xf32>
    %147 = arith.mulf %145, %146 : vector<8x32xf32>
    %148 = vector.broadcast %129 : vector<1x32xf32> to vector<8x32xf32>
    %149 = arith.addf %147, %148 : vector<8x32xf32>
    %c0_90 = arith.constant 0 : index
    %c0_91 = arith.constant 0 : index
    %150 = vector.load %arg9[%c0_90, %c0_91] : memref<32x64xf32, #tpu.memory_space<vmem>>, vector<32x64xf32>
    %cst_92 = arith.constant dense<0.000000e+00> : vector<8x64xf32>
    %151 = tpu.matmul %149, %150, %cst_92 {dimension_numbers = #tpu.dot_dimension_numbers<[1], [0], [0], [1], [0, 0, 1, 1], [], []>} : vector<8x32xf32>, vector<32x64xf32>, vector<8x64xf32> -> vector<8x64xf32>
    %c0_93 = arith.constant 0 : index
    %c0_94 = arith.constant 0 : index
    %152 = vector.load %arg10[%c0_93, %c0_94] : memref<1x64xf32, #tpu.memory_space<vmem>>, vector<1x64xf32>
    %153 = vector.broadcast %152 : vector<1x64xf32> to vector<8x64xf32>
    %154 = arith.addf %151, %153 : vector<8x64xf32>
    %cst_95 = arith.constant 0.000000e+00 : f32
    %155 = vector.broadcast %cst_95 : f32 to vector<8x64xf32>
    %156 = arith.maximumf %154, %155 : vector<8x64xf32>
    %c0_96 = arith.constant 0 : index
    %c0_97 = arith.constant 0 : index
    %157 = vector.load %arg11[%c0_96, %c0_97] : memref<64x32xf32, #tpu.memory_space<vmem>>, vector<64x32xf32>
    %cst_98 = arith.constant dense<0.000000e+00> : vector<8x32xf32>
    %158 = tpu.matmul %156, %157, %cst_98 {dimension_numbers = #tpu.dot_dimension_numbers<[1], [0], [0], [1], [0, 0, 1, 1], [], []>} : vector<8x64xf32>, vector<64x32xf32>, vector<8x32xf32> -> vector<8x32xf32>
    %c0_99 = arith.constant 0 : index
    %c0_100 = arith.constant 0 : index
    %159 = vector.load %arg12[%c0_99, %c0_100] : memref<1x32xf32, #tpu.memory_space<vmem>>, vector<1x32xf32>
    %160 = vector.broadcast %159 : vector<1x32xf32> to vector<8x32xf32>
    %161 = arith.addf %158, %160 : vector<8x32xf32>
    %162 = arith.addf %161, %149 : vector<8x32xf32>
    %c0_101 = arith.constant 0 : index
    %c0_102 = arith.constant 0 : index
    %163 = vector.load %arg13[%c0_101, %c0_102] : memref<1x32xf32, #tpu.memory_space<vmem>>, vector<1x32xf32>
    %c0_103 = arith.constant 0 : index
    %c0_104 = arith.constant 0 : index
    %164 = vector.load %arg14[%c0_103, %c0_104] : memref<1x32xf32, #tpu.memory_space<vmem>>, vector<1x32xf32>
    %cst_105 = arith.constant dense<0.000000e+00> : vector<8xf32>
    %165 = vector.multi_reduction <add>, %162, %cst_105 [1] : vector<8x32xf32> to vector<8xf32>
    %166 = vector.shape_cast %165 : vector<8xf32> to vector<8x1xf32>
    %cst_106 = arith.constant 3.200000e+01 : f32
    %167 = vector.broadcast %cst_106 : f32 to vector<8x1xf32>
    %168 = arith.divf %166, %167 : vector<8x1xf32>
    %169 = vector.broadcast %168 : vector<8x1xf32> to vector<8x32xf32>
    %170 = arith.subf %162, %169 : vector<8x32xf32>
    %171 = arith.mulf %170, %170 : vector<8x32xf32>
    %cst_107 = arith.constant dense<0.000000e+00> : vector<8xf32>
    %172 = vector.multi_reduction <add>, %171, %cst_107 [1] : vector<8x32xf32> to vector<8xf32>
    %173 = vector.shape_cast %172 : vector<8xf32> to vector<8x1xf32>
    %cst_108 = arith.constant 3.200000e+01 : f32
    %174 = vector.broadcast %cst_108 : f32 to vector<8x1xf32>
    %175 = arith.divf %173, %174 : vector<8x1xf32>
    %cst_109 = arith.constant 9.99999997E-7 : f32
    %176 = vector.broadcast %cst_109 : f32 to vector<8x1xf32>
    %177 = arith.addf %175, %176 : vector<8x1xf32>
    %178 = math.rsqrt %177 : vector<8x1xf32>
    %179 = vector.broadcast %178 : vector<8x1xf32> to vector<8x32xf32>
    %180 = arith.mulf %170, %179 : vector<8x32xf32>
    %181 = vector.broadcast %163 : vector<1x32xf32> to vector<8x32xf32>
    %182 = arith.mulf %180, %181 : vector<8x32xf32>
    %183 = vector.broadcast %164 : vector<1x32xf32> to vector<8x32xf32>
    %184 = arith.addf %182, %183 : vector<8x32xf32>
    %c0_110 = arith.constant 0 : index
    %c0_111 = arith.constant 0 : index
    %c0_112 = arith.constant 0 : index
    %185 = vector.load %arg15[%c0_110, %c0_111, %c0_112] : memref<1x8x32xf32, #tpu.memory_space<vmem>>, vector<1x8x32xf32>
    %186 = vector.shape_cast %185 : vector<1x8x32xf32> to vector<8x32xf32>
    %187 = vector.shape_cast %184 : vector<8x32xf32> to vector<1x8x32xf32>
    tpu.vector_store %arg15[%c0_110, %c0_111, %c0_112], %187 {strides = array<i32>} : memref<1x8x32xf32, #tpu.memory_space<vmem>>, vector<1x8x32xf32>,
    return
  }
  func.func @transform_0(%arg0: i32, %arg1: i32) -> (i32, i32, i32) {
    %c0_i32 = arith.constant 0 : i32
    %c0_i32_0 = arith.constant 0 : i32
    %c0_i32_1 = arith.constant 0 : i32
    return %arg0, %c0_i32, %c0_i32_0 : i32, i32, i32
  }
  func.func @transform_1(%arg0: i32, %arg1: i32) -> (i32, i32, i32) {
    %c0_i32 = arith.constant 0 : i32
    %c0_i32_0 = arith.constant 0 : i32
    %c0_i32_1 = arith.constant 0 : i32
    %c0_i32_2 = arith.constant 0 : i32
    return %c0_i32, %c0_i32_0, %c0_i32_1 : i32, i32, i32
  }
  func.func @transform_2(%arg0: i32, %arg1: i32) -> (i32, i32, i32) {
    %c0_i32 = arith.constant 0 : i32
    %c0_i32_0 = arith.constant 0 : i32
    %c0_i32_1 = arith.constant 0 : i32
    %c0_i32_2 = arith.constant 0 : i32
    return %c0_i32, %c0_i32_0, %c0_i32_1 : i32, i32, i32
  }
  func.func @transform_3(%arg0: i32, %arg1: i32) -> (i32, i32, i32) {
    %c0_i32 = arith.constant 0 : i32
    %c0_i32_0 = arith.constant 0 : i32
    %c0_i32_1 = arith.constant 0 : i32
    %c0_i32_2 = arith.constant 0 : i32
    return %c0_i32, %c0_i32_0, %c0_i32_1 : i32, i32, i32
  }
  func.func @transform_4(%arg0: i32, %arg1: i32) -> (i32, i32) {
    %c0_i32 = arith.constant 0 : i32
    %c0_i32_0 = arith.constant 0 : i32
    %c0_i32_1 = arith.constant 0 : i32
    return %c0_i32, %c0_i32_0 : i32, i32
  }
  func.func @transform_5(%arg0: i32, %arg1: i32) -> (i32, i32) {
    %c0_i32 = arith.constant 0 : i32
    %c0_i32_0 = arith.constant 0 : i32
    %c0_i32_1 = arith.constant 0 : i32
    return %c0_i32, %c0_i32_0 : i32, i32
  }
  func.func @transform_6(%arg0: i32, %arg1: i32) -> (i32, i32) {
    %c0_i32 = arith.constant 0 : i32
    %c0_i32_0 = arith.constant 0 : i32
    %c0_i32_1 = arith.constant 0 : i32
    return %c0_i32, %c0_i32_0 : i32, i32
  }
  func.func @transform_7(%arg0: i32, %arg1: i32) -> (i32, i32) {
    %c0_i32 = arith.constant 0 : i32
    %c0_i32_0 = arith.constant 0 : i32
    %c0_i32_1 = arith.constant 0 : i32
    return %c0_i32, %c0_i32_0 : i32, i32
  }
  func.func @transform_8(%arg0: i32, %arg1: i32) -> (i32, i32) {
    %c0_i32 = arith.constant 0 : i32
    %c0_i32_0 = arith.constant 0 : i32
    %c0_i32_1 = arith.constant 0 : i32
    return %c0_i32, %c0_i32_0 : i32, i32
  }
  func.func @transform_9(%arg0: i32, %arg1: i32) -> (i32, i32) {
    %c0_i32 = arith.constant 0 : i32
    %c0_i32_0 = arith.constant 0 : i32
    %c0_i32_1 = arith.constant 0 : i32
    return %c0_i32, %c0_i32_0 : i32, i32
  }
  func.func @transform_10(%arg0: i32, %arg1: i32) -> (i32, i32) {
    %c0_i32 = arith.constant 0 : i32
    %c0_i32_0 = arith.constant 0 : i32
    %c0_i32_1 = arith.constant 0 : i32
    return %c0_i32, %c0_i32_0 : i32, i32
  }
  func.func @transform_11(%arg0: i32, %arg1: i32) -> (i32, i32) {
    %c0_i32 = arith.constant 0 : i32
    %c0_i32_0 = arith.constant 0 : i32
    %c0_i32_1 = arith.constant 0 : i32
    return %c0_i32, %c0_i32_0 : i32, i32
  }
  func.func @transform_12(%arg0: i32, %arg1: i32) -> (i32, i32) {
    %c0_i32 = arith.constant 0 : i32
    %c0_i32_0 = arith.constant 0 : i32
    %c0_i32_1 = arith.constant 0 : i32
    return %c0_i32, %c0_i32_0 : i32, i32
  }
  func.func @transform_13(%arg0: i32, %arg1: i32) -> (i32, i32, i32) {
    %c0_i32 = arith.constant 0 : i32
    %c0_i32_0 = arith.constant 0 : i32
    return %arg0, %arg1, %c0_i32 : i32, i32, i32
  }
  func.func @transform_14(%arg0: i32, %arg1: i32) -> (i32, i32, i32, i32) {
    %c0_i32 = arith.constant 0 : i32
    %c0_i32_0 = arith.constant 0 : i32
    %c0_i32_1 = arith.constant 0 : i32
    return %arg0, %c0_i32, %arg1, %c0_i32_0 : i32, i32, i32, i32
  }
}

</mosaic_0001>

<llo_original>
// kernel: tpu_custom_call.1
$region0: #{tpu_custom_call.1}
  #allocation0 [shape = 'u32[]', space=smem, size = 0x4, offset = 0x4, fixed_abs, tag = 'smem constant byte address 0x4 - core index']
  #allocation1 [shape = 'u32[144,128]{1,0:T(1,128)}', space=vmem, size = 0x12000, scoped, tag = 'internal scratch']
  #allocation2 [shape = 'f32[4,16,8]{2,1,0:T(8,128)}', space=vmem, size = 0x8000, scoped, tag = 'scratch operand']
  #allocation3 [shape = 'f32[4,16,8]{2,1,0:T(8,128)}', space=vmem, size = 0x8000, scoped, tag = 'scratch operand']
  %s0 = inlined_call_operand.vmem [shape: f32[2,16,32], index: 0, kind: input, shape index: {}]
  %s1 = inlined_call_operand.vmem [shape: f32[4,32,8], index: 1, kind: input, shape index: {}]
  %s2 = inlined_call_operand.vmem [shape: f32[4,32,8], index: 2, kind: input, shape index: {}]
  %s3 = inlined_call_operand.vmem [shape: f32[4,32,8], index: 3, kind: input, shape index: {}]
  %s4 = inlined_call_operand.vmem [shape: f32[32,32], index: 4, kind: input, shape index: {}]
  %s5 = inlined_call_operand.vmem [shape: f32[1,32], index: 5, kind: input, shape index: {}]
  %s6 = inlined_call_operand.vmem [shape: f32[1,32], index: 6, kind: input, shape index: {}]
  %s7 = inlined_call_operand.vmem [shape: f32[32,64], index: 7, kind: input, shape index: {}]
  %s8 = inlined_call_operand.vmem [shape: f32[1,64], index: 8, kind: input, shape index: {}]
  %s9 = inlined_call_operand.vmem [shape: f32[64,32], index: 9, kind: input, shape index: {}]
  %s10 = inlined_call_operand.vmem [shape: f32[1,32], index: 10, kind: input, shape index: {}]
  %s11 = inlined_call_operand.vmem [shape: f32[1,32], index: 11, kind: input, shape index: {}]
  %s12 = inlined_call_operand.vmem [shape: f32[1,32], index: 12, kind: input, shape index: {}]
  %s13 = inlined_call_operand.hbm [shape: f32[2,16,32], index: 13, kind: output, shape index: {0}]
  %s14 = inlined_call_operand.hbm [shape: bf16[2,4,16,16], index: 14, kind: output, shape index: {1}]
  %15 = xla_tuple %s13, %s14
  %s16 = sld [smem:[#allocation0]]
  $region97: #{tpu_custom_call.1} parent=0
    _
  %s18 = ssub.s32 1, %s16
  %s19 = scalar_select 0, %s18, %s16
  $region1: #{tpu_custom_call.1} parent=0
    #allocation4 [shape = 'u8[8192]{0}', space=vmem, size = 0x2000, scoped, tag = 'output window, operand 0']
    #allocation5 [shape = 's32[2]{0}', space=sflag, size = 0x8, scoped, tag = 'scoped memory for tpu_custom_call.1']
    #allocation6 [shape = 'u8[16384]{0}', space=vmem, size = 0x4000, scoped, tag = 'output window, operand 1']
    #allocation7 [shape = 's32[2]{0}', space=sflag, size = 0x8, scoped, tag = 'scoped memory for tpu_custom_call.1']
    %20 = vsyncpa [#allocation5], 0
    %s21 = scalar_lea.sflag [#allocation5], 1
    %22 = vsyncpa %s21, 0
    %23 = vsyncpa [#allocation7], 0
    %s24 = scalar_lea.sflag [#allocation7], 1
    %25 = vsyncpa %s24, 0
    loop: start=0, step=1, limit=6
    $region2: #{tpu_custom_call.1} parent=1 // loop_pre_header
      _
    $region3: #{tpu_custom_call.1} parent=1 // loop_header
      %s27 = sphi 0, %s31
      %p28 = scmp.ge.s32.totalorder %s27, 6
      %s34 = sphi 0, %s46
      %s35 = sphi 0, %s42
      %s36 = sphi 0, %s34
      %s37 = sphi 0, %s35
      %s38 = sphi 0, %s36
      %s39 = sphi 0, %s37
      %s49 = sphi 0, %s51
      %s52 = sphi 0, %s49
      %s53 = sphi 0, %s52
      %s69 = sphi 0, %s53
      %s73 = sphi 0, %s73
      %s75 = sphi 0, %s73
      %s76 = sphi 0, %s75
      %s90 = sphi 0, %s76
      %s94 = sphi 0, %s94
      %s96 = sphi 0, %s94
      %s97 = sphi 0, %s96
      %s111 = sphi 0, %s97
      %s115 = sphi 0, %s115
      %s117 = sphi 0, %s115
      %s118 = sphi 0, %s117
      %s132 = sphi 0, %s118
      %s136 = sphi 0, %s136
      %s138 = sphi 0, %s136
      %s139 = sphi 0, %s138
      %s153 = sphi 0, %s139
      %s157 = sphi 0, %s157
      %s159 = sphi 0, %s157
      %s160 = sphi 0, %s159
      %s174 = sphi 0, %s160
      %s178 = sphi 0, %s178
      %s180 = sphi 0, %s178
      %s181 = sphi 0, %s180
      %s195 = sphi 0, %s181
      %s199 = sphi 0, %s199
      %s201 = sphi 0, %s199
      %s202 = sphi 0, %s201
      %s216 = sphi 0, %s202
      %s220 = sphi 0, %s220
      %s222 = sphi 0, %s220
      %s223 = sphi 0, %s222
      %s237 = sphi 0, %s223
      %s241 = sphi 0, %s241
      %s243 = sphi 0, %s241
      %s244 = sphi 0, %s243
      %s258 = sphi 0, %s244
      %s262 = sphi 0, %s262
      %s264 = sphi 0, %s262
      %s265 = sphi 0, %s264
      %s279 = sphi 0, %s265
      %s283 = sphi 0, %s283
      %s285 = sphi 0, %s283
      %s286 = sphi 0, %s285
      %s300 = sphi 0, %s286
      %s304 = sphi 0, %s304
      %s306 = sphi 0, %s304
      %s307 = sphi 0, %s306
      %s321 = sphi 0, %s307
      %s329 = sphi 0, %s331
      %s332 = sphi 0, %s329
      %s333 = sphi 0, %s332
      %s349 = sphi 0, %s333
      %s357 = sphi 0, %s359
      %s360 = sphi 0, %s357
      %s361 = sphi 0, %s360
      %s377 = sphi 0, %s361
    $region4: #{tpu_custom_call.1} parent=1 // loop_header_branch
      %30 = sbr.rel (%p28) target = $region8
    $region5: #{tpu_custom_call.1} parent=1 // loop_body
      %s32 = ssub.s32 %s27, 1
      %s33 = ssub.s32 %s27, 2
      %s40 = sadd.s32 1, %s35
      %p41 = scmp.ge.s32.totalorder %s40, 2
      %s42 = scalar_select %p41, 0, %s40
      %s43 = sadd.s32 1, %s34
      %s44 = scalar_select %p41, %s43, %s34
      %p45 = scmp.ge.s32.totalorder %s44, 2
      %s46 = scalar_select %p45, 0, %s44
      %s47 = ssub.s32 %s34, %s46
      %p48 = scmp.eq.s32.totalorder %s47, 0
      %s50 = sadd.s32 %s49, 1
      %s51 = scalar_select %p48, %s49, %s50
      %p54 = pneg %p48
      %p55 = scmp.eq.s32.totalorder %s27, 3
      %p56 = por %p54, %p55
      %p57 = scmp.ne.s32.totalorder %s49, %s52
      %p58 = scmp.eq.s32.totalorder %s27, 0
      %p59 = por %p57, %p58
      %p60 = scmp.ne.s32.totalorder %s49, %s52
      %p61 = scmp.eq.s32.totalorder %s32, 3
      %p62 = por %p60, %p61
      %p63 = scmp.ne.s32.totalorder %s52, %s53
      %p64 = scmp.eq.s32.totalorder %s32, 0
      %p65 = por %p63, %p64
      %p66 = scmp.ne.s32.totalorder %s52, %s53
      %p67 = scmp.eq.s32.totalorder %s33, 3
      %p68 = por %p66, %p67
      %p70 = scmp.ne.s32.totalorder %s53, %s69
      %p71 = scmp.eq.s32.totalorder %s33, 0
      %p72 = por %p70, %p71
      %s74 = sadd.s32 %s73, 1
      %p77 = scmp.eq.s32.totalorder %s27, 3
      %p78 = scmp.ne.s32.totalorder %s73, %s75
      %p79 = scmp.eq.s32.totalorder %s27, 0
      %p80 = por %p78, %p79
      %p81 = scmp.ne.s32.totalorder %s73, %s75
      %p82 = scmp.eq.s32.totalorder %s32, 3
      %p83 = por %p81, %p82
      %p84 = scmp.ne.s32.totalorder %s75, %s76
      %p85 = scmp.eq.s32.totalorder %s32, 0
      %p86 = por %p84, %p85
      %p87 = scmp.ne.s32.totalorder %s75, %s76
      %p88 = scmp.eq.s32.totalorder %s33, 3
      %p89 = por %p87, %p88
      %p91 = scmp.ne.s32.totalorder %s76, %s90
      %p92 = scmp.eq.s32.totalorder %s33, 0
      %p93 = por %p91, %p92
      %s95 = sadd.s32 %s94, 1
      %p98 = scmp.eq.s32.totalorder %s27, 3
      %p99 = scmp.ne.s32.totalorder %s94, %s96
      %p100 = scmp.eq.s32.totalorder %s27, 0
      %p101 = por %p99, %p100
      %p102 = scmp.ne.s32.totalorder %s94, %s96
      %p103 = scmp.eq.s32.totalorder %s32, 3
      %p104 = por %p102, %p103
      %p105 = scmp.ne.s32.totalorder %s96, %s97
      %p106 = scmp.eq.s32.totalorder %s32, 0
      %p107 = por %p105, %p106
      %p108 = scmp.ne.s32.totalorder %s96, %s97
      %p109 = scmp.eq.s32.totalorder %s33, 3
      %p110 = por %p108, %p109
      %p112 = scmp.ne.s32.totalorder %s97, %s111
      %p113 = scmp.eq.s32.totalorder %s33, 0
      %p114 = por %p112, %p113
      %s116 = sadd.s32 %s115, 1
      %p119 = scmp.eq.s32.totalorder %s27, 3
      %p120 = scmp.ne.s32.totalorder %s115, %s117
      %p121 = scmp.eq.s32.totalorder %s27, 0
      %p122 = por %p120, %p121
      %p123 = scmp.ne.s32.totalorder %s115, %s117
      %p124 = scmp.eq.s32.totalorder %s32, 3
      %p125 = por %p123, %p124
      %p126 = scmp.ne.s32.totalorder %s117, %s118
      %p127 = scmp.eq.s32.totalorder %s32, 0
      %p128 = por %p126, %p127
      %p129 = scmp.ne.s32.totalorder %s117, %s118
      %p130 = scmp.eq.s32.totalorder %s33, 3
      %p131 = por %p129, %p130
      %p133 = scmp.ne.s32.totalorder %s118, %s132
      %p134 = scmp.eq.s32.totalorder %s33, 0
      %p135 = por %p133, %p134
      %s137 = sadd.s32 %s136, 1
      %p140 = scmp.eq.s32.totalorder %s27, 3
      %p141 = scmp.ne.s32.totalorder %s136, %s138
      %p142 = scmp.eq.s32.totalorder %s27, 0
      %p143 = por %p141, %p142
      %p144 = scmp.ne.s32.totalorder %s136, %s138
      %p145 = scmp.eq.s32.totalorder %s32, 3
      %p146 = por %p144, %p145
      %p147 = scmp.ne.s32.totalorder %s138, %s139
      %p148 = scmp.eq.s32.totalorder %s32, 0
      %p149 = por %p147, %p148
      %p150 = scmp.ne.s32.totalorder %s138, %s139
      %p151 = scmp.eq.s32.totalorder %s33, 3
      %p152 = por %p150, %p151
      %p154 = scmp.ne.s32.totalorder %s139, %s153
      %p155 = scmp.eq.s32.totalorder %s33, 0
      %p156 = por %p154, %p155
      %s158 = sadd.s32 %s157, 1
      %p161 = scmp.eq.s32.totalorder %s27, 3
      %p162 = scmp.ne.s32.totalorder %s157, %s159
      %p163 = scmp.eq.s32.totalorder %s27, 0
      %p164 = por %p162, %p163
      %p165 = scmp.ne.s32.totalorder %s157, %s159
      %p166 = scmp.eq.s32.totalorder %s32, 3
      %p167 = por %p165, %p166
      %p168 = scmp.ne.s32.totalorder %s159, %s160
      %p169 = scmp.eq.s32.totalorder %s32, 0
      %p170 = por %p168, %p169
      %p171 = scmp.ne.s32.totalorder %s159, %s160
      %p172 = scmp.eq.s32.totalorder %s33, 3
      %p173 = por %p171, %p172
      %p175 = scmp.ne.s32.totalorder %s160, %s174
      %p176 = scmp.eq.s32.totalorder %s33, 0
      %p177 = por %p175, %p176
      %s179 = sadd.s32 %s178, 1
      %p182 = scmp.eq.s32.totalorder %s27, 3
      %p183 = scmp.ne.s32.totalorder %s178, %s180
      %p184 = scmp.eq.s32.totalorder %s27, 0
      %p185 = por %p183, %p184
      %p186 = scmp.ne.s32.totalorder %s178, %s180
      %p187 = scmp.eq.s32.totalorder %s32, 3
      %p188 = por %p186, %p187
      %p189 = scmp.ne.s32.totalorder %s180, %s181
      %p190 = scmp.eq.s32.totalorder %s32, 0
      %p191 = por %p189, %p190
      %p192 = scmp.ne.s32.totalorder %s180, %s181
      %p193 = scmp.eq.s32.totalorder %s33, 3
      %p194 = por %p192, %p193
      %p196 = scmp.ne.s32.totalorder %s181, %s195
      %p197 = scmp.eq.s32.totalorder %s33, 0
      %p198 = por %p196, %p197
      %s200 = sadd.s32 %s199, 1
      %p203 = scmp.eq.s32.totalorder %s27, 3
      %p204 = scmp.ne.s32.totalorder %s199, %s201
      %p205 = scmp.eq.s32.totalorder %s27, 0
      %p206 = por %p204, %p205
      %p207 = scmp.ne.s32.totalorder %s199, %s201
      %p208 = scmp.eq.s32.totalorder %s32, 3
      %p209 = por %p207, %p208
      %p210 = scmp.ne.s32.totalorder %s201, %s202
      %p211 = scmp.eq.s32.totalorder %s32, 0
      %p212 = por %p210, %p211
      %p213 = scmp.ne.s32.totalorder %s201, %s202
      %p214 = scmp.eq.s32.totalorder %s33, 3
      %p215 = por %p213, %p214
      %p217 = scmp.ne.s32.totalorder %s202, %s216
      %p218 = scmp.eq.s32.totalorder %s33, 0
      %p219 = por %p217, %p218
      %s221 = sadd.s32 %s220, 1
      %p224 = scmp.eq.s32.totalorder %s27, 3
      %p225 = scmp.ne.s32.totalorder %s220, %s222
      %p226 = scmp.eq.s32.totalorder %s27, 0
      %p227 = por %p225, %p226
      %p228 = scmp.ne.s32.totalorder %s220, %s222
      %p229 = scmp.eq.s32.totalorder %s32, 3
      %p230 = por %p228, %p229
      %p231 = scmp.ne.s32.totalorder %s222, %s223
      %p232 = scmp.eq.s32.totalorder %s32, 0
      %p233 = por %p231, %p232
      %p234 = scmp.ne.s32.totalorder %s222, %s223
      %p235 = scmp.eq.s32.totalorder %s33, 3
      %p236 = por %p234, %p235
      %p238 = scmp.ne.s32.totalorder %s223, %s237
      %p239 = scmp.eq.s32.totalorder %s33, 0
      %p240 = por %p238, %p239
      %s242 = sadd.s32 %s241, 1
      %p245 = scmp.eq.s32.totalorder %s27, 3
      %p246 = scmp.ne.s32.totalorder %s241, %s243
      %p247 = scmp.eq.s32.totalorder %s27, 0
      %p248 = por %p246, %p247
      %p249 = scmp.ne.s32.totalorder %s241, %s243
      %p250 = scmp.eq.s32.totalorder %s32, 3
      %p251 = por %p249, %p250
      %p252 = scmp.ne.s32.totalorder %s243, %s244
      %p253 = scmp.eq.s32.totalorder %s32, 0
      %p254 = por %p252, %p253
      %p255 = scmp.ne.s32.totalorder %s243, %s244
      %p256 = scmp.eq.s32.totalorder %s33, 3
      %p257 = por %p255, %p256
      %p259 = scmp.ne.s32.totalorder %s244, %s258
      %p260 = scmp.eq.s32.totalorder %s33, 0
      %p261 = por %p259, %p260
      %s263 = sadd.s32 %s262, 1
      %p266 = scmp.eq.s32.totalorder %s27, 3
      %p267 = scmp.ne.s32.totalorder %s262, %s264
      %p268 = scmp.eq.s32.totalorder %s27, 0
      %p269 = por %p267, %p268
      %p270 = scmp.ne.s32.totalorder %s262, %s264
      %p271 = scmp.eq.s32.totalorder %s32, 3
      %p272 = por %p270, %p271
      %p273 = scmp.ne.s32.totalorder %s264, %s265
      %p274 = scmp.eq.s32.totalorder %s32, 0
      %p275 = por %p273, %p274
      %p276 = scmp.ne.s32.totalorder %s264, %s265
      %p277 = scmp.eq.s32.totalorder %s33, 3
      %p278 = por %p276, %p277
      %p280 = scmp.ne.s32.totalorder %s265, %s279
      %p281 = scmp.eq.s32.totalorder %s33, 0
      %p282 = por %p280, %p281
      %s284 = sadd.s32 %s283, 1
      %p287 = scmp.eq.s32.totalorder %s27, 3
      %p288 = scmp.ne.s32.totalorder %s283, %s285
      %p289 = scmp.eq.s32.totalorder %s27, 0
      %p290 = por %p288, %p289
      %p291 = scmp.ne.s32.totalorder %s283, %s285
      %p292 = scmp.eq.s32.totalorder %s32, 3
      %p293 = por %p291, %p292
      %p294 = scmp.ne.s32.totalorder %s285, %s286
      %p295 = scmp.eq.s32.totalorder %s32, 0
      %p296 = por %p294, %p295
      %p297 = scmp.ne.s32.totalorder %s285, %s286
      %p298 = scmp.eq.s32.totalorder %s33, 3
      %p299 = por %p297, %p298
      %p301 = scmp.ne.s32.totalorder %s286, %s300
      %p302 = scmp.eq.s32.totalorder %s33, 0
      %p303 = por %p301, %p302
      %s305 = sadd.s32 %s304, 1
      %p308 = scmp.eq.s32.totalorder %s27, 3
      %p309 = scmp.ne.s32.totalorder %s304, %s306
      %p310 = scmp.eq.s32.totalorder %s27, 0
      %p311 = por %p309, %p310
      %p312 = scmp.ne.s32.totalorder %s304, %s306
      %p313 = scmp.eq.s32.totalorder %s32, 3
      %p314 = por %p312, %p313
      %p315 = scmp.ne.s32.totalorder %s306, %s307
      %p316 = scmp.eq.s32.totalorder %s32, 0
      %p317 = por %p315, %p316
      %p318 = scmp.ne.s32.totalorder %s306, %s307
      %p319 = scmp.eq.s32.totalorder %s33, 3
      %p320 = por %p318, %p319
      %p322 = scmp.ne.s32.totalorder %s307, %s321
      %p323 = scmp.eq.s32.totalorder %s33, 0
      %p324 = por %p322, %p323
      %s325 = ssub.s32 %s34, %s46
      %s326 = ssub.s32 %s35, %s42
      %s327 = sor.u32 %s325, %s326
      %p328 = scmp.eq.s32.totalorder %s327, 0
      %s330 = sadd.s32 %s329, 1
      %s331 = scalar_select %p328, %s329, %s330
      %p334 = pneg %p328
      %p335 = scmp.eq.s32.totalorder %s27, 3
      %p336 = por %p334, %p335
      %p337 = scmp.ne.s32.totalorder %s329, %s332
      %p338 = scmp.eq.s32.totalorder %s27, 0
      %p339 = por %p337, %p338
      %p340 = scmp.ne.s32.totalorder %s329, %s332
      %p341 = scmp.eq.s32.totalorder %s32, 3
      %p342 = por %p340, %p341
      %p343 = scmp.ne.s32.totalorder %s332, %s333
      %p344 = scmp.eq.s32.totalorder %s32, 0
      %p345 = por %p343, %p344
      %p346 = scmp.ne.s32.totalorder %s332, %s333
      %p347 = scmp.eq.s32.totalorder %s33, 3
      %p348 = por %p346, %p347
      %p350 = scmp.ne.s32.totalorder %s333, %s349
      %p351 = scmp.eq.s32.totalorder %s33, 0
      %p352 = por %p350, %p351
      %s353 = ssub.s32 %s34, %s46
      %s354 = ssub.s32 %s35, %s42
      %s355 = sor.u32 %s353, %s354
      %p356 = scmp.eq.s32.totalorder %s355, 0
      %s358 = sadd.s32 %s357, 1
      %s359 = scalar_select %p356, %s357, %s358
      %p362 = pneg %p356
      %p363 = scmp.eq.s32.totalorder %s27, 3
      %p364 = por %p362, %p363
      %p365 = scmp.ne.s32.totalorder %s357, %s360
      %p366 = scmp.eq.s32.totalorder %s27, 0
      %p367 = por %p365, %p366
      %p368 = scmp.ne.s32.totalorder %s357, %s360
      %p369 = scmp.eq.s32.totalorder %s32, 3
      %p370 = por %p368, %p369
      %p371 = scmp.ne.s32.totalorder %s360, %s361
      %p372 = scmp.eq.s32.totalorder %s32, 0
      %p373 = por %p371, %p372
      %p374 = scmp.ne.s32.totalorder %s360, %s361
      %p375 = scmp.eq.s32.totalorder %s33, 3
      %p376 = por %p374, %p375
      %p378 = scmp.ne.s32.totalorder %s361, %s377
      %p379 = scmp.eq.s32.totalorder %s33, 0
      %p380 = por %p378, %p379
      %p381 = scmp.le.s32.totalorder 1, %s27
      %p382 = scmp.lt.s32.totalorder %s27, 5
      %p383 = pnand %p381, %p382
      %p384 = pneg %p383
      // Predicated region
      $region9: #{tpu_custom_call.1} parent=5 // pred_check
        _
      $region10: #{tpu_custom_call.1} parent=5 // pred_check_branch
        %386 = sbr.rel (%p383) target = $region12
      $region11: #{tpu_custom_call.1} parent=5 // pred_region
        %s387 = ssub.s32 %s27, 1
        // Predicated region
        $region13: #{tpu_custom_call.1} parent=11 // pred_check
          %p388 = pneg %p86
        $region14: #{tpu_custom_call.1} parent=11 // pred_check_branch
          %390 = sbr.rel (%p388) target = $region16
        $region15: #{tpu_custom_call.1} parent=11 // pred_region
          _
        $region16: #{tpu_custom_call.1} parent=11 // pred_fallthru
          _
        // Predicated region
        $region17: #{tpu_custom_call.1} parent=11 // pred_check
          %p391 = pneg %p107
        $region18: #{tpu_custom_call.1} parent=11 // pred_check_branch
          %393 = sbr.rel (%p391) target = $region20
        $region19: #{tpu_custom_call.1} parent=11 // pred_region
          _
        $region20: #{tpu_custom_call.1} parent=11 // pred_fallthru
          _
        // Predicated region
        $region21: #{tpu_custom_call.1} parent=11 // pred_check
          %p394 = pneg %p128
        $region22: #{tpu_custom_call.1} parent=11 // pred_check_branch
          %396 = sbr.rel (%p394) target = $region24
        $region23: #{tpu_custom_call.1} parent=11 // pred_region
          _
        $region24: #{tpu_custom_call.1} parent=11 // pred_fallthru
          _
        // Predicated region
        $region25: #{tpu_custom_call.1} parent=11 // pred_check
          %p397 = pneg %p149
        $region26: #{tpu_custom_call.1} parent=11 // pred_check_branch
          %399 = sbr.rel (%p397) target = $region28
        $region27: #{tpu_custom_call.1} parent=11 // pred_region
          _
        $region28: #{tpu_custom_call.1} parent=11 // pred_fallthru
          _
        // Predicated region
        $region29: #{tpu_custom_call.1} parent=11 // pred_check
          %p400 = pneg %p170
        $region30: #{tpu_custom_call.1} parent=11 // pred_check_branch
          %402 = sbr.rel (%p400) target = $region32
        $region31: #{tpu_custom_call.1} parent=11 // pred_region
          _
        $region32: #{tpu_custom_call.1} parent=11 // pred_fallthru
          _
        // Predicated region
        $region33: #{tpu_custom_call.1} parent=11 // pred_check
          %p403 = pneg %p191
        $region34: #{tpu_custom_call.1} parent=11 // pred_check_branch
          %405 = sbr.rel (%p403) target = $region36
        $region35: #{tpu_custom_call.1} parent=11 // pred_region
          _
        $region36: #{tpu_custom_call.1} parent=11 // pred_fallthru
          _
        // Predicated region
        $region37: #{tpu_custom_call.1} parent=11 // pred_check
          %p406 = pneg %p212
        $region38: #{tpu_custom_call.1} parent=11 // pred_check_branch
          %408 = sbr.rel (%p406) target = $region40
        $region39: #{tpu_custom_call.1} parent=11 // pred_region
          _
        $region40: #{tpu_custom_call.1} parent=11 // pred_fallthru
          _
        // Predicated region
        $region41: #{tpu_custom_call.1} parent=11 // pred_check
          %p409 = pneg %p233
        $region42: #{tpu_custom_call.1} parent=11 // pred_check_branch
          %411 = sbr.rel (%p409) target = $region44
        $region43: #{tpu_custom_call.1} parent=11 // pred_region
          _
        $region44: #{tpu_custom_call.1} parent=11 // pred_fallthru
          _
        // Predicated region
        $region45: #{tpu_custom_call.1} parent=11 // pred_check
          %p412 = pneg %p254
        $region46: #{tpu_custom_call.1} parent=11 // pred_check_branch
          %414 = sbr.rel (%p412) target = $region48
        $region47: #{tpu_custom_call.1} parent=11 // pred_region
          _
        $region48: #{tpu_custom_call.1} parent=11 // pred_fallthru
          _
        // Predicated region
        $region49: #{tpu_custom_call.1} parent=11 // pred_check
          %p415 = pneg %p275
        $region50: #{tpu_custom_call.1} parent=11 // pred_check_branch
          %417 = sbr.rel (%p415) target = $region52
        $region51: #{tpu_custom_call.1} parent=11 // pred_region
          _
        $region52: #{tpu_custom_call.1} parent=11 // pred_fallthru
          _
        // Predicated region
        $region53: #{tpu_custom_call.1} parent=11 // pred_check
          %p418 = pneg %p296
        $region54: #{tpu_custom_call.1} parent=11 // pred_check_branch
          %420 = sbr.rel (%p418) target = $region56
        $region55: #{tpu_custom_call.1} parent=11 // pred_region
          _
        $region56: #{tpu_custom_call.1} parent=11 // pred_fallthru
          _
        // Predicated region
        $region57: #{tpu_custom_call.1} parent=11 // pred_check
          %p421 = pneg %p317
        $region58: #{tpu_custom_call.1} parent=11 // pred_check_branch
          %423 = sbr.rel (%p421) target = $region60
        $region59: #{tpu_custom_call.1} parent=11 // pred_region
          _
        $region60: #{tpu_custom_call.1} parent=11 // pred_fallthru
          _
      $region12: #{tpu_custom_call.1} parent=5 // pred_fallthru
        _
      %p424 = scmp.lt.s32.totalorder %s27, 4
      // Predicated region
      $region61: #{tpu_custom_call.1} parent=5 // pred_check
        %p425 = pneg %p424
      $region62: #{tpu_custom_call.1} parent=5 // pred_check_branch
        %427 = sbr.rel (%p425) target = $region64
      $region63: #{tpu_custom_call.1} parent=5 // pred_region
        // Predicated region
        $region65: #{tpu_custom_call.1} parent=63 // pred_check
          %p428 = pneg %p59
        $region66: #{tpu_custom_call.1} parent=63 // pred_check_branch
          %430 = sbr.rel (%p428) target = $region68
        $region67: #{tpu_custom_call.1} parent=63 // pred_region
          %p431 = scmp.lt.s32.totalorder %s34, 1
          %s432 = scalar_select %p431, %s34, 1
          %s433 = smul.addr %s432, 2
          %s434 = smul.addr %s433, 8
          %s435 = scalar_lea.vmem %s0, %s434
        $region68: #{tpu_custom_call.1} parent=63 // pred_fallthru
          _
      $region64: #{tpu_custom_call.1} parent=5 // pred_fallthru
        _
      %p436 = scmp.le.s32.totalorder 1, %s27
      %p437 = scmp.lt.s32.totalorder %s27, 5
      %p438 = pnand %p436, %p437
      %p439 = pneg %p438
      // Predicated region
      $region69: #{tpu_custom_call.1} parent=5 // pred_check
        _
      $region70: #{tpu_custom_call.1} parent=5 // pred_check_branch
        %441 = sbr.rel (%p438) target = $region72
      $region71: #{tpu_custom_call.1} parent=5 // pred_region
        %s442 = ssub.s32 %s27, 1
        %p443 = scmp.lt.s32.totalorder %s36, 1
        %s444 = scalar_select %p443, %s36, 1
        %s445 = smul.addr %s444, 2
        %s446 = smul.addr %s445, 8
        %s447 = scalar_lea.vmem %s0, %s446
        %p448 = pneg %p65
        %p449 = pneg %p62
        %p450 = pneg %p86
        %p451 = pneg %p83
        %p452 = pneg %p107
        %p453 = pneg %p104
        %p454 = pneg %p128
        %p455 = pneg %p125
        %p456 = pneg %p149
        %p457 = pneg %p146
        %p458 = pneg %p170
        %p459 = pneg %p167
        %p460 = pneg %p191
        %p461 = pneg %p188
        %p462 = pneg %p212
        %p463 = pneg %p209
        %p464 = pneg %p233
        %p465 = pneg %p230
        %p466 = pneg %p254
        %p467 = pneg %p251
        %p468 = pneg %p275
        %p469 = pneg %p272
        %p470 = pneg %p296
        %p471 = pneg %p293
        %p472 = pneg %p317
        %p473 = pneg %p314
        %p474 = pneg %p345
        %p475 = pneg %p342
        %s476 = sand.u32 %s332, 1
        %s477 = scalar_lea.sflag [#allocation5], %s476
        %s478 = sand.u32 %s332, 1
        %s479 = smul.addr %s478, 8
        %s480 = scalar_lea.vmem [#allocation4], %s479
        %p481 = pneg %p373
        %p482 = pneg %p370
        %s483 = sand.u32 %s360, 1
        %s484 = scalar_lea.sflag [#allocation7], %s483
        %s485 = sand.u32 %s360, 1
        %s486 = smul.addr %s485, 16
        %s487 = scalar_lea.vmem [#allocation6], %s486
        %p488 = scmp.lt.s32.totalorder %s36, 1
        %s489 = scalar_select %p488, %s36, 1
        %s490 = smul.addr %s489, 2
        %s491 = smul.addr %s490, 8
        %s492 = scalar_lea.vmem %s0, %s491
        %p493 = scmp.eq.s32.totalorder %s37, 0
        // Predicated region
        $region73: #{tpu_custom_call.1} parent=71 // pred_check
          %p494 = pneg %p493
        $region74: #{tpu_custom_call.1} parent=71 // pred_check_branch
          %496 = sbr.rel (%p494) target = $region76
        $region75: #{tpu_custom_call.1} parent=71 // pred_region
          %v497 = vld [vmem:[%s492] sm:$0xff]
          %v498 = vld [vmem:[%s492 + $0x8] sm:$0xff]
          %v499 = vld [vmem:[%s2] sm:$0xff]
          %v500 = vld [vmem:[%s2 + $0x8] sm:$0xff]
          %v501 = vld [vmem:[%s2 + $0x10] sm:$0xff]
          %v502 = vld [vmem:[%s2 + $0x18] sm:$0xff]
          %vm503 = vcmask 261120
          %v505 = vsel %vm503, %v497, 0
          %v508 = vsel %vm503, %v498, 0
          %510 = vmatprep.subr.mxu0 0.0
          %511 = vmatpush1.msra.mxu0 %v499
          %512 = vmatprep.subr.mxu0 0.0
          %513 = vmatpush1.msra.mxu0 %v500
          %514 = vmatprep.subr.mxu0 0.0
          %515 = vmatpush1.msra.mxu0 %v501
          %516 = vmatprep.subr.mxu0 0.0
          %517 = vmatpush1.msra.mxu0 %v502
          %518 = vmatprep.subr.mxu0 0.0
          %519 = vmatpush1.msra.mxu0 0.0
          %520 = vmatprep.subr.mxu0 0.0
          %521 = vmatpush1.msra.mxu0 0.0
          %522 = vmatprep.subr.mxu0 0.0
          %523 = vmatpush1.msra.mxu0 0.0
          %524 = vmatprep.subr.mxu0 0.0
          %525 = vmatpush1.msra.mxu0 0.0
          %526 = vmatprep.subr.mxu0 0.0
          %527 = vmatpush1.msra.mxu0 0.0
          %528 = vmatprep.subr.mxu0 0.0
          %529 = vmatpush1.msra.mxu0 0.0
          %530 = vmatprep.subr.mxu0 0.0
          %531 = vmatpush1.msra.mxu0 0.0
          %532 = vmatprep.subr.mxu0 0.0
          %533 = vmatpush1.msra.mxu0 0.0
          %534 = vmatprep.subr.mxu0 0.0
          %535 = vmatpush1.msra.mxu0 0.0
          %536 = vmatprep.subr.mxu0 0.0
          %537 = vmatpush1.msra.mxu0 0.0
          %538 = vmatprep.subr.mxu0 0.0
          %539 = vmatpush1.msra.mxu0 0.0
          %540 = vmatprep.subr.mxu0 0.0
          %541 = vmatpush1.msra.mxu0 0.0
          %542 = vmatprep.subr.mxu0 0.0
          %543 = vmatpush1.msra.mxu0 0.0
          %544 = vmatprep.subr.mxu0 0.0
          %545 = vmatpush1.msra.mxu0 0.0
          %546 = vmatprep.subr.mxu0 0.0
          %547 = vmatpush1.msra.mxu0 0.0
          %548 = vmatprep.subr.mxu0 0.0
          %549 = vmatpush1.msra.mxu0 0.0
          %550 = vmatprep.subr.mxu0 0.0
          %551 = vmatpush1.msra.mxu0 0.0
          %552 = vmatprep.subr.mxu0 0.0
          %553 = vmatpush1.msra.mxu0 0.0
          %554 = vmatprep.subr.mxu0 0.0
          %555 = vmatpush1.msra.mxu0 0.0
          %556 = vmatprep.subr.mxu0 0.0
          %557 = vmatpush1.msra.mxu0 0.0
          %558 = vmatprep.subr.mxu0 0.0
          %559 = vmatpush1.msra.mxu0 0.0
          %560 = vmatprep.subr.mxu0 0.0
          %561 = vmatpush1.msra.mxu0 0.0
          %562 = vmatprep.subr.mxu0 0.0
          %563 = vmatpush1.msra.mxu0 0.0
          %564 = vmatprep.subr.mxu0 0.0
          %565 = vmatpush1.msra.mxu0 0.0
          %566 = vmatprep.subr.mxu0 0.0
          %567 = vmatpush1.msra.mxu0 0.0
          %568 = vmatprep.subr.mxu0 0.0
          %569 = vmatpush1.msra.mxu0 0.0
          %570 = vmatprep.subr.mxu0 0.0
          %571 = vmatpush1.msra.mxu0 0.0
          %572 = vmatprep.subr.mxu0 0.0
          %573 = vmatpush1.msra.mxu0 0.0
          %574 = vmatprep.mubr.f32.mxu0 0.0
          %575 = vmatmul.mubr.f32.gmra.mrb[0].mxu0 %v505
          %v576 = vpop.f32.mrb[0].mxu0
          %v577 = vadd.f32 0.0, %v576
          %v578 = vpop.f32.mrb[0].mxu0
          %579 = vmatprep.mubr.f32.mxu0 0.0
          %580 = vmatmul.mubr.f32.gmra.mrb[0].mxu0 %v508
          %v581 = vpop.f32.mrb[0].mxu0
          %v582 = vadd.f32 0.0, %v581
          %v583 = vpop.f32.mrb[0].mxu0
          %584 = vdwg.mxu0
          %vm585 = vcmask 64512
          %586 = vst.msk [vmem:[#allocation2] sm:$0xff] %vm585, %v577
          %587 = vst.msk [vmem:[#allocation2 + $0x8] sm:$0xff] %vm585, %v582
          %v588 = vld [vmem:[%s3] sm:$0xff]
          %v589 = vld [vmem:[%s3 + $0x8] sm:$0xff]
          %v590 = vld [vmem:[%s3 + $0x10] sm:$0xff]
          %v591 = vld [vmem:[%s3 + $0x18] sm:$0xff]
          %592 = vmatprep.subr.mxu0 0.0
          %593 = vmatpush1.msra.mxu0 %v588
          %594 = vmatprep.subr.mxu0 0.0
          %595 = vmatpush1.msra.mxu0 %v589
          %596 = vmatprep.subr.mxu0 0.0
          %597 = vmatpush1.msra.mxu0 %v590
          %598 = vmatprep.subr.mxu0 0.0
          %599 = vmatpush1.msra.mxu0 %v591
          %600 = vmatprep.subr.mxu0 0.0
          %601 = vmatpush1.msra.mxu0 0.0
          %602 = vmatprep.subr.mxu0 0.0
          %603 = vmatpush1.msra.mxu0 0.0
          %604 = vmatprep.subr.mxu0 0.0
          %605 = vmatpush1.msra.mxu0 0.0
          %606 = vmatprep.subr.mxu0 0.0
          %607 = vmatpush1.msra.mxu0 0.0
          %608 = vmatprep.subr.mxu0 0.0
          %609 = vmatpush1.msra.mxu0 0.0
          %610 = vmatprep.subr.mxu0 0.0
          %611 = vmatpush1.msra.mxu0 0.0
          %612 = vmatprep.subr.mxu0 0.0
          %613 = vmatpush1.msra.mxu0 0.0
          %614 = vmatprep.subr.mxu0 0.0
          %615 = vmatpush1.msra.mxu0 0.0
          %616 = vmatprep.subr.mxu0 0.0
          %617 = vmatpush1.msra.mxu0 0.0
          %618 = vmatprep.subr.mxu0 0.0
          %619 = vmatpush1.msra.mxu0 0.0
          %620 = vmatprep.subr.mxu0 0.0
          %621 = vmatpush1.msra.mxu0 0.0
          %622 = vmatprep.subr.mxu0 0.0
          %623 = vmatpush1.msra.mxu0 0.0
          %624 = vmatprep.subr.mxu0 0.0
          %625 = vmatpush1.msra.mxu0 0.0
          %626 = vmatprep.subr.mxu0 0.0
          %627 = vmatpush1.msra.mxu0 0.0
          %628 = vmatprep.subr.mxu0 0.0
          %629 = vmatpush1.msra.mxu0 0.0
          %630 = vmatprep.subr.mxu0 0.0
          %631 = vmatpush1.msra.mxu0 0.0
          %632 = vmatprep.subr.mxu0 0.0
          %633 = vmatpush1.msra.mxu0 0.0
          %634 = vmatprep.subr.mxu0 0.0
          %635 = vmatpush1.msra.mxu0 0.0
          %636 = vmatprep.subr.mxu0 0.0
          %637 = vmatpush1.msra.mxu0 0.0
          %638 = vmatprep.subr.mxu0 0.0
          %639 = vmatpush1.msra.mxu0 0.0
          %640 = vmatprep.subr.mxu0 0.0
          %641 = vmatpush1.msra.mxu0 0.0
          %642 = vmatprep.subr.mxu0 0.0
          %643 = vmatpush1.msra.mxu0 0.0
          %644 = vmatprep.subr.mxu0 0.0
          %645 = vmatpush1.msra.mxu0 0.0
          %646 = vmatprep.subr.mxu0 0.0
          %647 = vmatpush1.msra.mxu0 0.0
          %648 = vmatprep.subr.mxu0 0.0
          %649 = vmatpush1.msra.mxu0 0.0
          %650 = vmatprep.subr.mxu0 0.0
          %651 = vmatpush1.msra.mxu0 0.0
          %652 = vmatprep.subr.mxu0 0.0
          %653 = vmatpush1.msra.mxu0 0.0
          %654 = vmatprep.subr.mxu0 0.0
          %655 = vmatpush1.msra.mxu0 0.0
          %656 = vmatprep.mubr.f32.mxu0 0.0
          %657 = vmatmul.mubr.f32.gmra.mrb[0].mxu0 %v505
          %v658 = vpop.f32.mrb[0].mxu0
          %v659 = vadd.f32 0.0, %v658
          %v660 = vpop.f32.mrb[0].mxu0
          %661 = vmatprep.mubr.f32.mxu0 0.0
          %662 = vmatmul.mubr.f32.gmra.mrb[0].mxu0 %v508
          %v663 = vpop.f32.mrb[0].mxu0
          %v664 = vadd.f32 0.0, %v663
          %v665 = vpop.f32.mrb[0].mxu0
          %666 = vdwg.mxu0
          %667 = vst.msk [vmem:[#allocation3] sm:$0xff] %vm585, %v659
          %668 = vst.msk [vmem:[#allocation3 + $0x8] sm:$0xff] %vm585, %v664
          %s669 = scalar_lea.vmem %s2, 32
          %v670 = vld [vmem:[%s669] sm:$0xff]
          %v671 = vld [vmem:[%s669 + $0x8] sm:$0xff]
          %v672 = vld [vmem:[%s669 + $0x10] sm:$0xff]
          %v673 = vld [vmem:[%s669 + $0x18] sm:$0xff]
          %674 = vmatprep.subr.mxu0 0.0
          %675 = vmatpush1.msra.mxu0 %v670
          %676 = vmatprep.subr.mxu0 0.0
          %677 = vmatpush1.msra.mxu0 %v671
          %678 = vmatprep.subr.mxu0 0.0
          %679 = vmatpush1.msra.mxu0 %v672
          %680 = vmatprep.subr.mxu0 0.0
          %681 = vmatpush1.msra.mxu0 %v673
          %682 = vmatprep.subr.mxu0 0.0
          %683 = vmatpush1.msra.mxu0 0.0
          %684 = vmatprep.subr.mxu0 0.0
          %685 = vmatpush1.msra.mxu0 0.0
          %686 = vmatprep.subr.mxu0 0.0
          %687 = vmatpush1.msra.mxu0 0.0
          %688 = vmatprep.subr.mxu0 0.0
          %689 = vmatpush1.msra.mxu0 0.0
          %690 = vmatprep.subr.mxu0 0.0
          %691 = vmatpush1.msra.mxu0 0.0
          %692 = vmatprep.subr.mxu0 0.0
          %693 = vmatpush1.msra.mxu0 0.0
          %694 = vmatprep.subr.mxu0 0.0
          %695 = vmatpush1.msra.mxu0 0.0
          %696 = vmatprep.subr.mxu0 0.0
          %697 = vmatpush1.msra.mxu0 0.0
          %698 = vmatprep.subr.mxu0 0.0
          %699 = vmatpush1.msra.mxu0 0.0
          %700 = vmatprep.subr.mxu0 0.0
          %701 = vmatpush1.msra.mxu0 0.0
          %702 = vmatprep.subr.mxu0 0.0
          %703 = vmatpush1.msra.mxu0 0.0
          %704 = vmatprep.subr.mxu0 0.0
          %705 = vmatpush1.msra.mxu0 0.0
          %706 = vmatprep.subr.mxu0 0.0
          %707 = vmatpush1.msra.mxu0 0.0
          %708 = vmatprep.subr.mxu0 0.0
          %709 = vmatpush1.msra.mxu0 0.0
          %710 = vmatprep.subr.mxu0 0.0
          %711 = vmatpush1.msra.mxu0 0.0
          %712 = vmatprep.subr.mxu0 0.0
          %713 = vmatpush1.msra.mxu0 0.0
          %714 = vmatprep.subr.mxu0 0.0
          %715 = vmatpush1.msra.mxu0 0.0
          %716 = vmatprep.subr.mxu0 0.0
          %717 = vmatpush1.msra.mxu0 0.0
          %718 = vmatprep.subr.mxu0 0.0
          %719 = vmatpush1.msra.mxu0 0.0
          %720 = vmatprep.subr.mxu0 0.0
          %721 = vmatpush1.msra.mxu0 0.0
          %722 = vmatprep.subr.mxu0 0.0
          %723 = vmatpush1.msra.mxu0 0.0
          %724 = vmatprep.subr.mxu0 0.0
          %725 = vmatpush1.msra.mxu0 0.0
          %726 = vmatprep.subr.mxu0 0.0
          %727 = vmatpush1.msra.mxu0 0.0
          %728 = vmatprep.subr.mxu0 0.0
          %729 = vmatpush1.msra.mxu0 0.0
          %730 = vmatprep.subr.mxu0 0.0
          %731 = vmatpush1.msra.mxu0 0.0
          %732 = vmatprep.subr.mxu0 0.0
          %733 = vmatpush1.msra.mxu0 0.0
          %734 = vmatprep.subr.mxu0 0.0
          %735 = vmatpush1.msra.mxu0 0.0
          %736 = vmatprep.subr.mxu0 0.0
          %737 = vmatpush1.msra.mxu0 0.0
          %738 = vmatprep.mubr.f32.mxu0 0.0
          %739 = vmatmul.mubr.f32.gmra.mrb[0].mxu0 %v505
          %v740 = vpop.f32.mrb[0].mxu0
          %v741 = vadd.f32 0.0, %v740
          %v742 = vpop.f32.mrb[0].mxu0
          %743 = vmatprep.mubr.f32.mxu0 0.0
          %744 = vmatmul.mubr.f32.gmra.mrb[0].mxu0 %v508
          %v745 = vpop.f32.mrb[0].mxu0
          %v746 = vadd.f32 0.0, %v745
          %v747 = vpop.f32.mrb[0].mxu0
          %748 = vdwg.mxu0
          %s749 = scalar_lea.vmem [#allocation2], 16
          %750 = vst.msk [vmem:[%s749] sm:$0xff] %vm585, %v741
          %751 = vst.msk [vmem:[%s749 + $0x8] sm:$0xff] %vm585, %v746
          %s752 = scalar_lea.vmem %s3, 32
          %v753 = vld [vmem:[%s752] sm:$0xff]
          %v754 = vld [vmem:[%s752 + $0x8] sm:$0xff]
          %v755 = vld [vmem:[%s752 + $0x10] sm:$0xff]
          %v756 = vld [vmem:[%s752 + $0x18] sm:$0xff]
          %757 = vmatprep.subr.mxu0 0.0
          %758 = vmatpush1.msra.mxu0 %v753
          %759 = vmatprep.subr.mxu0 0.0
          %760 = vmatpush1.msra.mxu0 %v754
          %761 = vmatprep.subr.mxu0 0.0
          %762 = vmatpush1.msra.mxu0 %v755
          %763 = vmatprep.subr.mxu0 0.0
          %764 = vmatpush1.msra.mxu0 %v756
          %765 = vmatprep.subr.mxu0 0.0
          %766 = vmatpush1.msra.mxu0 0.0
          %767 = vmatprep.subr.mxu0 0.0
          %768 = vmatpush1.msra.mxu0 0.0
          %769 = vmatprep.subr.mxu0 0.0
          %770 = vmatpush1.msra.mxu0 0.0
          %771 = vmatprep.subr.mxu0 0.0
          %772 = vmatpush1.msra.mxu0 0.0
          %773 = vmatprep.subr.mxu0 0.0
          %774 = vmatpush1.msra.mxu0 0.0
          %775 = vmatprep.subr.mxu0 0.0
          %776 = vmatpush1.msra.mxu0 0.0
          %777 = vmatprep.subr.mxu0 0.0
          %778 = vmatpush1.msra.mxu0 0.0
          %779 = vmatprep.subr.mxu0 0.0
          %780 = vmatpush1.msra.mxu0 0.0
          %781 = vmatprep.subr.mxu0 0.0
          %782 = vmatpush1.msra.mxu0 0.0
          %783 = vmatprep.subr.mxu0 0.0
          %784 = vmatpush1.msra.mxu0 0.0
          %785 = vmatprep.subr.mxu0 0.0
          %786 = vmatpush1.msra.mxu0 0.0
          %787 = vmatprep.subr.mxu0 0.0
          %788 = vmatpush1.msra.mxu0 0.0
          %789 = vmatprep.subr.mxu0 0.0
          %790 = vmatpush1.msra.mxu0 0.0
          %791 = vmatprep.subr.mxu0 0.0
          %792 = vmatpush1.msra.mxu0 0.0
          %793 = vmatprep.subr.mxu0 0.0
          %794 = vmatpush1.msra.mxu0 0.0
          %795 = vmatprep.subr.mxu0 0.0
          %796 = vmatpush1.msra.mxu0 0.0
          %797 = vmatprep.subr.mxu0 0.0
          %798 = vmatpush1.msra.mxu0 0.0
          %799 = vmatprep.subr.mxu0 0.0
          %800 = vmatpush1.msra.mxu0 0.0
          %801 = vmatprep.subr.mxu0 0.0
          %802 = vmatpush1.msra.mxu0 0.0
          %803 = vmatprep.subr.mxu0 0.0
          %804 = vmatpush1.msra.mxu0 0.0
          %805 = vmatprep.subr.mxu0 0.0
          %806 = vmatpush1.msra.mxu0 0.0
          %807 = vmatprep.subr.mxu0 0.0
          %808 = vmatpush1.msra.mxu0 0.0
          %809 = vmatprep.subr.mxu0 0.0
          %810 = vmatpush1.msra.mxu0 0.0
          %811 = vmatprep.subr.mxu0 0.0
          %812 = vmatpush1.msra.mxu0 0.0
          %813 = vmatprep.subr.mxu0 0.0
          %814 = vmatpush1.msra.mxu0 0.0
          %815 = vmatprep.subr.mxu0 0.0
          %816 = vmatpush1.msra.mxu0 0.0
          %817 = vmatprep.subr.mxu0 0.0
          %818 = vmatpush1.msra.mxu0 0.0
          %819 = vmatprep.subr.mxu0 0.0
          %820 = vmatpush1.msra.mxu0 0.0
          %821 = vmatprep.mubr.f32.mxu0 0.0
          %822 = vmatmul.mubr.f32.gmra.mrb[0].mxu0 %v505
          %v823 = vpop.f32.mrb[0].mxu0
          %v824 = vadd.f32 0.0, %v823
          %v825 = vpop.f32.mrb[0].mxu0
          %826 = vmatprep.mubr.f32.mxu0 0.0
          %827 = vmatmul.mubr.f32.gmra.mrb[0].mxu0 %v508
          %v828 = vpop.f32.mrb[0].mxu0
          %v829 = vadd.f32 0.0, %v828
          %v830 = vpop.f32.mrb[0].mxu0
          %831 = vdwg.mxu0
          %s832 = scalar_lea.vmem [#allocation3], 16
          %833 = vst.msk [vmem:[%s832] sm:$0xff] %vm585, %v824
          %834 = vst.msk [vmem:[%s832 + $0x8] sm:$0xff] %vm585, %v829
          %s835 = scalar_lea.vmem %s2, 64
          %v836 = vld [vmem:[%s835] sm:$0xff]
          %v837 = vld [vmem:[%s835 + $0x8] sm:$0xff]
          %v838 = vld [vmem:[%s835 + $0x10] sm:$0xff]
          %v839 = vld [vmem:[%s835 + $0x18] sm:$0xff]
          %840 = vmatprep.subr.mxu0 0.0
          %841 = vmatpush1.msra.mxu0 %v836
          %842 = vmatprep.subr.mxu0 0.0
          %843 = vmatpush1.msra.mxu0 %v837
          %844 = vmatprep.subr.mxu0 0.0
          %845 = vmatpush1.msra.mxu0 %v838
          %846 = vmatprep.subr.mxu0 0.0
          %847 = vmatpush1.msra.mxu0 %v839
          %848 = vmatprep.subr.mxu0 0.0
          %849 = vmatpush1.msra.mxu0 0.0
          %850 = vmatprep.subr.mxu0 0.0
          %851 = vmatpush1.msra.mxu0 0.0
          %852 = vmatprep.subr.mxu0 0.0
          %853 = vmatpush1.msra.mxu0 0.0
          %854 = vmatprep.subr.mxu0 0.0
          %855 = vmatpush1.msra.mxu0 0.0
          %856 = vmatprep.subr.mxu0 0.0
          %857 = vmatpush1.msra.mxu0 0.0
          %858 = vmatprep.subr.mxu0 0.0
          %859 = vmatpush1.msra.mxu0 0.0
          %860 = vmatprep.subr.mxu0 0.0
          %861 = vmatpush1.msra.mxu0 0.0
          %862 = vmatprep.subr.mxu0 0.0
          %863 = vmatpush1.msra.mxu0 0.0
          %864 = vmatprep.subr.mxu0 0.0
          %865 = vmatpush1.msra.mxu0 0.0
          %866 = vmatprep.subr.mxu0 0.0
          %867 = vmatpush1.msra.mxu0 0.0
          %868 = vmatprep.subr.mxu0 0.0
          %869 = vmatpush1.msra.mxu0 0.0
          %870 = vmatprep.subr.mxu0 0.0
          %871 = vmatpush1.msra.mxu0 0.0
          %872 = vmatprep.subr.mxu0 0.0
          %873 = vmatpush1.msra.mxu0 0.0
          %874 = vmatprep.subr.mxu0 0.0
          %875 = vmatpush1.msra.mxu0 0.0
          %876 = vmatprep.subr.mxu0 0.0
          %877 = vmatpush1.msra.mxu0 0.0
          %878 = vmatprep.subr.mxu0 0.0
          %879 = vmatpush1.msra.mxu0 0.0
          %880 = vmatprep.subr.mxu0 0.0
          %881 = vmatpush1.msra.mxu0 0.0
          %882 = vmatprep.subr.mxu0 0.0
          %883 = vmatpush1.msra.mxu0 0.0
          %884 = vmatprep.subr.mxu0 0.0
          %885 = vmatpush1.msra.mxu0 0.0
          %886 = vmatprep.subr.mxu0 0.0
          %887 = vmatpush1.msra.mxu0 0.0
          %888 = vmatprep.subr.mxu0 0.0
          %889 = vmatpush1.msra.mxu0 0.0
          %890 = vmatprep.subr.mxu0 0.0
          %891 = vmatpush1.msra.mxu0 0.0
          %892 = vmatprep.subr.mxu0 0.0
          %893 = vmatpush1.msra.mxu0 0.0
          %894 = vmatprep.subr.mxu0 0.0
          %895 = vmatpush1.msra.mxu0 0.0
          %896 = vmatprep.subr.mxu0 0.0
          %897 = vmatpush1.msra.mxu0 0.0
          %898 = vmatprep.subr.mxu0 0.0
          %899 = vmatpush1.msra.mxu0 0.0
          %900 = vmatprep.subr.mxu0 0.0
          %901 = vmatpush1.msra.mxu0 0.0
          %902 = vmatprep.subr.mxu0 0.0
          %903 = vmatpush1.msra.mxu0 0.0
          %904 = vmatprep.mubr.f32.mxu0 0.0
          %905 = vmatmul.mubr.f32.gmra.mrb[0].mxu0 %v505
          %v906 = vpop.f32.mrb[0].mxu0
          %v907 = vadd.f32 0.0, %v906
          %v908 = vpop.f32.mrb[0].mxu0
          %909 = vmatprep.mubr.f32.mxu0 0.0
          %910 = vmatmul.mubr.f32.gmra.mrb[0].mxu0 %v508
          %v911 = vpop.f32.mrb[0].mxu0
          %v912 = vadd.f32 0.0, %v911
          %v913 = vpop.f32.mrb[0].mxu0
          %914 = vdwg.mxu0
          %s915 = scalar_lea.vmem [#allocation2], 32
          %916 = vst.msk [vmem:[%s915] sm:$0xff] %vm585, %v907
          %917 = vst.msk [vmem:[%s915 + $0x8] sm:$0xff] %vm585, %v912
          %s918 = scalar_lea.vmem %s3, 64
          %v919 = vld [vmem:[%s918] sm:$0xff]
          %v920 = vld [vmem:[%s918 + $0x8] sm:$0xff]
          %v921 = vld [vmem:[%s918 + $0x10] sm:$0xff]
          %v922 = vld [vmem:[%s918 + $0x18] sm:$0xff]
          %923 = vmatprep.subr.mxu0 0.0
          %924 = vmatpush1.msra.mxu0 %v919
          %925 = vmatprep.subr.mxu0 0.0
          %926 = vmatpush1.msra.mxu0 %v920
          %927 = vmatprep.subr.mxu0 0.0
          %928 = vmatpush1.msra.mxu0 %v921
          %929 = vmatprep.subr.mxu0 0.0
          %930 = vmatpush1.msra.mxu0 %v922
          %931 = vmatprep.subr.mxu0 0.0
          %932 = vmatpush1.msra.mxu0 0.0
          %933 = vmatprep.subr.mxu0 0.0
          %934 = vmatpush1.msra.mxu0 0.0
          %935 = vmatprep.subr.mxu0 0.0
          %936 = vmatpush1.msra.mxu0 0.0
          %937 = vmatprep.subr.mxu0 0.0
          %938 = vmatpush1.msra.mxu0 0.0
          %939 = vmatprep.subr.mxu0 0.0
          %940 = vmatpush1.msra.mxu0 0.0
          %941 = vmatprep.subr.mxu0 0.0
          %942 = vmatpush1.msra.mxu0 0.0
          %943 = vmatprep.subr.mxu0 0.0
          %944 = vmatpush1.msra.mxu0 0.0
          %945 = vmatprep.subr.mxu0 0.0
          %946 = vmatpush1.msra.mxu0 0.0
          %947 = vmatprep.subr.mxu0 0.0
          %948 = vmatpush1.msra.mxu0 0.0
          %949 = vmatprep.subr.mxu0 0.0
          %950 = vmatpush1.msra.mxu0 0.0
          %951 = vmatprep.subr.mxu0 0.0
          %952 = vmatpush1.msra.mxu0 0.0
          %953 = vmatprep.subr.mxu0 0.0
          %954 = vmatpush1.msra.mxu0 0.0
          %955 = vmatprep.subr.mxu0 0.0
          %956 = vmatpush1.msra.mxu0 0.0
          %957 = vmatprep.subr.mxu0 0.0
          %958 = vmatpush1.msra.mxu0 0.0
          %959 = vmatprep.subr.mxu0 0.0
          %960 = vmatpush1.msra.mxu0 0.0
          %961 = vmatprep.subr.mxu0 0.0
          %962 = vmatpush1.msra.mxu0 0.0
          %963 = vmatprep.subr.mxu0 0.0
          %964 = vmatpush1.msra.mxu0 0.0
          %965 = vmatprep.subr.mxu0 0.0
          %966 = vmatpush1.msra.mxu0 0.0
          %967 = vmatprep.subr.mxu0 0.0
          %968 = vmatpush1.msra.mxu0 0.0
          %969 = vmatprep.subr.mxu0 0.0
          %970 = vmatpush1.msra.mxu0 0.0
          %971 = vmatprep.subr.mxu0 0.0
          %972 = vmatpush1.msra.mxu0 0.0
          %973 = vmatprep.subr.mxu0 0.0
          %974 = vmatpush1.msra.mxu0 0.0
          %975 = vmatprep.subr.mxu0 0.0
          %976 = vmatpush1.msra.mxu0 0.0
          %977 = vmatprep.subr.mxu0 0.0
          %978 = vmatpush1.msra.mxu0 0.0
          %979 = vmatprep.subr.mxu0 0.0
          %980 = vmatpush1.msra.mxu0 0.0
          %981 = vmatprep.subr.mxu0 0.0
          %982 = vmatpush1.msra.mxu0 0.0
          %983 = vmatprep.subr.mxu0 0.0
          %984 = vmatpush1.msra.mxu0 0.0
          %985 = vmatprep.subr.mxu0 0.0
          %986 = vmatpush1.msra.mxu0 0.0
          %987 = vmatprep.mubr.f32.mxu0 0.0
          %988 = vmatmul.mubr.f32.gmra.mrb[0].mxu0 %v505
          %v989 = vpop.f32.mrb[0].mxu0
          %v990 = vadd.f32 0.0, %v989
          %v991 = vpop.f32.mrb[0].mxu0
          %992 = vmatprep.mubr.f32.mxu0 0.0
          %993 = vmatmul.mubr.f32.gmra.mrb[0].mxu0 %v508
          %v994 = vpop.f32.mrb[0].mxu0
          %v995 = vadd.f32 0.0, %v994
          %v996 = vpop.f32.mrb[0].mxu0
          %997 = vdwg.mxu0
          %s998 = scalar_lea.vmem [#allocation3], 32
          %999 = vst.msk [vmem:[%s998] sm:$0xff] %vm585, %v990
          %1000 = vst.msk [vmem:[%s998 + $0x8] sm:$0xff] %vm585, %v995
          %s1001 = scalar_lea.vmem %s2, 96
          %v1002 = vld [vmem:[%s1001] sm:$0xff]
          %v1003 = vld [vmem:[%s1001 + $0x8] sm:$0xff]
          %v1004 = vld [vmem:[%s1001 + $0x10] sm:$0xff]
          %v1005 = vld [vmem:[%s1001 + $0x18] sm:$0xff]
          %1006 = vmatprep.subr.mxu0 0.0
          %1007 = vmatpush1.msra.mxu0 %v1002
          %1008 = vmatprep.subr.mxu0 0.0
          %1009 = vmatpush1.msra.mxu0 %v1003
          %1010 = vmatprep.subr.mxu0 0.0
          %1011 = vmatpush1.msra.mxu0 %v1004
          %1012 = vmatprep.subr.mxu0 0.0
          %1013 = vmatpush1.msra.mxu0 %v1005
          %1014 = vmatprep.subr.mxu0 0.0
          %1015 = vmatpush1.msra.mxu0 0.0
          %1016 = vmatprep.subr.mxu0 0.0
          %1017 = vmatpush1.msra.mxu0 0.0
          %1018 = vmatprep.subr.mxu0 0.0
          %1019 = vmatpush1.msra.mxu0 0.0
          %1020 = vmatprep.subr.mxu0 0.0
          %1021 = vmatpush1.msra.mxu0 0.0
          %1022 = vmatprep.subr.mxu0 0.0
          %1023 = vmatpush1.msra.mxu0 0.0
          %1024 = vmatprep.subr.mxu0 0.0
          %1025 = vmatpush1.msra.mxu0 0.0
          %1026 = vmatprep.subr.mxu0 0.0
          %1027 = vmatpush1.msra.mxu0 0.0
          %1028 = vmatprep.subr.mxu0 0.0
          %1029 = vmatpush1.msra.mxu0 0.0
          %1030 = vmatprep.subr.mxu0 0.0
          %1031 = vmatpush1.msra.mxu0 0.0
          %1032 = vmatprep.subr.mxu0 0.0
          %1033 = vmatpush1.msra.mxu0 0.0
          %1034 = vmatprep.subr.mxu0 0.0
          %1035 = vmatpush1.msra.mxu0 0.0
          %1036 = vmatprep.subr.mxu0 0.0
          %1037 = vmatpush1.msra.mxu0 0.0
          %1038 = vmatprep.subr.mxu0 0.0
          %1039 = vmatpush1.msra.mxu0 0.0
          %1040 = vmatprep.subr.mxu0 0.0
          %1041 = vmatpush1.msra.mxu0 0.0
          %1042 = vmatprep.subr.mxu0 0.0
          %1043 = vmatpush1.msra.mxu0 0.0
          %1044 = vmatprep.subr.mxu0 0.0
          %1045 = vmatpush1.msra.mxu0 0.0
          %1046 = vmatprep.subr.mxu0 0.0
          %1047 = vmatpush1.msra.mxu0 0.0
          %1048 = vmatprep.subr.mxu0 0.0
          %1049 = vmatpush1.msra.mxu0 0.0
          %1050 = vmatprep.subr.mxu0 0.0
          %1051 = vmatpush1.msra.mxu0 0.0
          %1052 = vmatprep.subr.mxu0 0.0
          %1053 = vmatpush1.msra.mxu0 0.0
          %1054 = vmatprep.subr.mxu0 0.0
          %1055 = vmatpush1.msra.mxu0 0.0
          %1056 = vmatprep.subr.mxu0 0.0
          %1057 = vmatpush1.msra.mxu0 0.0
          %1058 = vmatprep.subr.mxu0 0.0
          %1059 = vmatpush1.msra.mxu0 0.0
          %1060 = vmatprep.subr.mxu0 0.0
          %1061 = vmatpush1.msra.mxu0 0.0
          %1062 = vmatprep.subr.mxu0 0.0
          %1063 = vmatpush1.msra.mxu0 0.0
          %1064 = vmatprep.subr.mxu0 0.0
          %1065 = vmatpush1.msra.mxu0 0.0
          %1066 = vmatprep.subr.mxu0 0.0
          %1067 = vmatpush1.msra.mxu0 0.0
          %1068 = vmatprep.subr.mxu0 0.0
          %1069 = vmatpush1.msra.mxu0 0.0
          %1070 = vmatprep.mubr.f32.mxu0 0.0
          %1071 = vmatmul.mubr.f32.gmra.mrb[0].mxu0 %v505
          %v1072 = vpop.f32.mrb[0].mxu0
          %v1073 = vadd.f32 0.0, %v1072
          %v1074 = vpop.f32.mrb[0].mxu0
          %1075 = vmatprep.mubr.f32.mxu0 0.0
          %1076 = vmatmul.mubr.f32.gmra.mrb[0].mxu0 %v508
          %v1077 = vpop.f32.mrb[0].mxu0
          %v1078 = vadd.f32 0.0, %v1077
          %v1079 = vpop.f32.mrb[0].mxu0
          %1080 = vdwg.mxu0
          %s1081 = scalar_lea.vmem [#allocation2], 48
          %1082 = vst.msk [vmem:[%s1081] sm:$0xff] %vm585, %v1073
          %1083 = vst.msk [vmem:[%s1081 + $0x8] sm:$0xff] %vm585, %v1078
          %s1084 = scalar_lea.vmem %s3, 96
          %v1085 = vld [vmem:[%s1084] sm:$0xff]
          %v1086 = vld [vmem:[%s1084 + $0x8] sm:$0xff]
          %v1087 = vld [vmem:[%s1084 + $0x10] sm:$0xff]
          %v1088 = vld [vmem:[%s1084 + $0x18] sm:$0xff]
          %1089 = vmatprep.subr.mxu0 0.0
          %1090 = vmatpush1.msra.mxu0 %v1085
          %1091 = vmatprep.subr.mxu0 0.0
          %1092 = vmatpush1.msra.mxu0 %v1086
          %1093 = vmatprep.subr.mxu0 0.0
          %1094 = vmatpush1.msra.mxu0 %v1087
          %1095 = vmatprep.subr.mxu0 0.0
          %1096 = vmatpush1.msra.mxu0 %v1088
          %1097 = vmatprep.subr.mxu0 0.0
          %1098 = vmatpush1.msra.mxu0 0.0
          %1099 = vmatprep.subr.mxu0 0.0
          %1100 = vmatpush1.msra.mxu0 0.0
          %1101 = vmatprep.subr.mxu0 0.0
          %1102 = vmatpush1.msra.mxu0 0.0
          %1103 = vmatprep.subr.mxu0 0.0
          %1104 = vmatpush1.msra.mxu0 0.0
          %1105 = vmatprep.subr.mxu0 0.0
          %1106 = vmatpush1.msra.mxu0 0.0
          %1107 = vmatprep.subr.mxu0 0.0
          %1108 = vmatpush1.msra.mxu0 0.0
          %1109 = vmatprep.subr.mxu0 0.0
          %1110 = vmatpush1.msra.mxu0 0.0
          %1111 = vmatprep.subr.mxu0 0.0
          %1112 = vmatpush1.msra.mxu0 0.0
          %1113 = vmatprep.subr.mxu0 0.0
          %1114 = vmatpush1.msra.mxu0 0.0
          %1115 = vmatprep.subr.mxu0 0.0
          %1116 = vmatpush1.msra.mxu0 0.0
          %1117 = vmatprep.subr.mxu0 0.0
          %1118 = vmatpush1.msra.mxu0 0.0
          %1119 = vmatprep.subr.mxu0 0.0
          %1120 = vmatpush1.msra.mxu0 0.0
          %1121 = vmatprep.subr.mxu0 0.0
          %1122 = vmatpush1.msra.mxu0 0.0
          %1123 = vmatprep.subr.mxu0 0.0
          %1124 = vmatpush1.msra.mxu0 0.0
          %1125 = vmatprep.subr.mxu0 0.0
          %1126 = vmatpush1.msra.mxu0 0.0
          %1127 = vmatprep.subr.mxu0 0.0
          %1128 = vmatpush1.msra.mxu0 0.0
          %1129 = vmatprep.subr.mxu0 0.0
          %1130 = vmatpush1.msra.mxu0 0.0
          %1131 = vmatprep.subr.mxu0 0.0
          %1132 = vmatpush1.msra.mxu0 0.0
          %1133 = vmatprep.subr.mxu0 0.0
          %1134 = vmatpush1.msra.mxu0 0.0
          %1135 = vmatprep.subr.mxu0 0.0
          %1136 = vmatpush1.msra.mxu0 0.0
          %1137 = vmatprep.subr.mxu0 0.0
          %1138 = vmatpush1.msra.mxu0 0.0
          %1139 = vmatprep.subr.mxu0 0.0
          %1140 = vmatpush1.msra.mxu0 0.0
          %1141 = vmatprep.subr.mxu0 0.0
          %1142 = vmatpush1.msra.mxu0 0.0
          %1143 = vmatprep.subr.mxu0 0.0
          %1144 = vmatpush1.msra.mxu0 0.0
          %1145 = vmatprep.subr.mxu0 0.0
          %1146 = vmatpush1.msra.mxu0 0.0
          %1147 = vmatprep.subr.mxu0 0.0
          %1148 = vmatpush1.msra.mxu0 0.0
          %1149 = vmatprep.subr.mxu0 0.0
          %1150 = vmatpush1.msra.mxu0 0.0
          %1151 = vmatprep.subr.mxu0 0.0
          %1152 = vmatpush1.msra.mxu0 0.0
          %1153 = vmatprep.mubr.f32.mxu0 0.0
          %1154 = vmatmul.mubr.f32.gmra.mrb[0].mxu0 %v505
          %v1155 = vpop.f32.mrb[0].mxu0
          %v1156 = vadd.f32 0.0, %v1155
          %v1157 = vpop.f32.mrb[0].mxu0
          %1158 = vmatprep.mubr.f32.mxu0 0.0
          %1159 = vmatmul.mubr.f32.gmra.mrb[0].mxu0 %v508
          %v1160 = vpop.f32.mrb[0].mxu0
          %v1161 = vadd.f32 0.0, %v1160
          %v1162 = vpop.f32.mrb[0].mxu0
          %1163 = vdwg.mxu0
          %s1164 = scalar_lea.vmem [#allocation3], 48
          %1165 = vst.msk [vmem:[%s1164] sm:$0xff] %vm585, %v1156
          %1166 = vst.msk [vmem:[%s1164 + $0x8] sm:$0xff] %vm585, %v1161
        $region76: #{tpu_custom_call.1} parent=71 // pred_fallthru
          _
        %s1167 = smul.u32 %s37, 8
        %s1168 = scalar_lea.vmem %s492, %s1167
        %v1169 = vld [vmem:[%s1168] sm:$0xff]
        %v1170 = vld [vmem:[%s1] sm:$0xff]
        %v1171 = vld [vmem:[%s1 + $0x8] sm:$0xff]
        %v1172 = vld [vmem:[%s1 + $0x10] sm:$0xff]
        %v1173 = vld [vmem:[%s1 + $0x18] sm:$0xff]
        %vm1174 = vcmask 261120
        %v1176 = vsel %vm1174, %v1169, 0
        %1178 = vmatprep.subr.mxu0 0.0
        %1179 = vmatpush1.msra.mxu0 %v1170
        %1180 = vmatprep.subr.mxu0 0.0
        %1181 = vmatpush1.msra.mxu0 %v1171
        %1182 = vmatprep.subr.mxu0 0.0
        %1183 = vmatpush1.msra.mxu0 %v1172
        %1184 = vmatprep.subr.mxu0 0.0
        %1185 = vmatpush1.msra.mxu0 %v1173
        %1186 = vmatprep.subr.mxu0 0.0
        %1187 = vmatpush1.msra.mxu0 0.0
        %1188 = vmatprep.subr.mxu0 0.0
        %1189 = vmatpush1.msra.mxu0 0.0
        %1190 = vmatprep.subr.mxu0 0.0
        %1191 = vmatpush1.msra.mxu0 0.0
        %1192 = vmatprep.subr.mxu0 0.0
        %1193 = vmatpush1.msra.mxu0 0.0
        %1194 = vmatprep.subr.mxu0 0.0
        %1195 = vmatpush1.msra.mxu0 0.0
        %1196 = vmatprep.subr.mxu0 0.0
        %1197 = vmatpush1.msra.mxu0 0.0
        %1198 = vmatprep.subr.mxu0 0.0
        %1199 = vmatpush1.msra.mxu0 0.0
        %1200 = vmatprep.subr.mxu0 0.0
        %1201 = vmatpush1.msra.mxu0 0.0
        %1202 = vmatprep.subr.mxu0 0.0
        %1203 = vmatpush1.msra.mxu0 0.0
        %1204 = vmatprep.subr.mxu0 0.0
        %1205 = vmatpush1.msra.mxu0 0.0
        %1206 = vmatprep.subr.mxu0 0.0
        %1207 = vmatpush1.msra.mxu0 0.0
        %1208 = vmatprep.subr.mxu0 0.0
        %1209 = vmatpush1.msra.mxu0 0.0
        %1210 = vmatprep.subr.mxu0 0.0
        %1211 = vmatpush1.msra.mxu0 0.0
        %1212 = vmatprep.subr.mxu0 0.0
        %1213 = vmatpush1.msra.mxu0 0.0
        %1214 = vmatprep.subr.mxu0 0.0
        %1215 = vmatpush1.msra.mxu0 0.0
        %1216 = vmatprep.subr.mxu0 0.0
        %1217 = vmatpush1.msra.mxu0 0.0
        %1218 = vmatprep.subr.mxu0 0.0
        %1219 = vmatpush1.msra.mxu0 0.0
        %1220 = vmatprep.subr.mxu0 0.0
        %1221 = vmatpush1.msra.mxu0 0.0
        %1222 = vmatprep.subr.mxu0 0.0
        %1223 = vmatpush1.msra.mxu0 0.0
        %1224 = vmatprep.subr.mxu0 0.0
        %1225 = vmatpush1.msra.mxu0 0.0
        %1226 = vmatprep.subr.mxu0 0.0
        %1227 = vmatpush1.msra.mxu0 0.0
        %1228 = vmatprep.subr.mxu0 0.0
        %1229 = vmatpush1.msra.mxu0 0.0
        %1230 = vmatprep.subr.mxu0 0.0
        %1231 = vmatpush1.msra.mxu0 0.0
        %1232 = vmatprep.subr.mxu0 0.0
        %1233 = vmatpush1.msra.mxu0 0.0
        %1234 = vmatprep.subr.mxu0 0.0
        %1235 = vmatpush1.msra.mxu0 0.0
        %1236 = vmatprep.subr.mxu0 0.0
        %1237 = vmatpush1.msra.mxu0 0.0
        %1238 = vmatprep.subr.mxu0 0.0
        %1239 = vmatpush1.msra.mxu0 0.0
        %1240 = vmatprep.subr.mxu0 0.0
        %1241 = vmatpush1.msra.mxu0 0.0
        %1242 = vmatprep.mubr.f32.mxu0 0.0
        %1243 = vmatmul.mubr.f32.gmra.mrb[0].mxu0 %v1176
        %v1244 = vpop.f32.mrb[0].mxu0
        %v1245 = vadd.f32 0.0, %v1244
        %v1246 = vpop.f32.mrb[0].mxu0
        %1247 = vdwg.mxu0
        %v1248 = vmul.f32 %v1245, 0.35355338
        %v1249 = vld [vmem:[#allocation2] sm:$0xff]
        %v1250 = vld [vmem:[#allocation2 + $0x8] sm:$0xff]
        %vm1251 = vcmask 64512
        %v1253 = vsel %vm1251, %v1248, 0
        %v1256 = vsel %vm1251, %v1249, 0
        %v1259 = vsel %vm1251, %v1250, 0
        %1261 = vmatprep.subr.mxu0 0.0
        %1262 = vmatpush1.xpose.msra.mxu0 %v1256
        %1263 = vmatprep.subr.mxu0 0.0
        %1264 = vmatpush1.xpose.msra.mxu0 %v1259
        %1265 = vmatprep.subr.mxu0 0.0
        %1266 = vmatpush1.xpose.msra.mxu0 0.0
        %1267 = vmatprep.subr.mxu0 0.0
        %1268 = vmatpush1.xpose.msra.mxu0 0.0
        %1269 = vmatprep.subr.mxu0 0.0
        %1270 = vmatpush1.xpose.msra.mxu0 0.0
        %1271 = vmatprep.subr.mxu0 0.0
        %1272 = vmatpush1.xpose.msra.mxu0 0.0
        %1273 = vmatprep.subr.mxu0 0.0
        %1274 = vmatpush1.xpose.msra.mxu0 0.0
        %1275 = vmatprep.subr.mxu0 0.0
        %1276 = vmatpush1.xpose.msra.mxu0 0.0
        %1277 = vmatprep.subr.mxu0 0.0
        %1278 = vmatpush1.xpose.msra.mxu0 0.0
        %1279 = vmatprep.subr.mxu0 0.0
        %1280 = vmatpush1.xpose.msra.mxu0 0.0
        %1281 = vmatprep.subr.mxu0 0.0
        %1282 = vmatpush1.xpose.msra.mxu0 0.0
        %1283 = vmatprep.subr.mxu0 0.0
        %1284 = vmatpush1.xpose.msra.mxu0 0.0
        %1285 = vmatprep.subr.mxu0 0.0
        %1286 = vmatpush1.xpose.msra.mxu0 0.0
        %1287 = vmatprep.subr.mxu0 0.0
        %1288 = vmatpush1.xpose.msra.mxu0 0.0
        %1289 = vmatprep.subr.mxu0 0.0
        %1290 = vmatpush1.xpose.msra.mxu0 0.0
        %1291 = vmatprep.subr.mxu0 0.0
        %1292 = vmatpush1.xpose.msra.mxu0 0.0
        %1293 = vmatprep.subr.mxu0 0.0
        %1294 = vmatpush1.xpose.msra.mxu0 0.0
        %1295 = vmatprep.subr.mxu0 0.0
        %1296 = vmatpush1.xpose.msra.mxu0 0.0
        %1297 = vmatprep.subr.mxu0 0.0
        %1298 = vmatpush1.xpose.msra.mxu0 0.0
        %1299 = vmatprep.subr.mxu0 0.0
        %1300 = vmatpush1.xpose.msra.mxu0 0.0
        %1301 = vmatprep.subr.mxu0 0.0
        %1302 = vmatpush1.xpose.msra.mxu0 0.0
        %1303 = vmatprep.subr.mxu0 0.0
        %1304 = vmatpush1.xpose.msra.mxu0 0.0
        %1305 = vmatprep.subr.mxu0 0.0
        %1306 = vmatpush1.xpose.msra.mxu0 0.0
        %1307 = vmatprep.subr.mxu0 0.0
        %1308 = vmatpush1.xpose.msra.mxu0 0.0
        %1309 = vmatprep.subr.mxu0 0.0
        %1310 = vmatpush1.xpose.msra.mxu0 0.0
        %1311 = vmatprep.subr.mxu0 0.0
        %1312 = vmatpush1.xpose.msra.mxu0 0.0
        %1313 = vmatprep.subr.mxu0 0.0
        %1314 = vmatpush1.xpose.msra.mxu0 0.0
        %1315 = vmatprep.subr.mxu0 0.0
        %1316 = vmatpush1.xpose.msra.mxu0 0.0
        %1317 = vmatprep.subr.mxu0 0.0
        %1318 = vmatpush1.xpose.msra.mxu0 0.0
        %1319 = vmatprep.subr.mxu0 0.0
        %1320 = vmatpush1.xpose.msra.mxu0 0.0
        %1321 = vmatprep.subr.mxu0 0.0
        %1322 = vmatpush1.xpose.msra.mxu0 0.0
        %1323 = vmatprep.subr.mxu0 0.0
        %1324 = vmatpush1.xpose.msra.mxu0 0.0
        %1325 = vmatprep.mubr.f32.mxu0 0.0
        %1326 = vmatmul.mubr.f32.gmra.mrb[0].mxu0 %v1253
        %v1327 = vpop.f32.mrb[0].mxu0
        %v1328 = vadd.f32 0.0, %v1327
        %v1329 = vpop.f32.mrb[0].mxu0
        %1330 = vdwg.mxu0
        %vm1331 = vcmask 130048
        %v1332 = vsel %vm1331, %v1328, -inf
        %1333 = vmax.xlane.f32.xlu0 %v1332
        %v1334 = vpop.xlane.xlu0 %1333
        %v1335 = vsub.f32 %v1328, %v1334
        %v1336 = vmul.f32 %v1335, 1.442695
        %v1337 = vpow.pop %v1336
        %v1338 = vsel %vm1331, %v1337, 0.0
        %1339 = vadd.xlane.f32.xlu0 %v1338
        %v1340 = vpop.xlane.xlu0 %1339
        %v1341 = vld [vmem:[#allocation3] sm:$0xff]
        %v1342 = vld [vmem:[#allocation3 + $0x8] sm:$0xff]
        %v1344 = vsel %vm1331, %v1337, 0
        %1346 = vmatprep.subr.mxu0 0.0
        %1347 = vmatpush1.msra.mxu0 %v1341
        %1348 = vmatprep.subr.mxu0 0.0
        %1349 = vmatpush1.msra.mxu0 %v1342
        %1350 = vmatprep.subr.mxu0 0.0
        %1351 = vmatpush1.msra.mxu0 0.0
        %1352 = vmatprep.subr.mxu0 0.0
        %1353 = vmatpush1.msra.mxu0 0.0
        %1354 = vmatprep.subr.mxu0 0.0
        %1355 = vmatpush1.msra.mxu0 0.0
        %1356 = vmatprep.subr.mxu0 0.0
        %1357 = vmatpush1.msra.mxu0 0.0
        %1358 = vmatprep.subr.mxu0 0.0
        %1359 = vmatpush1.msra.mxu0 0.0
        %1360 = vmatprep.subr.mxu0 0.0
        %1361 = vmatpush1.msra.mxu0 0.0
        %1362 = vmatprep.subr.mxu0 0.0
        %1363 = vmatpush1.msra.mxu0 0.0
        %1364 = vmatprep.subr.mxu0 0.0
        %1365 = vmatpush1.msra.mxu0 0.0
        %1366 = vmatprep.subr.mxu0 0.0
        %1367 = vmatpush1.msra.mxu0 0.0
        %1368 = vmatprep.subr.mxu0 0.0
        %1369 = vmatpush1.msra.mxu0 0.0
        %1370 = vmatprep.subr.mxu0 0.0
        %1371 = vmatpush1.msra.mxu0 0.0
        %1372 = vmatprep.subr.mxu0 0.0
        %1373 = vmatpush1.msra.mxu0 0.0
        %1374 = vmatprep.subr.mxu0 0.0
        %1375 = vmatpush1.msra.mxu0 0.0
        %1376 = vmatprep.subr.mxu0 0.0
        %1377 = vmatpush1.msra.mxu0 0.0
        %1378 = vmatprep.subr.mxu0 0.0
        %1379 = vmatpush1.msra.mxu0 0.0
        %1380 = vmatprep.subr.mxu0 0.0
        %1381 = vmatpush1.msra.mxu0 0.0
        %1382 = vmatprep.subr.mxu0 0.0
        %1383 = vmatpush1.msra.mxu0 0.0
        %1384 = vmatprep.subr.mxu0 0.0
        %1385 = vmatpush1.msra.mxu0 0.0
        %1386 = vmatprep.subr.mxu0 0.0
        %1387 = vmatpush1.msra.mxu0 0.0
        %1388 = vmatprep.subr.mxu0 0.0
        %1389 = vmatpush1.msra.mxu0 0.0
        %1390 = vmatprep.subr.mxu0 0.0
        %1391 = vmatpush1.msra.mxu0 0.0
        %1392 = vmatprep.subr.mxu0 0.0
        %1393 = vmatpush1.msra.mxu0 0.0
        %1394 = vmatprep.subr.mxu0 0.0
        %1395 = vmatpush1.msra.mxu0 0.0
        %1396 = vmatprep.subr.mxu0 0.0
        %1397 = vmatpush1.msra.mxu0 0.0
        %1398 = vmatprep.subr.mxu0 0.0
        %1399 = vmatpush1.msra.mxu0 0.0
        %1400 = vmatprep.subr.mxu0 0.0
        %1401 = vmatpush1.msra.mxu0 0.0
        %1402 = vmatprep.subr.mxu0 0.0
        %1403 = vmatpush1.msra.mxu0 0.0
        %1404 = vmatprep.subr.mxu0 0.0
        %1405 = vmatpush1.msra.mxu0 0.0
        %1406 = vmatprep.subr.mxu0 0.0
        %1407 = vmatpush1.msra.mxu0 0.0
        %1408 = vmatprep.subr.mxu0 0.0
        %1409 = vmatpush1.msra.mxu0 0.0
        %1410 = vmatprep.mubr.f32.mxu0 0.0
        %1411 = vmatmul.mubr.f32.gmra.mrb[0].mxu0 %v1344
        %v1412 = vpop.f32.mrb[0].mxu0
        %v1413 = vadd.f32 0.0, %v1412
        %v1414 = vpop.f32.mrb[0].mxu0
        %1415 = vdwg.mxu0
        %v1416 = vrcp.pop %v1340
        %v1417 = vmul.f32 %v1413, %v1416
        %v1418 = vrcp.pop %v1340
        %v1419 = vmul.f32 1.0, %v1418
        %v1420 = vmul.f32 %v1337, %v1419
        %v1421 = vpack.c.bf16 %v1420, %v1420
        %vm1422 = vcmask 125952
        %1423 = vst.msk [vmem:[%s487] sm:$0xf] %vm1422, %v1421
        %s1424 = scalar_lea.vmem %s1, 32
        %v1425 = vld [vmem:[%s1424] sm:$0xff]
        %v1426 = vld [vmem:[%s1424 + $0x8] sm:$0xff]
        %v1427 = vld [vmem:[%s1424 + $0x10] sm:$0xff]
        %v1428 = vld [vmem:[%s1424 + $0x18] sm:$0xff]
        %1429 = vmatprep.subr.mxu0 0.0
        %1430 = vmatpush1.msra.mxu0 %v1425
        %1431 = vmatprep.subr.mxu0 0.0
        %1432 = vmatpush1.msra.mxu0 %v1426
        %1433 = vmatprep.subr.mxu0 0.0
        %1434 = vmatpush1.msra.mxu0 %v1427
        %1435 = vmatprep.subr.mxu0 0.0
        %1436 = vmatpush1.msra.mxu0 %v1428
        %1437 = vmatprep.subr.mxu0 0.0
        %1438 = vmatpush1.msra.mxu0 0.0
        %1439 = vmatprep.subr.mxu0 0.0
        %1440 = vmatpush1.msra.mxu0 0.0
        %1441 = vmatprep.subr.mxu0 0.0
        %1442 = vmatpush1.msra.mxu0 0.0
        %1443 = vmatprep.subr.mxu0 0.0
        %1444 = vmatpush1.msra.mxu0 0.0
        %1445 = vmatprep.subr.mxu0 0.0
        %1446 = vmatpush1.msra.mxu0 0.0
        %1447 = vmatprep.subr.mxu0 0.0
        %1448 = vmatpush1.msra.mxu0 0.0
        %1449 = vmatprep.subr.mxu0 0.0
        %1450 = vmatpush1.msra.mxu0 0.0
        %1451 = vmatprep.subr.mxu0 0.0
        %1452 = vmatpush1.msra.mxu0 0.0
        %1453 = vmatprep.subr.mxu0 0.0
        %1454 = vmatpush1.msra.mxu0 0.0
        %1455 = vmatprep.subr.mxu0 0.0
        %1456 = vmatpush1.msra.mxu0 0.0
        %1457 = vmatprep.subr.mxu0 0.0
        %1458 = vmatpush1.msra.mxu0 0.0
        %1459 = vmatprep.subr.mxu0 0.0
        %1460 = vmatpush1.msra.mxu0 0.0
        %1461 = vmatprep.subr.mxu0 0.0
        %1462 = vmatpush1.msra.mxu0 0.0
        %1463 = vmatprep.subr.mxu0 0.0
        %1464 = vmatpush1.msra.mxu0 0.0
        %1465 = vmatprep.subr.mxu0 0.0
        %1466 = vmatpush1.msra.mxu0 0.0
        %1467 = vmatprep.subr.mxu0 0.0
        %1468 = vmatpush1.msra.mxu0 0.0
        %1469 = vmatprep.subr.mxu0 0.0
        %1470 = vmatpush1.msra.mxu0 0.0
        %1471 = vmatprep.subr.mxu0 0.0
        %1472 = vmatpush1.msra.mxu0 0.0
        %1473 = vmatprep.subr.mxu0 0.0
        %1474 = vmatpush1.msra.mxu0 0.0
        %1475 = vmatprep.subr.mxu0 0.0
        %1476 = vmatpush1.msra.mxu0 0.0
        %1477 = vmatprep.subr.mxu0 0.0
        %1478 = vmatpush1.msra.mxu0 0.0
        %1479 = vmatprep.subr.mxu0 0.0
        %1480 = vmatpush1.msra.mxu0 0.0
        %1481 = vmatprep.subr.mxu0 0.0
        %1482 = vmatpush1.msra.mxu0 0.0
        %1483 = vmatprep.subr.mxu0 0.0
        %1484 = vmatpush1.msra.mxu0 0.0
        %1485 = vmatprep.subr.mxu0 0.0
        %1486 = vmatpush1.msra.mxu0 0.0
        %1487 = vmatprep.subr.mxu0 0.0
        %1488 = vmatpush1.msra.mxu0 0.0
        %1489 = vmatprep.subr.mxu0 0.0
        %1490 = vmatpush1.msra.mxu0 0.0
        %1491 = vmatprep.subr.mxu0 0.0
        %1492 = vmatpush1.msra.mxu0 0.0
        %1493 = vmatprep.mubr.f32.mxu0 0.0
        %1494 = vmatmul.mubr.f32.gmra.mrb[0].mxu0 %v1176
        %v1495 = vpop.f32.mrb[0].mxu0
        %v1496 = vadd.f32 0.0, %v1495
        %v1497 = vpop.f32.mrb[0].mxu0
        %1498 = vdwg.mxu0
        %v1499 = vmul.f32 %v1496, 0.35355338
        %s1500 = scalar_lea.vmem [#allocation2], 16
        %v1501 = vld [vmem:[%s1500] sm:$0xff]
        %v1502 = vld [vmem:[%s1500 + $0x8] sm:$0xff]
        %v1504 = vsel %vm1251, %v1499, 0
        %v1507 = vsel %vm1251, %v1501, 0
        %v1510 = vsel %vm1251, %v1502, 0
        %1512 = vmatprep.subr.mxu0 0.0
        %1513 = vmatpush1.xpose.msra.mxu0 %v1507
        %1514 = vmatprep.subr.mxu0 0.0
        %1515 = vmatpush1.xpose.msra.mxu0 %v1510
        %1516 = vmatprep.subr.mxu0 0.0
        %1517 = vmatpush1.xpose.msra.mxu0 0.0
        %1518 = vmatprep.subr.mxu0 0.0
        %1519 = vmatpush1.xpose.msra.mxu0 0.0
        %1520 = vmatprep.subr.mxu0 0.0
        %1521 = vmatpush1.xpose.msra.mxu0 0.0
        %1522 = vmatprep.subr.mxu0 0.0
        %1523 = vmatpush1.xpose.msra.mxu0 0.0
        %1524 = vmatprep.subr.mxu0 0.0
        %1525 = vmatpush1.xpose.msra.mxu0 0.0
        %1526 = vmatprep.subr.mxu0 0.0
        %1527 = vmatpush1.xpose.msra.mxu0 0.0
        %1528 = vmatprep.subr.mxu0 0.0
        %1529 = vmatpush1.xpose.msra.mxu0 0.0
        %1530 = vmatprep.subr.mxu0 0.0
        %1531 = vmatpush1.xpose.msra.mxu0 0.0
        %1532 = vmatprep.subr.mxu0 0.0
        %1533 = vmatpush1.xpose.msra.mxu0 0.0
        %1534 = vmatprep.subr.mxu0 0.0
        %1535 = vmatpush1.xpose.msra.mxu0 0.0
        %1536 = vmatprep.subr.mxu0 0.0
        %1537 = vmatpush1.xpose.msra.mxu0 0.0
        %1538 = vmatprep.subr.mxu0 0.0
        %1539 = vmatpush1.xpose.msra.mxu0 0.0
        %1540 = vmatprep.subr.mxu0 0.0
        %1541 = vmatpush1.xpose.msra.mxu0 0.0
        %1542 = vmatprep.subr.mxu0 0.0
        %1543 = vmatpush1.xpose.msra.mxu0 0.0
        %1544 = vmatprep.subr.mxu0 0.0
        %1545 = vmatpush1.xpose.msra.mxu0 0.0
        %1546 = vmatprep.subr.mxu0 0.0
        %1547 = vmatpush1.xpose.msra.mxu0 0.0
        %1548 = vmatprep.subr.mxu0 0.0
        %1549 = vmatpush1.xpose.msra.mxu0 0.0
        %1550 = vmatprep.subr.mxu0 0.0
        %1551 = vmatpush1.xpose.msra.mxu0 0.0
        %1552 = vmatprep.subr.mxu0 0.0
        %1553 = vmatpush1.xpose.msra.mxu0 0.0
        %1554 = vmatprep.subr.mxu0 0.0
        %1555 = vmatpush1.xpose.msra.mxu0 0.0
        %1556 = vmatprep.subr.mxu0 0.0
        %1557 = vmatpush1.xpose.msra.mxu0 0.0
        %1558 = vmatprep.subr.mxu0 0.0
        %1559 = vmatpush1.xpose.msra.mxu0 0.0
        %1560 = vmatprep.subr.mxu0 0.0
        %1561 = vmatpush1.xpose.msra.mxu0 0.0
        %1562 = vmatprep.subr.mxu0 0.0
        %1563 = vmatpush1.xpose.msra.mxu0 0.0
        %1564 = vmatprep.subr.mxu0 0.0
        %1565 = vmatpush1.xpose.msra.mxu0 0.0
        %1566 = vmatprep.subr.mxu0 0.0
        %1567 = vmatpush1.xpose.msra.mxu0 0.0
        %1568 = vmatprep.subr.mxu0 0.0
        %1569 = vmatpush1.xpose.msra.mxu0 0.0
        %1570 = vmatprep.subr.mxu0 0.0
        %1571 = vmatpush1.xpose.msra.mxu0 0.0
        %1572 = vmatprep.subr.mxu0 0.0
        %1573 = vmatpush1.xpose.msra.mxu0 0.0
        %1574 = vmatprep.subr.mxu0 0.0
        %1575 = vmatpush1.xpose.msra.mxu0 0.0
        %1576 = vmatprep.mubr.f32.mxu0 0.0
        %1577 = vmatmul.mubr.f32.gmra.mrb[0].mxu0 %v1504
        %v1578 = vpop.f32.mrb[0].mxu0
        %v1579 = vadd.f32 0.0, %v1578
        %v1580 = vpop.f32.mrb[0].mxu0
        %1581 = vdwg.mxu0
        %v1582 = vsel %vm1331, %v1579, -inf
        %1583 = vmax.xlane.f32.xlu0 %v1582
        %v1584 = vpop.xlane.xlu0 %1583
        %v1585 = vsub.f32 %v1579, %v1584
        %v1586 = vmul.f32 %v1585, 1.442695
        %v1587 = vpow.pop %v1586
        %v1588 = vsel %vm1331, %v1587, 0.0
        %1589 = vadd.xlane.f32.xlu0 %v1588
        %v1590 = vpop.xlane.xlu0 %1589
        %s1591 = scalar_lea.vmem [#allocation3], 16
        %v1592 = vld [vmem:[%s1591] sm:$0xff]
        %v1593 = vld [vmem:[%s1591 + $0x8] sm:$0xff]
        %v1595 = vsel %vm1331, %v1587, 0
        %1597 = vmatprep.subr.mxu0 0.0
        %1598 = vmatpush1.msra.mxu0 %v1592
        %1599 = vmatprep.subr.mxu0 0.0
        %1600 = vmatpush1.msra.mxu0 %v1593
        %1601 = vmatprep.subr.mxu0 0.0
        %1602 = vmatpush1.msra.mxu0 0.0
        %1603 = vmatprep.subr.mxu0 0.0
        %1604 = vmatpush1.msra.mxu0 0.0
        %1605 = vmatprep.subr.mxu0 0.0
        %1606 = vmatpush1.msra.mxu0 0.0
        %1607 = vmatprep.subr.mxu0 0.0
        %1608 = vmatpush1.msra.mxu0 0.0
        %1609 = vmatprep.subr.mxu0 0.0
        %1610 = vmatpush1.msra.mxu0 0.0
        %1611 = vmatprep.subr.mxu0 0.0
        %1612 = vmatpush1.msra.mxu0 0.0
        %1613 = vmatprep.subr.mxu0 0.0
        %1614 = vmatpush1.msra.mxu0 0.0
        %1615 = vmatprep.subr.mxu0 0.0
        %1616 = vmatpush1.msra.mxu0 0.0
        %1617 = vmatprep.subr.mxu0 0.0
        %1618 = vmatpush1.msra.mxu0 0.0
        %1619 = vmatprep.subr.mxu0 0.0
        %1620 = vmatpush1.msra.mxu0 0.0
        %1621 = vmatprep.subr.mxu0 0.0
        %1622 = vmatpush1.msra.mxu0 0.0
        %1623 = vmatprep.subr.mxu0 0.0
        %1624 = vmatpush1.msra.mxu0 0.0
        %1625 = vmatprep.subr.mxu0 0.0
        %1626 = vmatpush1.msra.mxu0 0.0
        %1627 = vmatprep.subr.mxu0 0.0
        %1628 = vmatpush1.msra.mxu0 0.0
        %1629 = vmatprep.subr.mxu0 0.0
        %1630 = vmatpush1.msra.mxu0 0.0
        %1631 = vmatprep.subr.mxu0 0.0
        %1632 = vmatpush1.msra.mxu0 0.0
        %1633 = vmatprep.subr.mxu0 0.0
        %1634 = vmatpush1.msra.mxu0 0.0
        %1635 = vmatprep.subr.mxu0 0.0
        %1636 = vmatpush1.msra.mxu0 0.0
        %1637 = vmatprep.subr.mxu0 0.0
        %1638 = vmatpush1.msra.mxu0 0.0
        %1639 = vmatprep.subr.mxu0 0.0
        %1640 = vmatpush1.msra.mxu0 0.0
        %1641 = vmatprep.subr.mxu0 0.0
        %1642 = vmatpush1.msra.mxu0 0.0
        %1643 = vmatprep.subr.mxu0 0.0
        %1644 = vmatpush1.msra.mxu0 0.0
        %1645 = vmatprep.subr.mxu0 0.0
        %1646 = vmatpush1.msra.mxu0 0.0
        %1647 = vmatprep.subr.mxu0 0.0
        %1648 = vmatpush1.msra.mxu0 0.0
        %1649 = vmatprep.subr.mxu0 0.0
        %1650 = vmatpush1.msra.mxu0 0.0
        %1651 = vmatprep.subr.mxu0 0.0
        %1652 = vmatpush1.msra.mxu0 0.0
        %1653 = vmatprep.subr.mxu0 0.0
        %1654 = vmatpush1.msra.mxu0 0.0
        %1655 = vmatprep.subr.mxu0 0.0
        %1656 = vmatpush1.msra.mxu0 0.0
        %1657 = vmatprep.subr.mxu0 0.0
        %1658 = vmatpush1.msra.mxu0 0.0
        %1659 = vmatprep.subr.mxu0 0.0
        %1660 = vmatpush1.msra.mxu0 0.0
        %1661 = vmatprep.mubr.f32.mxu0 0.0
        %1662 = vmatmul.mubr.f32.gmra.mrb[0].mxu0 %v1595
        %v1663 = vpop.f32.mrb[0].mxu0
        %v1664 = vadd.f32 0.0, %v1663
        %v1665 = vpop.f32.mrb[0].mxu0
        %1666 = vdwg.mxu0
        %v1667 = vrcp.pop %v1590
        %v1668 = vmul.f32 %v1664, %v1667
        %v1669 = vrcp.pop %v1590
        %v1670 = vmul.f32 1.0, %v1669
        %v1671 = vmul.f32 %v1587, %v1670
        %v1672 = vpack.c.bf16 %v1671, %v1671
        %s1673 = scalar_lea.vmem %s487, 4 [#allocation6]
        %1674 = vst.msk [vmem:[%s1673] sm:$0xf] %vm1422, %v1672
        %s1675 = scalar_lea.vmem %s1, 64
        %v1676 = vld [vmem:[%s1675] sm:$0xff]
        %v1677 = vld [vmem:[%s1675 + $0x8] sm:$0xff]
        %v1678 = vld [vmem:[%s1675 + $0x10] sm:$0xff]
        %v1679 = vld [vmem:[%s1675 + $0x18] sm:$0xff]
        %1680 = vmatprep.subr.mxu0 0.0
        %1681 = vmatpush1.msra.mxu0 %v1676
        %1682 = vmatprep.subr.mxu0 0.0
        %1683 = vmatpush1.msra.mxu0 %v1677
        %1684 = vmatprep.subr.mxu0 0.0
        %1685 = vmatpush1.msra.mxu0 %v1678
        %1686 = vmatprep.subr.mxu0 0.0
        %1687 = vmatpush1.msra.mxu0 %v1679
        %1688 = vmatprep.subr.mxu0 0.0
        %1689 = vmatpush1.msra.mxu0 0.0
        %1690 = vmatprep.subr.mxu0 0.0
        %1691 = vmatpush1.msra.mxu0 0.0
        %1692 = vmatprep.subr.mxu0 0.0
        %1693 = vmatpush1.msra.mxu0 0.0
        %1694 = vmatprep.subr.mxu0 0.0
        %1695 = vmatpush1.msra.mxu0 0.0
        %1696 = vmatprep.subr.mxu0 0.0
        %1697 = vmatpush1.msra.mxu0 0.0
        %1698 = vmatprep.subr.mxu0 0.0
        %1699 = vmatpush1.msra.mxu0 0.0
        %1700 = vmatprep.subr.mxu0 0.0
        %1701 = vmatpush1.msra.mxu0 0.0
        %1702 = vmatprep.subr.mxu0 0.0
        %1703 = vmatpush1.msra.mxu0 0.0
        %1704 = vmatprep.subr.mxu0 0.0
        %1705 = vmatpush1.msra.mxu0 0.0
        %1706 = vmatprep.subr.mxu0 0.0
        %1707 = vmatpush1.msra.mxu0 0.0
        %1708 = vmatprep.subr.mxu0 0.0
        %1709 = vmatpush1.msra.mxu0 0.0
        %1710 = vmatprep.subr.mxu0 0.0
        %1711 = vmatpush1.msra.mxu0 0.0
        %1712 = vmatprep.subr.mxu0 0.0
        %1713 = vmatpush1.msra.mxu0 0.0
        %1714 = vmatprep.subr.mxu0 0.0
        %1715 = vmatpush1.msra.mxu0 0.0
        %1716 = vmatprep.subr.mxu0 0.0
        %1717 = vmatpush1.msra.mxu0 0.0
        %1718 = vmatprep.subr.mxu0 0.0
        %1719 = vmatpush1.msra.mxu0 0.0
        %1720 = vmatprep.subr.mxu0 0.0
        %1721 = vmatpush1.msra.mxu0 0.0
        %1722 = vmatprep.subr.mxu0 0.0
        %1723 = vmatpush1.msra.mxu0 0.0
        %1724 = vmatprep.subr.mxu0 0.0
        %1725 = vmatpush1.msra.mxu0 0.0
        %1726 = vmatprep.subr.mxu0 0.0
        %1727 = vmatpush1.msra.mxu0 0.0
        %1728 = vmatprep.subr.mxu0 0.0
        %1729 = vmatpush1.msra.mxu0 0.0
        %1730 = vmatprep.subr.mxu0 0.0
        %1731 = vmatpush1.msra.mxu0 0.0
        %1732 = vmatprep.subr.mxu0 0.0
        %1733 = vmatpush1.msra.mxu0 0.0
        %1734 = vmatprep.subr.mxu0 0.0
        %1735 = vmatpush1.msra.mxu0 0.0
        %1736 = vmatprep.subr.mxu0 0.0
        %1737 = vmatpush1.msra.mxu0 0.0
        %1738 = vmatprep.subr.mxu0 0.0
        %1739 = vmatpush1.msra.mxu0 0.0
        %1740 = vmatprep.subr.mxu0 0.0
        %1741 = vmatpush1.msra.mxu0 0.0
        %1742 = vmatprep.subr.mxu0 0.0
        %1743 = vmatpush1.msra.mxu0 0.0
        %1744 = vmatprep.mubr.f32.mxu0 0.0
        %1745 = vmatmul.mubr.f32.gmra.mrb[0].mxu0 %v1176
        %v1746 = vpop.f32.mrb[0].mxu0
        %v1747 = vadd.f32 0.0, %v1746
        %v1748 = vpop.f32.mrb[0].mxu0
        %1749 = vdwg.mxu0
        %v1750 = vmul.f32 %v1747, 0.35355338
        %s1751 = scalar_lea.vmem [#allocation2], 32
        %v1752 = vld [vmem:[%s1751] sm:$0xff]
        %v1753 = vld [vmem:[%s1751 + $0x8] sm:$0xff]
        %v1755 = vsel %vm1251, %v1750, 0
        %v1758 = vsel %vm1251, %v1752, 0
        %v1761 = vsel %vm1251, %v1753, 0
        %1763 = vmatprep.subr.mxu0 0.0
        %1764 = vmatpush1.xpose.msra.mxu0 %v1758
        %1765 = vmatprep.subr.mxu0 0.0
        %1766 = vmatpush1.xpose.msra.mxu0 %v1761
        %1767 = vmatprep.subr.mxu0 0.0
        %1768 = vmatpush1.xpose.msra.mxu0 0.0
        %1769 = vmatprep.subr.mxu0 0.0
        %1770 = vmatpush1.xpose.msra.mxu0 0.0
        %1771 = vmatprep.subr.mxu0 0.0
        %1772 = vmatpush1.xpose.msra.mxu0 0.0
        %1773 = vmatprep.subr.mxu0 0.0
        %1774 = vmatpush1.xpose.msra.mxu0 0.0
        %1775 = vmatprep.subr.mxu0 0.0
        %1776 = vmatpush1.xpose.msra.mxu0 0.0
        %1777 = vmatprep.subr.mxu0 0.0
        %1778 = vmatpush1.xpose.msra.mxu0 0.0
        %1779 = vmatprep.subr.mxu0 0.0
        %1780 = vmatpush1.xpose.msra.mxu0 0.0
        %1781 = vmatprep.subr.mxu0 0.0
        %1782 = vmatpush1.xpose.msra.mxu0 0.0
        %1783 = vmatprep.subr.mxu0 0.0
        %1784 = vmatpush1.xpose.msra.mxu0 0.0
        %1785 = vmatprep.subr.mxu0 0.0
        %1786 = vmatpush1.xpose.msra.mxu0 0.0
        %1787 = vmatprep.subr.mxu0 0.0
        %1788 = vmatpush1.xpose.msra.mxu0 0.0
        %1789 = vmatprep.subr.mxu0 0.0
        %1790 = vmatpush1.xpose.msra.mxu0 0.0
        %1791 = vmatprep.subr.mxu0 0.0
        %1792 = vmatpush1.xpose.msra.mxu0 0.0
        %1793 = vmatprep.subr.mxu0 0.0
        %1794 = vmatpush1.xpose.msra.mxu0 0.0
        %1795 = vmatprep.subr.mxu0 0.0
        %1796 = vmatpush1.xpose.msra.mxu0 0.0
        %1797 = vmatprep.subr.mxu0 0.0
        %1798 = vmatpush1.xpose.msra.mxu0 0.0
        %1799 = vmatprep.subr.mxu0 0.0
        %1800 = vmatpush1.xpose.msra.mxu0 0.0
        %1801 = vmatprep.subr.mxu0 0.0
        %1802 = vmatpush1.xpose.msra.mxu0 0.0
        %1803 = vmatprep.subr.mxu0 0.0
        %1804 = vmatpush1.xpose.msra.mxu0 0.0
        %1805 = vmatprep.subr.mxu0 0.0
        %1806 = vmatpush1.xpose.msra.mxu0 0.0
        %1807 = vmatprep.subr.mxu0 0.0
        %1808 = vmatpush1.xpose.msra.mxu0 0.0
        %1809 = vmatprep.subr.mxu0 0.0
        %1810 = vmatpush1.xpose.msra.mxu0 0.0
        %1811 = vmatprep.subr.mxu0 0.0
        %1812 = vmatpush1.xpose.msra.mxu0 0.0
        %1813 = vmatprep.subr.mxu0 0.0
        %1814 = vmatpush1.xpose.msra.mxu0 0.0
        %1815 = vmatprep.subr.mxu0 0.0
        %1816 = vmatpush1.xpose.msra.mxu0 0.0
        %1817 = vmatprep.subr.mxu0 0.0
        %1818 = vmatpush1.xpose.msra.mxu0 0.0
        %1819 = vmatprep.subr.mxu0 0.0
        %1820 = vmatpush1.xpose.msra.mxu0 0.0
        %1821 = vmatprep.subr.mxu0 0.0
        %1822 = vmatpush1.xpose.msra.mxu0 0.0
        %1823 = vmatprep.subr.mxu0 0.0
        %1824 = vmatpush1.xpose.msra.mxu0 0.0
        %1825 = vmatprep.subr.mxu0 0.0
        %1826 = vmatpush1.xpose.msra.mxu0 0.0
        %1827 = vmatprep.mubr.f32.mxu0 0.0
        %1828 = vmatmul.mubr.f32.gmra.mrb[0].mxu0 %v1755
        %v1829 = vpop.f32.mrb[0].mxu0
        %v1830 = vadd.f32 0.0, %v1829
        %v1831 = vpop.f32.mrb[0].mxu0
        %1832 = vdwg.mxu0
        %v1833 = vsel %vm1331, %v1830, -inf
        %1834 = vmax.xlane.f32.xlu0 %v1833
        %v1835 = vpop.xlane.xlu0 %1834
        %v1836 = vsub.f32 %v1830, %v1835
        %v1837 = vmul.f32 %v1836, 1.442695
        %v1838 = vpow.pop %v1837
        %v1839 = vsel %vm1331, %v1838, 0.0
        %1840 = vadd.xlane.f32.xlu0 %v1839
        %v1841 = vpop.xlane.xlu0 %1840
        %s1842 = scalar_lea.vmem [#allocation3], 32
        %v1843 = vld [vmem:[%s1842] sm:$0xff]
        %v1844 = vld [vmem:[%s1842 + $0x8] sm:$0xff]
        %v1846 = vsel %vm1331, %v1838, 0
        %1848 = vmatprep.subr.mxu0 0.0
        %1849 = vmatpush1.msra.mxu0 %v1843
        %1850 = vmatprep.subr.mxu0 0.0
        %1851 = vmatpush1.msra.mxu0 %v1844
        %1852 = vmatprep.subr.mxu0 0.0
        %1853 = vmatpush1.msra.mxu0 0.0
        %1854 = vmatprep.subr.mxu0 0.0
        %1855 = vmatpush1.msra.mxu0 0.0
        %1856 = vmatprep.subr.mxu0 0.0
        %1857 = vmatpush1.msra.mxu0 0.0
        %1858 = vmatprep.subr.mxu0 0.0
        %1859 = vmatpush1.msra.mxu0 0.0
        %1860 = vmatprep.subr.mxu0 0.0
        %1861 = vmatpush1.msra.mxu0 0.0
        %1862 = vmatprep.subr.mxu0 0.0
        %1863 = vmatpush1.msra.mxu0 0.0
        %1864 = vmatprep.subr.mxu0 0.0
        %1865 = vmatpush1.msra.mxu0 0.0
        %1866 = vmatprep.subr.mxu0 0.0
        %1867 = vmatpush1.msra.mxu0 0.0
        %1868 = vmatprep.subr.mxu0 0.0
        %1869 = vmatpush1.msra.mxu0 0.0
        %1870 = vmatprep.subr.mxu0 0.0
        %1871 = vmatpush1.msra.mxu0 0.0
        %1872 = vmatprep.subr.mxu0 0.0
        %1873 = vmatpush1.msra.mxu0 0.0
        %1874 = vmatprep.subr.mxu0 0.0
        %1875 = vmatpush1.msra.mxu0 0.0
        %1876 = vmatprep.subr.mxu0 0.0
        %1877 = vmatpush1.msra.mxu0 0.0
        %1878 = vmatprep.subr.mxu0 0.0
        %1879 = vmatpush1.msra.mxu0 0.0
        %1880 = vmatprep.subr.mxu0 0.0
        %1881 = vmatpush1.msra.mxu0 0.0
        %1882 = vmatprep.subr.mxu0 0.0
        %1883 = vmatpush1.msra.mxu0 0.0
        %1884 = vmatprep.subr.mxu0 0.0
        %1885 = vmatpush1.msra.mxu0 0.0
        %1886 = vmatprep.subr.mxu0 0.0
        %1887 = vmatpush1.msra.mxu0 0.0
        %1888 = vmatprep.subr.mxu0 0.0
        %1889 = vmatpush1.msra.mxu0 0.0
        %1890 = vmatprep.subr.mxu0 0.0
        %1891 = vmatpush1.msra.mxu0 0.0
        %1892 = vmatprep.subr.mxu0 0.0
        %1893 = vmatpush1.msra.mxu0 0.0
        %1894 = vmatprep.subr.mxu0 0.0
        %1895 = vmatpush1.msra.mxu0 0.0
        %1896 = vmatprep.subr.mxu0 0.0
        %1897 = vmatpush1.msra.mxu0 0.0
        %1898 = vmatprep.subr.mxu0 0.0
        %1899 = vmatpush1.msra.mxu0 0.0
        %1900 = vmatprep.subr.mxu0 0.0
        %1901 = vmatpush1.msra.mxu0 0.0
        %1902 = vmatprep.subr.mxu0 0.0
        %1903 = vmatpush1.msra.mxu0 0.0
        %1904 = vmatprep.subr.mxu0 0.0
        %1905 = vmatpush1.msra.mxu0 0.0
        %1906 = vmatprep.subr.mxu0 0.0
        %1907 = vmatpush1.msra.mxu0 0.0
        %1908 = vmatprep.subr.mxu0 0.0
        %1909 = vmatpush1.msra.mxu0 0.0
        %1910 = vmatprep.subr.mxu0 0.0
        %1911 = vmatpush1.msra.mxu0 0.0
        %1912 = vmatprep.mubr.f32.mxu0 0.0
        %1913 = vmatmul.mubr.f32.gmra.mrb[0].mxu0 %v1846
        %v1914 = vpop.f32.mrb[0].mxu0
        %v1915 = vadd.f32 0.0, %v1914
        %v1916 = vpop.f32.mrb[0].mxu0
        %1917 = vdwg.mxu0
        %v1918 = vrcp.pop %v1841
        %v1919 = vmul.f32 %v1915, %v1918
        %v1920 = vrcp.pop %v1841
        %v1921 = vmul.f32 1.0, %v1920
        %v1922 = vmul.f32 %v1838, %v1921
        %v1923 = vpack.c.bf16 %v1922, %v1922
        %s1924 = scalar_lea.vmem %s487, 8 [#allocation6]
        %1925 = vst.msk [vmem:[%s1924] sm:$0xf] %vm1422, %v1923
        %s1926 = scalar_lea.vmem %s1, 96
        %v1927 = vld [vmem:[%s1926] sm:$0xff]
        %v1928 = vld [vmem:[%s1926 + $0x8] sm:$0xff]
        %v1929 = vld [vmem:[%s1926 + $0x10] sm:$0xff]
        %v1930 = vld [vmem:[%s1926 + $0x18] sm:$0xff]
        %1931 = vmatprep.subr.mxu0 0.0
        %1932 = vmatpush1.msra.mxu0 %v1927
        %1933 = vmatprep.subr.mxu0 0.0
        %1934 = vmatpush1.msra.mxu0 %v1928
        %1935 = vmatprep.subr.mxu0 0.0
        %1936 = vmatpush1.msra.mxu0 %v1929
        %1937 = vmatprep.subr.mxu0 0.0
        %1938 = vmatpush1.msra.mxu0 %v1930
        %1939 = vmatprep.subr.mxu0 0.0
        %1940 = vmatpush1.msra.mxu0 0.0
        %1941 = vmatprep.subr.mxu0 0.0
        %1942 = vmatpush1.msra.mxu0 0.0
        %1943 = vmatprep.subr.mxu0 0.0
        %1944 = vmatpush1.msra.mxu0 0.0
        %1945 = vmatprep.subr.mxu0 0.0
        %1946 = vmatpush1.msra.mxu0 0.0
        %1947 = vmatprep.subr.mxu0 0.0
        %1948 = vmatpush1.msra.mxu0 0.0
        %1949 = vmatprep.subr.mxu0 0.0
        %1950 = vmatpush1.msra.mxu0 0.0
        %1951 = vmatprep.subr.mxu0 0.0
        %1952 = vmatpush1.msra.mxu0 0.0
        %1953 = vmatprep.subr.mxu0 0.0
        %1954 = vmatpush1.msra.mxu0 0.0
        %1955 = vmatprep.subr.mxu0 0.0
        %1956 = vmatpush1.msra.mxu0 0.0
        %1957 = vmatprep.subr.mxu0 0.0
        %1958 = vmatpush1.msra.mxu0 0.0
        %1959 = vmatprep.subr.mxu0 0.0
        %1960 = vmatpush1.msra.mxu0 0.0
        %1961 = vmatprep.subr.mxu0 0.0
        %1962 = vmatpush1.msra.mxu0 0.0
        %1963 = vmatprep.subr.mxu0 0.0
        %1964 = vmatpush1.msra.mxu0 0.0
        %1965 = vmatprep.subr.mxu0 0.0
        %1966 = vmatpush1.msra.mxu0 0.0
        %1967 = vmatprep.subr.mxu0 0.0
        %1968 = vmatpush1.msra.mxu0 0.0
        %1969 = vmatprep.subr.mxu0 0.0
        %1970 = vmatpush1.msra.mxu0 0.0
        %1971 = vmatprep.subr.mxu0 0.0
        %1972 = vmatpush1.msra.mxu0 0.0
        %1973 = vmatprep.subr.mxu0 0.0
        %1974 = vmatpush1.msra.mxu0 0.0
        %1975 = vmatprep.subr.mxu0 0.0
        %1976 = vmatpush1.msra.mxu0 0.0
        %1977 = vmatprep.subr.mxu0 0.0
        %1978 = vmatpush1.msra.mxu0 0.0
        %1979 = vmatprep.subr.mxu0 0.0
        %1980 = vmatpush1.msra.mxu0 0.0
        %1981 = vmatprep.subr.mxu0 0.0
        %1982 = vmatpush1.msra.mxu0 0.0
        %1983 = vmatprep.subr.mxu0 0.0
        %1984 = vmatpush1.msra.mxu0 0.0
        %1985 = vmatprep.subr.mxu0 0.0
        %1986 = vmatpush1.msra.mxu0 0.0
        %1987 = vmatprep.subr.mxu0 0.0
        %1988 = vmatpush1.msra.mxu0 0.0
        %1989 = vmatprep.subr.mxu0 0.0
        %1990 = vmatpush1.msra.mxu0 0.0
        %1991 = vmatprep.subr.mxu0 0.0
        %1992 = vmatpush1.msra.mxu0 0.0
        %1993 = vmatprep.subr.mxu0 0.0
        %1994 = vmatpush1.msra.mxu0 0.0
        %1995 = vmatprep.mubr.f32.mxu0 0.0
        %1996 = vmatmul.mubr.f32.gmra.mrb[0].mxu0 %v1176
        %v1997 = vpop.f32.mrb[0].mxu0
        %v1998 = vadd.f32 0.0, %v1997
        %v1999 = vpop.f32.mrb[0].mxu0
        %2000 = vdwg.mxu0
        %v2001 = vmul.f32 %v1998, 0.35355338
        %s2002 = scalar_lea.vmem [#allocation2], 48
        %v2003 = vld [vmem:[%s2002] sm:$0xff]
        %v2004 = vld [vmem:[%s2002 + $0x8] sm:$0xff]
        %v2006 = vsel %vm1251, %v2001, 0
        %v2009 = vsel %vm1251, %v2003, 0
        %v2012 = vsel %vm1251, %v2004, 0
        %2014 = vmatprep.subr.mxu0 0.0
        %2015 = vmatpush1.xpose.msra.mxu0 %v2009
        %2016 = vmatprep.subr.mxu0 0.0
        %2017 = vmatpush1.xpose.msra.mxu0 %v2012
        %2018 = vmatprep.subr.mxu0 0.0
        %2019 = vmatpush1.xpose.msra.mxu0 0.0
        %2020 = vmatprep.subr.mxu0 0.0
        %2021 = vmatpush1.xpose.msra.mxu0 0.0
        %2022 = vmatprep.subr.mxu0 0.0
        %2023 = vmatpush1.xpose.msra.mxu0 0.0
        %2024 = vmatprep.subr.mxu0 0.0
        %2025 = vmatpush1.xpose.msra.mxu0 0.0
        %2026 = vmatprep.subr.mxu0 0.0
        %2027 = vmatpush1.xpose.msra.mxu0 0.0
        %2028 = vmatprep.subr.mxu0 0.0
        %2029 = vmatpush1.xpose.msra.mxu0 0.0
        %2030 = vmatprep.subr.mxu0 0.0
        %2031 = vmatpush1.xpose.msra.mxu0 0.0
        %2032 = vmatprep.subr.mxu0 0.0
        %2033 = vmatpush1.xpose.msra.mxu0 0.0
        %2034 = vmatprep.subr.mxu0 0.0
        %2035 = vmatpush1.xpose.msra.mxu0 0.0
        %2036 = vmatprep.subr.mxu0 0.0
        %2037 = vmatpush1.xpose.msra.mxu0 0.0
        %2038 = vmatprep.subr.mxu0 0.0
        %2039 = vmatpush1.xpose.msra.mxu0 0.0
        %2040 = vmatprep.subr.mxu0 0.0
        %2041 = vmatpush1.xpose.msra.mxu0 0.0
        %2042 = vmatprep.subr.mxu0 0.0
        %2043 = vmatpush1.xpose.msra.mxu0 0.0
        %2044 = vmatprep.subr.mxu0 0.0
        %2045 = vmatpush1.xpose.msra.mxu0 0.0
        %2046 = vmatprep.subr.mxu0 0.0
        %2047 = vmatpush1.xpose.msra.mxu0 0.0
        %2048 = vmatprep.subr.mxu0 0.0
        %2049 = vmatpush1.xpose.msra.mxu0 0.0
        %2050 = vmatprep.subr.mxu0 0.0
        %2051 = vmatpush1.xpose.msra.mxu0 0.0
        %2052 = vmatprep.subr.mxu0 0.0
        %2053 = vmatpush1.xpose.msra.mxu0 0.0
        %2054 = vmatprep.subr.mxu0 0.0
        %2055 = vmatpush1.xpose.msra.mxu0 0.0
        %2056 = vmatprep.subr.mxu0 0.0
        %2057 = vmatpush1.xpose.msra.mxu0 0.0
        %2058 = vmatprep.subr.mxu0 0.0
        %2059 = vmatpush1.xpose.msra.mxu0 0.0
        %2060 = vmatprep.subr.mxu0 0.0
        %2061 = vmatpush1.xpose.msra.mxu0 0.0
        %2062 = vmatprep.subr.mxu0 0.0
        %2063 = vmatpush1.xpose.msra.mxu0 0.0
        %2064 = vmatprep.subr.mxu0 0.0
        %2065 = vmatpush1.xpose.msra.mxu0 0.0
        %2066 = vmatprep.subr.mxu0 0.0
        %2067 = vmatpush1.xpose.msra.mxu0 0.0
        %2068 = vmatprep.subr.mxu0 0.0
        %2069 = vmatpush1.xpose.msra.mxu0 0.0
        %2070 = vmatprep.subr.mxu0 0.0
        %2071 = vmatpush1.xpose.msra.mxu0 0.0
        %2072 = vmatprep.subr.mxu0 0.0
        %2073 = vmatpush1.xpose.msra.mxu0 0.0
        %2074 = vmatprep.subr.mxu0 0.0
        %2075 = vmatpush1.xpose.msra.mxu0 0.0
        %2076 = vmatprep.subr.mxu0 0.0
        %2077 = vmatpush1.xpose.msra.mxu0 0.0
        %2078 = vmatprep.mubr.f32.mxu0 0.0
        %2079 = vmatmul.mubr.f32.gmra.mrb[0].mxu0 %v2006
        %v2080 = vpop.f32.mrb[0].mxu0
        %v2081 = vadd.f32 0.0, %v2080
        %v2082 = vpop.f32.mrb[0].mxu0
        %2083 = vdwg.mxu0
        %v2084 = vsel %vm1331, %v2081, -inf
        %2085 = vmax.xlane.f32.xlu0 %v2084
        %v2086 = vpop.xlane.xlu0 %2085
        %v2087 = vsub.f32 %v2081, %v2086
        %v2088 = vmul.f32 %v2087, 1.442695
        %v2089 = vpow.pop %v2088
        %v2090 = vsel %vm1331, %v2089, 0.0
        %2091 = vadd.xlane.f32.xlu0 %v2090
        %v2092 = vpop.xlane.xlu0 %2091
        %s2093 = scalar_lea.vmem [#allocation3], 48
        %v2094 = vld [vmem:[%s2093] sm:$0xff]
        %v2095 = vld [vmem:[%s2093 + $0x8] sm:$0xff]
        %v2097 = vsel %vm1331, %v2089, 0
        %2099 = vmatprep.subr.mxu0 0.0
        %2100 = vmatpush1.msra.mxu0 %v2094
        %2101 = vmatprep.subr.mxu0 0.0
        %2102 = vmatpush1.msra.mxu0 %v2095
        %2103 = vmatprep.subr.mxu0 0.0
        %2104 = vmatpush1.msra.mxu0 0.0
        %2105 = vmatprep.subr.mxu0 0.0
        %2106 = vmatpush1.msra.mxu0 0.0
        %2107 = vmatprep.subr.mxu0 0.0
        %2108 = vmatpush1.msra.mxu0 0.0
        %2109 = vmatprep.subr.mxu0 0.0
        %2110 = vmatpush1.msra.mxu0 0.0
        %2111 = vmatprep.subr.mxu0 0.0
        %2112 = vmatpush1.msra.mxu0 0.0
        %2113 = vmatprep.subr.mxu0 0.0
        %2114 = vmatpush1.msra.mxu0 0.0
        %2115 = vmatprep.subr.mxu0 0.0
        %2116 = vmatpush1.msra.mxu0 0.0
        %2117 = vmatprep.subr.mxu0 0.0
        %2118 = vmatpush1.msra.mxu0 0.0
        %2119 = vmatprep.subr.mxu0 0.0
        %2120 = vmatpush1.msra.mxu0 0.0
        %2121 = vmatprep.subr.mxu0 0.0
        %2122 = vmatpush1.msra.mxu0 0.0
        %2123 = vmatprep.subr.mxu0 0.0
        %2124 = vmatpush1.msra.mxu0 0.0
        %2125 = vmatprep.subr.mxu0 0.0
        %2126 = vmatpush1.msra.mxu0 0.0
        %2127 = vmatprep.subr.mxu0 0.0
        %2128 = vmatpush1.msra.mxu0 0.0
        %2129 = vmatprep.subr.mxu0 0.0
        %2130 = vmatpush1.msra.mxu0 0.0
        %2131 = vmatprep.subr.mxu0 0.0
        %2132 = vmatpush1.msra.mxu0 0.0
        %2133 = vmatprep.subr.mxu0 0.0
        %2134 = vmatpush1.msra.mxu0 0.0
        %2135 = vmatprep.subr.mxu0 0.0
        %2136 = vmatpush1.msra.mxu0 0.0
        %2137 = vmatprep.subr.mxu0 0.0
        %2138 = vmatpush1.msra.mxu0 0.0
        %2139 = vmatprep.subr.mxu0 0.0
        %2140 = vmatpush1.msra.mxu0 0.0
        %2141 = vmatprep.subr.mxu0 0.0
        %2142 = vmatpush1.msra.mxu0 0.0
        %2143 = vmatprep.subr.mxu0 0.0
        %2144 = vmatpush1.msra.mxu0 0.0
        %2145 = vmatprep.subr.mxu0 0.0
        %2146 = vmatpush1.msra.mxu0 0.0
        %2147 = vmatprep.subr.mxu0 0.0
        %2148 = vmatpush1.msra.mxu0 0.0
        %2149 = vmatprep.subr.mxu0 0.0
        %2150 = vmatpush1.msra.mxu0 0.0
        %2151 = vmatprep.subr.mxu0 0.0
        %2152 = vmatpush1.msra.mxu0 0.0
        %2153 = vmatprep.subr.mxu0 0.0
        %2154 = vmatpush1.msra.mxu0 0.0
        %2155 = vmatprep.subr.mxu0 0.0
        %2156 = vmatpush1.msra.mxu0 0.0
        %2157 = vmatprep.subr.mxu0 0.0
        %2158 = vmatpush1.msra.mxu0 0.0
        %2159 = vmatprep.subr.mxu0 0.0
        %2160 = vmatpush1.msra.mxu0 0.0
        %2161 = vmatprep.subr.mxu0 0.0
        %2162 = vmatpush1.msra.mxu0 0.0
        %2163 = vmatprep.mubr.f32.mxu0 0.0
        %2164 = vmatmul.mubr.f32.gmra.mrb[0].mxu0 %v2097
        %v2165 = vpop.f32.mrb[0].mxu0
        %v2166 = vadd.f32 0.0, %v2165
        %v2167 = vpop.f32.mrb[0].mxu0
        %2168 = vdwg.mxu0
        %v2169 = vrcp.pop %v2092
        %v2170 = vmul.f32 %v2166, %v2169
        %v2171 = vrcp.pop %v2092
        %v2172 = vmul.f32 1.0, %v2171
        %v2173 = vmul.f32 %v2089, %v2172
        %v2174 = vpack.c.bf16 %v2173, %v2173
        %s2175 = scalar_lea.vmem %s487, 12 [#allocation6]
        %2176 = vst.msk [vmem:[%s2175] sm:$0xf] %vm1422, %v2174
        %2178 = vrot.lane.b32.xlu0 %v1668, 8
        %v2179 = vpop.permute.xlu0 %2178
        %2182 = vrot.lane.b32.xlu0 %v1919, 16
        %v2183 = vpop.permute.xlu0 %2182
        %2186 = vrot.lane.b32.xlu0 %v2170, 24
        %v2187 = vpop.permute.xlu0 %2186
        %v2189 = vsel %vm1251, %v1417, %v2179
        %v2190 = vsel %vm1331, %v2189, %v2183
        %vm2191 = vcmask 195584
        %v2192 = vsel %vm2191, %v2190, %v2187
        %v2193 = vld [vmem:[%s4] sm:$0xff]
        %v2194 = vld [vmem:[%s4 + $0x8] sm:$0xff]
        %v2195 = vld [vmem:[%s4 + $0x10] sm:$0xff]
        %v2196 = vld [vmem:[%s4 + $0x18] sm:$0xff]
        %v2198 = vsel %vm1174, %v2192, 0
        %2200 = vmatprep.subr.mxu0 0.0
        %2201 = vmatpush1.msra.mxu0 %v2193
        %2202 = vmatprep.subr.mxu0 0.0
        %2203 = vmatpush1.msra.mxu0 %v2194
        %2204 = vmatprep.subr.mxu0 0.0
        %2205 = vmatpush1.msra.mxu0 %v2195
        %2206 = vmatprep.subr.mxu0 0.0
        %2207 = vmatpush1.msra.mxu0 %v2196
        %2208 = vmatprep.subr.mxu0 0.0
        %2209 = vmatpush1.msra.mxu0 0.0
        %2210 = vmatprep.subr.mxu0 0.0
        %2211 = vmatpush1.msra.mxu0 0.0
        %2212 = vmatprep.subr.mxu0 0.0
        %2213 = vmatpush1.msra.mxu0 0.0
        %2214 = vmatprep.subr.mxu0 0.0
        %2215 = vmatpush1.msra.mxu0 0.0
        %2216 = vmatprep.subr.mxu0 0.0
        %2217 = vmatpush1.msra.mxu0 0.0
        %2218 = vmatprep.subr.mxu0 0.0
        %2219 = vmatpush1.msra.mxu0 0.0
        %2220 = vmatprep.subr.mxu0 0.0
        %2221 = vmatpush1.msra.mxu0 0.0
        %2222 = vmatprep.subr.mxu0 0.0
        %2223 = vmatpush1.msra.mxu0 0.0
        %2224 = vmatprep.subr.mxu0 0.0
        %2225 = vmatpush1.msra.mxu0 0.0
        %2226 = vmatprep.subr.mxu0 0.0
        %2227 = vmatpush1.msra.mxu0 0.0
        %2228 = vmatprep.subr.mxu0 0.0
        %2229 = vmatpush1.msra.mxu0 0.0
        %2230 = vmatprep.subr.mxu0 0.0
        %2231 = vmatpush1.msra.mxu0 0.0
        %2232 = vmatprep.subr.mxu0 0.0
        %2233 = vmatpush1.msra.mxu0 0.0
        %2234 = vmatprep.subr.mxu0 0.0
        %2235 = vmatpush1.msra.mxu0 0.0
        %2236 = vmatprep.subr.mxu0 0.0
        %2237 = vmatpush1.msra.mxu0 0.0
        %2238 = vmatprep.subr.mxu0 0.0
        %2239 = vmatpush1.msra.mxu0 0.0
        %2240 = vmatprep.subr.mxu0 0.0
        %2241 = vmatpush1.msra.mxu0 0.0
        %2242 = vmatprep.subr.mxu0 0.0
        %2243 = vmatpush1.msra.mxu0 0.0
        %2244 = vmatprep.subr.mxu0 0.0
        %2245 = vmatpush1.msra.mxu0 0.0
        %2246 = vmatprep.subr.mxu0 0.0
        %2247 = vmatpush1.msra.mxu0 0.0
        %2248 = vmatprep.subr.mxu0 0.0
        %2249 = vmatpush1.msra.mxu0 0.0
        %2250 = vmatprep.subr.mxu0 0.0
        %2251 = vmatpush1.msra.mxu0 0.0
        %2252 = vmatprep.subr.mxu0 0.0
        %2253 = vmatpush1.msra.mxu0 0.0
        %2254 = vmatprep.subr.mxu0 0.0
        %2255 = vmatpush1.msra.mxu0 0.0
        %2256 = vmatprep.subr.mxu0 0.0
        %2257 = vmatpush1.msra.mxu0 0.0
        %2258 = vmatprep.subr.mxu0 0.0
        %2259 = vmatpush1.msra.mxu0 0.0
        %2260 = vmatprep.subr.mxu0 0.0
        %2261 = vmatpush1.msra.mxu0 0.0
        %2262 = vmatprep.subr.mxu0 0.0
        %2263 = vmatpush1.msra.mxu0 0.0
        %2264 = vmatprep.mubr.f32.mxu0 0.0
        %2265 = vmatmul.mubr.f32.gmra.mrb[0].mxu0 %v2198
        %v2266 = vpop.f32.mrb[0].mxu0
        %v2267 = vadd.f32 %v1169, %v2266
        %v2268 = vpop.f32.mrb[0].mxu0
        %2269 = vdwg.mxu0
        %v2270 = vld [vmem:[%s5] sm:$0x1]
        %v2271 = vld [vmem:[%s6] sm:$0x1]
        %v2272 = vsel %vm1174, %v2267, 0.0
        %2273 = vadd.xlane.f32.xlu0 %v2272
        %v2274 = vpop.xlane.xlu0 %2273
        %v2275 = vrcp.pop 32.0
        %v2276 = vmul.f32 %v2274, %v2275
        %v2277 = vsub.f32 %v2267, %v2276
        %v2278 = vmul.f32 %v2277, %v2277
        %v2279 = vsel %vm1174, %v2278, 0.0
        %2280 = vadd.xlane.f32.xlu0 %v2279
        %v2281 = vpop.xlane.xlu0 %2280
        %v2282 = vmul.f32 %v2281, %v2275
        %v2283 = vadd.f32 %v2282, 1e-06
        %v2284 = vrsqrt.pop %v2283
        %v2285 = vmul.f32 %v2277, %v2284
        %v2287 = vlaneseq
        %v2288 = vshrl.u32 %v2287, 7
        %v2289 = vsub.s32 0, %v2288
        %v2290 = vrot.slane %v2270, %v2289
        %v2292 = vmul.f32 %v2285, %v2290
        %v2294 = vlaneseq
        %v2295 = vshrl.u32 %v2294, 7
        %v2296 = vsub.s32 0, %v2295
        %v2297 = vrot.slane %v2271, %v2296
        %v2299 = vadd.f32 %v2292, %v2297
        %v2300 = vld [vmem:[%s7] sm:$0xff]
        %v2301 = vld [vmem:[%s7 + $0x8] sm:$0xff]
        %v2302 = vld [vmem:[%s7 + $0x10] sm:$0xff]
        %v2303 = vld [vmem:[%s7 + $0x18] sm:$0xff]
        %v2304 = vld [vmem:[%s8] sm:$0x1]
        %v2306 = vlaneseq
        %v2307 = vshrl.u32 %v2306, 7
        %v2308 = vsub.s32 0, %v2307
        %v2309 = vrot.slane %v2304, %v2308
        %v2312 = vsel %vm1174, %v2299, 0
        %2314 = vmatprep.subr.mxu0 0.0
        %2315 = vmatpush1.msra.mxu0 %v2300
        %2316 = vmatprep.subr.mxu0 0.0
        %2317 = vmatpush1.msra.mxu0 %v2301
        %2318 = vmatprep.subr.mxu0 0.0
        %2319 = vmatpush1.msra.mxu0 %v2302
        %2320 = vmatprep.subr.mxu0 0.0
        %2321 = vmatpush1.msra.mxu0 %v2303
        %2322 = vmatprep.subr.mxu0 0.0
        %2323 = vmatpush1.msra.mxu0 0.0
        %2324 = vmatprep.subr.mxu0 0.0
        %2325 = vmatpush1.msra.mxu0 0.0
        %2326 = vmatprep.subr.mxu0 0.0
        %2327 = vmatpush1.msra.mxu0 0.0
        %2328 = vmatprep.subr.mxu0 0.0
        %2329 = vmatpush1.msra.mxu0 0.0
        %2330 = vmatprep.subr.mxu0 0.0
        %2331 = vmatpush1.msra.mxu0 0.0
        %2332 = vmatprep.subr.mxu0 0.0
        %2333 = vmatpush1.msra.mxu0 0.0
        %2334 = vmatprep.subr.mxu0 0.0
        %2335 = vmatpush1.msra.mxu0 0.0
        %2336 = vmatprep.subr.mxu0 0.0
        %2337 = vmatpush1.msra.mxu0 0.0
        %2338 = vmatprep.subr.mxu0 0.0
        %2339 = vmatpush1.msra.mxu0 0.0
        %2340 = vmatprep.subr.mxu0 0.0
        %2341 = vmatpush1.msra.mxu0 0.0
        %2342 = vmatprep.subr.mxu0 0.0
        %2343 = vmatpush1.msra.mxu0 0.0
        %2344 = vmatprep.subr.mxu0 0.0
        %2345 = vmatpush1.msra.mxu0 0.0
        %2346 = vmatprep.subr.mxu0 0.0
        %2347 = vmatpush1.msra.mxu0 0.0
        %2348 = vmatprep.subr.mxu0 0.0
        %2349 = vmatpush1.msra.mxu0 0.0
        %2350 = vmatprep.subr.mxu0 0.0
        %2351 = vmatpush1.msra.mxu0 0.0
        %2352 = vmatprep.subr.mxu0 0.0
        %2353 = vmatpush1.msra.mxu0 0.0
        %2354 = vmatprep.subr.mxu0 0.0
        %2355 = vmatpush1.msra.mxu0 0.0
        %2356 = vmatprep.subr.mxu0 0.0
        %2357 = vmatpush1.msra.mxu0 0.0
        %2358 = vmatprep.subr.mxu0 0.0
        %2359 = vmatpush1.msra.mxu0 0.0
        %2360 = vmatprep.subr.mxu0 0.0
        %2361 = vmatpush1.msra.mxu0 0.0
        %2362 = vmatprep.subr.mxu0 0.0
        %2363 = vmatpush1.msra.mxu0 0.0
        %2364 = vmatprep.subr.mxu0 0.0
        %2365 = vmatpush1.msra.mxu0 0.0
        %2366 = vmatprep.subr.mxu0 0.0
        %2367 = vmatpush1.msra.mxu0 0.0
        %2368 = vmatprep.subr.mxu0 0.0
        %2369 = vmatpush1.msra.mxu0 0.0
        %2370 = vmatprep.subr.mxu0 0.0
        %2371 = vmatpush1.msra.mxu0 0.0
        %2372 = vmatprep.subr.mxu0 0.0
        %2373 = vmatpush1.msra.mxu0 0.0
        %2374 = vmatprep.subr.mxu0 0.0
        %2375 = vmatpush1.msra.mxu0 0.0
        %2376 = vmatprep.subr.mxu0 0.0
        %2377 = vmatpush1.msra.mxu0 0.0
        %2378 = vmatprep.mubr.f32.mxu0 0.0
        %2379 = vmatmul.mubr.f32.gmra.mrb[0].mxu0 %v2312
        %v2380 = vpop.f32.mrb[0].mxu0
        %v2381 = vadd.f32 %v2309, %v2380
        %v2382 = vpop.f32.mrb[0].mxu0
        %2383 = vdwg.mxu0
        %v2384 = vmax.f32 %v2381, 0.0
        %v2385 = vld [vmem:[%s9] sm:$0xff]
        %v2386 = vld [vmem:[%s9 + $0x8] sm:$0xff]
        %v2387 = vld [vmem:[%s9 + $0x10] sm:$0xff]
        %v2388 = vld [vmem:[%s9 + $0x18] sm:$0xff]
        %v2389 = vld [vmem:[%s9 + $0x20] sm:$0xff]
        %v2390 = vld [vmem:[%s9 + $0x28] sm:$0xff]
        %v2391 = vld [vmem:[%s9 + $0x30] sm:$0xff]
        %v2392 = vld [vmem:[%s9 + $0x38] sm:$0xff]
        %v2393 = vld [vmem:[%s10] sm:$0x1]
        %v2395 = vlaneseq
        %v2396 = vshrl.u32 %v2395, 7
        %v2397 = vsub.s32 0, %v2396
        %v2398 = vrot.slane %v2393, %v2397
        %vm2400 = vcmask 523264
        %v2402 = vsel %vm2400, %v2384, 0
        %2404 = vmatprep.subr.mxu0 0.0
        %2405 = vmatpush1.msra.mxu0 %v2385
        %2406 = vmatprep.subr.mxu0 0.0
        %2407 = vmatpush1.msra.mxu0 %v2386
        %2408 = vmatprep.subr.mxu0 0.0
        %2409 = vmatpush1.msra.mxu0 %v2387
        %2410 = vmatprep.subr.mxu0 0.0
        %2411 = vmatpush1.msra.mxu0 %v2388
        %2412 = vmatprep.subr.mxu0 0.0
        %2413 = vmatpush1.msra.mxu0 %v2389
        %2414 = vmatprep.subr.mxu0 0.0
        %2415 = vmatpush1.msra.mxu0 %v2390
        %2416 = vmatprep.subr.mxu0 0.0
        %2417 = vmatpush1.msra.mxu0 %v2391
        %2418 = vmatprep.subr.mxu0 0.0
        %2419 = vmatpush1.msra.mxu0 %v2392
        %2420 = vmatprep.subr.mxu0 0.0
        %2421 = vmatpush1.msra.mxu0 0.0
        %2422 = vmatprep.subr.mxu0 0.0
        %2423 = vmatpush1.msra.mxu0 0.0
        %2424 = vmatprep.subr.mxu0 0.0
        %2425 = vmatpush1.msra.mxu0 0.0
        %2426 = vmatprep.subr.mxu0 0.0
        %2427 = vmatpush1.msra.mxu0 0.0
        %2428 = vmatprep.subr.mxu0 0.0
        %2429 = vmatpush1.msra.mxu0 0.0
        %2430 = vmatprep.subr.mxu0 0.0
        %2431 = vmatpush1.msra.mxu0 0.0
        %2432 = vmatprep.subr.mxu0 0.0
        %2433 = vmatpush1.msra.mxu0 0.0
        %2434 = vmatprep.subr.mxu0 0.0
        %2435 = vmatpush1.msra.mxu0 0.0
        %2436 = vmatprep.subr.mxu0 0.0
        %2437 = vmatpush1.msra.mxu0 0.0
        %2438 = vmatprep.subr.mxu0 0.0
        %2439 = vmatpush1.msra.mxu0 0.0
        %2440 = vmatprep.subr.mxu0 0.0
        %2441 = vmatpush1.msra.mxu0 0.0
        %2442 = vmatprep.subr.mxu0 0.0
        %2443 = vmatpush1.msra.mxu0 0.0
        %2444 = vmatprep.subr.mxu0 0.0
        %2445 = vmatpush1.msra.mxu0 0.0
        %2446 = vmatprep.subr.mxu0 0.0
        %2447 = vmatpush1.msra.mxu0 0.0
        %2448 = vmatprep.subr.mxu0 0.0
        %2449 = vmatpush1.msra.mxu0 0.0
        %2450 = vmatprep.subr.mxu0 0.0
        %2451 = vmatpush1.msra.mxu0 0.0
        %2452 = vmatprep.subr.mxu0 0.0
        %2453 = vmatpush1.msra.mxu0 0.0
        %2454 = vmatprep.subr.mxu0 0.0
        %2455 = vmatpush1.msra.mxu0 0.0
        %2456 = vmatprep.subr.mxu0 0.0
        %2457 = vmatpush1.msra.mxu0 0.0
        %2458 = vmatprep.subr.mxu0 0.0
        %2459 = vmatpush1.msra.mxu0 0.0
        %2460 = vmatprep.subr.mxu0 0.0
        %2461 = vmatpush1.msra.mxu0 0.0
        %2462 = vmatprep.subr.mxu0 0.0
        %2463 = vmatpush1.msra.mxu0 0.0
        %2464 = vmatprep.subr.mxu0 0.0
        %2465 = vmatpush1.msra.mxu0 0.0
        %2466 = vmatprep.subr.mxu0 0.0
        %2467 = vmatpush1.msra.mxu0 0.0
        %2468 = vmatprep.mubr.f32.mxu0 0.0
        %2469 = vmatmul.mubr.f32.gmra.mrb[0].mxu0 %v2402
        %v2470 = vpop.f32.mrb[0].mxu0
        %v2471 = vadd.f32 %v2398, %v2470
        %v2472 = vpop.f32.mrb[0].mxu0
        %2473 = vdwg.mxu0
        %v2474 = vadd.f32 %v2471, %v2299
        %v2475 = vld [vmem:[%s11] sm:$0x1]
        %v2476 = vld [vmem:[%s12] sm:$0x1]
        %v2477 = vsel %vm1174, %v2474, 0.0
        %2478 = vadd.xlane.f32.xlu0 %v2477
        %v2479 = vpop.xlane.xlu0 %2478
        %v2480 = vmul.f32 %v2479, %v2275
        %v2481 = vsub.f32 %v2474, %v2480
        %v2482 = vmul.f32 %v2481, %v2481
        %v2483 = vsel %vm1174, %v2482, 0.0
        %2484 = vadd.xlane.f32.xlu0 %v2483
        %v2485 = vpop.xlane.xlu0 %2484
        %v2486 = vmul.f32 %v2485, %v2275
        %v2487 = vadd.f32 %v2486, 1e-06
        %v2488 = vrsqrt.pop %v2487
        %v2489 = vmul.f32 %v2481, %v2488
        %v2491 = vlaneseq
        %v2492 = vshrl.u32 %v2491, 7
        %v2493 = vsub.s32 0, %v2492
        %v2494 = vrot.slane %v2475, %v2493
        %v2496 = vmul.f32 %v2489, %v2494
        %v2498 = vlaneseq
        %v2499 = vshrl.u32 %v2498, 7
        %v2500 = vsub.s32 0, %v2499
        %v2501 = vrot.slane %v2476, %v2500
        %v2503 = vadd.f32 %v2496, %v2501
        %2504 = vst.msk [vmem:[%s480] sm:$0xff] %vm1174, %v2503
        %s2505 = sand.u32 %s332, 1
        %s2506 = scalar_lea.sflag [#allocation5], %s2505
        %s2507 = sand.u32 %s332, 1
        %s2508 = smul.addr %s2507, 8
        %s2509 = scalar_lea.vmem [#allocation4], %s2508
        %s2510 = sand.u32 %s360, 1
        %s2511 = scalar_lea.sflag [#allocation7], %s2510
        %s2512 = sand.u32 %s360, 1
        %s2513 = smul.addr %s2512, 16
        %s2514 = scalar_lea.vmem [#allocation6], %s2513
        // Predicated region
        $region77: #{tpu_custom_call.1} parent=71 // pred_check
          %p2515 = pneg %p342
        $region78: #{tpu_custom_call.1} parent=71 // pred_check_branch
          %2517 = sbr.rel (%p2515) target = $region80
        $region79: #{tpu_custom_call.1} parent=71 // pred_region
          %s2519 = ssub.s32 128, 128
          %2520 = vsyncadd %s2506, %s2519
          %s2521 = smul.addr %s36, 2
          %s2522 = sadd.s32 %s37, %s2521
          %s2523 = smul.addr %s2522, 128
          %s2524 = scalar_lea.hbm %s13, %s2523
          %s2526 = sshll.u32 %s2509, 4
          %s2527 = int_to_ptr.vmem [resolvable:$true] %s2526
          %2529 = dma.vmem_to_hbm [thread:$0]  %s2527, 128, %s2524, %s2506
        $region80: #{tpu_custom_call.1} parent=71 // pred_fallthru
          _
        // Predicated region
        $region81: #{tpu_custom_call.1} parent=71 // pred_check
          %p2530 = pneg %p370
        $region82: #{tpu_custom_call.1} parent=71 // pred_check_branch
          %2532 = sbr.rel (%p2530) target = $region84
        $region83: #{tpu_custom_call.1} parent=71 // pred_region
          %s2534 = ssub.s32 256, 256
          %2535 = vsyncadd %s2511, %s2534
          %s2536 = smul.addr %s36, 8
          %s2537 = sadd.s32 %s37, %s2536
          %s2538 = smul.addr %s2537, 64
          %s2539 = scalar_lea.hbm %s14, %s2538
          %s2540 = sshll.u32 %s2514, 4
          %s2541 = int_to_ptr.vmem [resolvable:$true] %s2540
          %2546 = dma.vmem_to_hbm [thread:$0]  %s2541, 256, %s2539, %s2511, 64, 128, 4
        $region84: #{tpu_custom_call.1} parent=71 // pred_fallthru
          _
      $region72: #{tpu_custom_call.1} parent=5 // pred_fallthru
        _
      %p2547 = scmp.le.s32.totalorder 2, %s27
      // Predicated region
      $region85: #{tpu_custom_call.1} parent=5 // pred_check
        %p2548 = pneg %p2547
      $region86: #{tpu_custom_call.1} parent=5 // pred_check_branch
        %2550 = sbr.rel (%p2548) target = $region88
      $region87: #{tpu_custom_call.1} parent=5 // pred_region
        %s2551 = ssub.s32 %s27, 2
        // Predicated region
        $region89: #{tpu_custom_call.1} parent=87 // pred_check
          %p2552 = pneg %p348
        $region90: #{tpu_custom_call.1} parent=87 // pred_check_branch
          %2554 = sbr.rel (%p2552) target = $region92
        $region91: #{tpu_custom_call.1} parent=87 // pred_region
          %s2555 = sand.u32 %s333, 1
          %s2556 = scalar_lea.sflag [#allocation5], %s2555
          %s2557 = sand.u32 %s333, 1
          %s2558 = smul.addr %s2557, 8
          %s2559 = scalar_lea.vmem [#allocation4], %s2558
          %2560 = dma.done %s2556, 128
        $region92: #{tpu_custom_call.1} parent=87 // pred_fallthru
          _
        // Predicated region
        $region93: #{tpu_custom_call.1} parent=87 // pred_check
          %p2561 = pneg %p376
        $region94: #{tpu_custom_call.1} parent=87 // pred_check_branch
          %2563 = sbr.rel (%p2561) target = $region96
        $region95: #{tpu_custom_call.1} parent=87 // pred_region
          %s2564 = sand.u32 %s361, 1
          %s2565 = scalar_lea.sflag [#allocation7], %s2564
          %s2566 = sand.u32 %s361, 1
          %s2567 = smul.addr %s2566, 16
          %s2568 = scalar_lea.vmem [#allocation6], %s2567
          %2569 = dma.done %s2565, 256
        $region96: #{tpu_custom_call.1} parent=87 // pred_fallthru
          _
      $region88: #{tpu_custom_call.1} parent=5 // pred_fallthru
        _
    $region6: #{tpu_custom_call.1} parent=1 // loop_footer
      %s31 = sadd.s32 1, %s27
    $region7: #{tpu_custom_call.1} parent=1 // loop_footer_branch
      %26 = sbr.rel target = $region3
    $region8: #{tpu_custom_call.1} parent=1 // loop_exit
      _
    %2570 = vsyncpa [#allocation5], 1
    %s2571 = scalar_lea.sflag [#allocation5], 1
    %2572 = vsyncpa %s2571, 1
    %2573 = vsyncpa [#allocation7], 1
    %s2574 = scalar_lea.sflag [#allocation7], 1
    %2575 = vsyncpa %s2574, 1

</llo_original>
